<compile_context>
chip_gen: v5e
topology: v5e:2x2
jax: 0.10.0
libtpu: 0.0.40
codegen_flags: <defaults>
</compile_context>

<pallas_src>
import jax
import jax.numpy as jnp
import numpy as np
from jax import lax
from jax.experimental import pallas as pl
from jax.experimental.pallas import tpu as pltpu

KH = KW = 5
EPS = 1e-5


# ---------------------------------------------------------------------------
# Fused Pallas kernel: conv1+bn+relu+pool -> conv2+bn+relu+pool -> fc
# ---------------------------------------------------------------------------
def fused_cnn_kernel(x_ref, b1e_ref, b1o_ref, s1_ref, sh1_ref,
                     b2e_ref, b2o_ref, s2_ref, sh2_ref,
                     wf_ref, bf_ref, out_ref):
    bsz = x_ref.shape[0]
    f32 = jnp.float32

    # Row-pool selection matrices (also inject the zero-padding rows of the
    # layer-2 input slab).  Built once per grid step from 2-D iotas.
    r1 = lax.broadcasted_iota(jnp.int32, (18, 27), 0)
    c1 = lax.broadcasted_iota(jnp.int32, (18, 27), 1)
    sel1 = ((r1 >= 2) & (r1 < 16) & (c1 == 2 * (r1 - 2))).astype(f32)
    r2 = lax.broadcasted_iota(jnp.int32, (7, 13), 0)
    c2 = lax.broadcasted_iota(jnp.int32, (7, 13), 1)
    sel2 = (c2 == 2 * r2).astype(f32)

    s1, sh1 = s1_ref[...], sh1_ref[...]       # (1, 224) folded BN scale/shift
    s2, sh2 = s2_ref[...], sh2_ref[...]       # (1, 224)
    bias_fc = bf_ref[...]                     # (1, 128)

    logits_rows = []
    for b in range(bsz):
        xs = x_ref[b]                                           # (32, 32)

        # ---- layer 1: 5x5 conv as 5 banded dots per width-parity, BN + ReLU
        acc_e = jnp.dot(xs[0:28, :], b1e_ref[0], preferred_element_type=f32)
        acc_o = jnp.dot(xs[0:28, :], b1o_ref[0], preferred_element_type=f32)
        for kh in range(1, KH):
            rows = xs[kh:kh + 28, :]                            # (28, 32)
            acc_e += jnp.dot(rows, b1e_ref[kh], preferred_element_type=f32)
            acc_o += jnp.dot(rows, b1o_ref[kh], preferred_element_type=f32)
        y_e = jnp.maximum(acc_e * s1 + sh1, 0.0)                # (28, 224)
        y_o = jnp.maximum(acc_o * s1 + sh1, 0.0)
        cm1 = jnp.maximum(y_e, y_o)                             # width-pooled
        rm1 = jnp.maximum(cm1[0:27, :], cm1[1:28, :])           # neighbour-row max
        x2 = jnp.dot(sel1, rm1, preferred_element_type=f32)     # (18, 224) padded slab

        # ---- layer 2: same structure with Cin=16 folded into K=224
        acc_e = jnp.dot(x2[0:14, :], b2e_ref[0], preferred_element_type=f32)
        acc_o = jnp.dot(x2[0:14, :], b2o_ref[0], preferred_element_type=f32)
        for kh in range(1, KH):
            rows = x2[kh:kh + 14, :]                            # (14, 224)
            acc_e += jnp.dot(rows, b2e_ref[kh], preferred_element_type=f32)
            acc_o += jnp.dot(rows, b2o_ref[kh], preferred_element_type=f32)
        y_e = jnp.maximum(acc_e * s2 + sh2, 0.0)                # (14, 224)
        y_o = jnp.maximum(acc_o * s2 + sh2, 0.0)
        cm2 = jnp.maximum(y_e, y_o)
        rm2 = jnp.maximum(cm2[0:13, :], cm2[1:14, :])
        p2 = jnp.dot(sel2, rm2, preferred_element_type=f32)     # (7, 224) pooled

        # ---- FC (output padded to 128 lanes; sliced to 10 outside the kernel)
        fc = bias_fc
        for h in range(7):
            fc = fc + jnp.dot(p2[h:h + 1, :], wf_ref[h],
                              preferred_element_type=f32)       # (1, 128)
        logits_rows.append(fc)

    out_ref[0] = jnp.concatenate(logits_rows, axis=0)           # (B, 128)


# ---------------------------------------------------------------------------
# Wrapper
# ---------------------------------------------------------------------------
def choose_block_b(n):
    # Prefer larger per-step batch blocks, but keep >= 2 grid steps so the
    # "parallel" batch axis can still shard across v7x's two TensorCores.
    for cand in (8, 4, 2):
        if n % cand == 0 and n // cand >= 2:
            return cand
    return 1


def cnn_forward(x_nchw, q):
    n, cin, h, w = x_nchw.shape
    assert (cin, h, w) == (1, 28, 28), "module is fixed to 1x28x28 inputs"
    bsz = choose_block_b(n)

    # Zero-pad once to the (32, 32) slab consumed by the banded conv.
    xp = jnp.pad(x_nchw[:, 0, :, :], ((0, 0), (2, 2), (2, 2)))   # (N, 32, 32)

    out = pl.pallas_call(
        fused_cnn_kernel,
        out_shape=jax.ShapeDtypeStruct((n // bsz, bsz, 128), jnp.float32),
        grid=(n // bsz,),
        in_specs=[
            pl.BlockSpec((bsz, 32, 32), lambda i: (i, 0, 0)),
            pl.BlockSpec((KH, 32, 224), lambda i: (0, 0, 0)),    # resident
            pl.BlockSpec((KH, 32, 224), lambda i: (0, 0, 0)),    # resident
            pl.BlockSpec((1, 224), lambda i: (0, 0)),            # resident
            pl.BlockSpec((1, 224), lambda i: (0, 0)),            # resident
            pl.BlockSpec((KH, 224, 224), lambda i: (0, 0, 0)),   # resident
            pl.BlockSpec((KH, 224, 224), lambda i: (0, 0, 0)),   # resident
            pl.BlockSpec((1, 224), lambda i: (0, 0)),            # resident
            pl.BlockSpec((1, 224), lambda i: (0, 0)),            # resident
            pl.BlockSpec((7, 224, 128), lambda i: (0, 0, 0)),    # resident
            pl.BlockSpec((1, 128), lambda i: (0, 0)),            # resident
        ],
        out_specs=pl.BlockSpec((1, bsz, 128), lambda i: (i, 0, 0)),
        compiler_params=pltpu.CompilerParams(
            dimension_semantics=("parallel",)),
    )(xp, q["b1e"], q["b1o"], q["s1"], q["sh1"],
      q["b2e"], q["b2o"], q["s2"], q["sh2"], q["wf"], q["bf"])

    return out.reshape(n, 128)[:, :10]


# ---------------------------------------------------------------------------
# One-time parameter preparation (outside the jitted forward)
# ---------------------------------------------------------------------------
def fold_bn(conv_bias, gamma, beta, mean, var):
    scale = gamma / jnp.sqrt(var + EPS)
    shift = (conv_bias - mean) * scale + beta
    return scale, shift


def prepare_params(p):
    """Build banded conv matrices (width-parity split), tiled BN scale/shift,
    and the NHWC-permuted / 128-padded FC weight."""
    s1, sh1 = fold_bn(p["b1"], p["g1"], p["be1"], p["m1"], p["v1"])
    s2, sh2 = fold_bn(p["b2"], p["g2"], p["be2"], p["m2"], p["v2"])

    # --- layer 1 banded weights: B1[kh][wp, w*16+co] = W1[kh, wp-w, co]
    w1 = np.transpose(np.asarray(p["w1"]), (2, 3, 1, 0))[:, :, 0, :]  # (5,5,16)
    b1 = np.zeros((KH, 32, 28, 16), np.float32)
    for kh in range(KH):
        for w in range(28):
            for kw in range(KW):
                b1[kh, w + kw, w, :] += w1[kh, kw, :]
    b1e = b1[:, :, 0::2, :].reshape(KH, 32, 224)
    b1o = b1[:, :, 1::2, :].reshape(KH, 32, 224)

    # --- layer 2 banded weights: B2[kh][wp*16+ci, w*32+co] = W2[kh, wp-w+2, ci, co]
    w2 = np.transpose(np.asarray(p["w2"]), (2, 3, 1, 0))              # (5,5,16,32)
    b2 = np.zeros((KH, 14, 16, 14, 32), np.float32)
    for kh in range(KH):
        for w in range(14):
            for kw in range(KW):
                wp = w + kw - 2
                if 0 <= wp < 14:
                    b2[kh, wp, :, w, :] += w2[kh, kw, :, :]
    b2 = b2.reshape(KH, 224, 14, 32)
    b2e = b2[:, :, 0::2, :].reshape(KH, 224, 224)
    b2o = b2[:, :, 1::2, :].reshape(KH, 224, 224)

    # --- FC: PyTorch flattens NCHW; our pooled activations are (h, w*32+c).
    wf = np.transpose(np.asarray(p["wf"]).reshape(10, 32, 7, 7),
                      (2, 3, 1, 0)).reshape(7, 224, 10)               # (7,224,10)
    wf_pad = np.zeros((7, 224, 128), np.float32)
    wf_pad[:, :, :10] = wf
    bf_pad = np.zeros((1, 128), np.float32)
    bf_pad[0, :10] = np.asarray(p["bf"])

    return {
        "b1e": jnp.asarray(b1e), "b1o": jnp.asarray(b1o),
        "s1": jnp.tile(s1, 14).reshape(1, 224),
        "sh1": jnp.tile(sh1, 14).reshape(1, 224),
        "b2e": jnp.asarray(b2e), "b2o": jnp.asarray(b2o),
        "s2": jnp.tile(s2, 7).reshape(1, 224),
        "sh2": jnp.tile(sh2, 7).reshape(1, 224),
        "wf": jnp.asarray(wf_pad), "bf": jnp.asarray(bf_pad),
    }


# ---------------------------------------------------------------------------
# Deterministic parameter init (PyTorch-layout weights) + pure-JAX reference
# ---------------------------------------------------------------------------
def init_params(key):
    ks = jax.random.split(key, 14)
    nrm = lambda k, shp, s=0.1: (s * jax.random.normal(k, shp)).astype(jnp.float32)
    return {
        "w1": nrm(ks[0], (16, 1, KH, KW)),    # Conv2d(1,16,5) weight (OIHW)
        "b1": nrm(ks[1], (16,)),
        "g1": 1.0 + nrm(ks[2], (16,)),
        "be1": nrm(ks[3], (16,)),
        "m1": nrm(ks[4], (16,)),
        "v1": 0.5 + jax.random.uniform(ks[5], (16,), dtype=jnp.float32),
        "w2": nrm(ks[6], (32, 16, KH, KW)),   # Conv2d(16,32,5) weight (OIHW)
        "b2": nrm(ks[7], (32,)),
        "g2": 1.0 + nrm(ks[8], (32,)),
        "be2": nrm(ks[9], (32,)),
        "m2": nrm(ks[10], (32,)),
        "v2": 0.5 + jax.random.uniform(ks[11], (32,), dtype=jnp.float32),
        "wf": nrm(ks[12], (10, 7 * 7 * 32)),  # Linear weight (out, in)
        "bf": nrm(ks[13], (10,)),
    }


def reference_forward(x_nchw, p):
    def conv(x, w, b):
        y = lax.conv_general_dilated(
            x, w, (1, 1), "SAME",
            dimension_numbers=("NCHW", "OIHW", "NCHW"),
            precision=lax.Precision.HIGHEST)
        return y + b[None, :, None, None]

    def bn(x, g, be, m, v):
        return (g[None, :, None, None] * (x - m[None, :, None, None])
                / jnp.sqrt(v + EPS)[None, :, None, None]
                + be[None, :, None, None])

    def pool(x):
        return lax.reduce_window(x, -jnp.inf, lax.max,
                                 (1, 1, 2, 2), (1, 1, 2, 2), "VALID")

    y = jax.nn.relu(bn(conv(x_nchw, p["w1"], p["b1"]),
                       p["g1"], p["be1"], p["m1"], p["v1"]))
    y = pool(y)
    y = jax.nn.relu(bn(conv(y, p["w2"], p["b2"]),
                       p["g2"], p["be2"], p["m2"], p["v2"]))
    y = pool(y)
    y = y.reshape(y.shape[0], -1)
    return y @ p["wf"].T + p["bf"]


if __name__ == "__main__":
    key = jax.random.PRNGKey(0)
    kx, kp = jax.random.split(key)
    x = jax.random.normal(kx, (2, 1, 28, 28), dtype=jnp.float32)  # NCHW, MNIST size
    params = init_params(kp)

    prepared = prepare_params(params)        # one-time, outside the jitted fwd
    fwd = jax.jit(cnn_forward)
    out = jax.block_until_ready(fwd(x, prepared))

    ref = reference_forward(x, params)
    assert out.shape == (2, 10), out.shape
    np.testing.assert_allclose(np.asarray(out), np.asarray(ref),
                               rtol=2e-2, atol=2e-2)
    print("KERNEL_OK")
</pallas_src>

<mosaic_0001>
module attributes {stable_mosaic.version = 11 : i64} {
  func.func @fused_cnn_kernel(%arg0: i32, %arg1: memref<1x32x32xf32, #tpu.memory_space<vmem>>, %arg2: memref<5x32x224xf32, #tpu.memory_space<vmem>>, %arg3: memref<5x32x224xf32, #tpu.memory_space<vmem>>, %arg4: memref<1x224xf32, #tpu.memory_space<vmem>>, %arg5: memref<1x224xf32, #tpu.memory_space<vmem>>, %arg6: memref<5x224x224xf32, #tpu.memory_space<vmem>>, %arg7: memref<5x224x224xf32, #tpu.memory_space<vmem>>, %arg8: memref<1x224xf32, #tpu.memory_space<vmem>>, %arg9: memref<1x224xf32, #tpu.memory_space<vmem>>, %arg10: memref<7x224x128xf32, #tpu.memory_space<vmem>>, %arg11: memref<1x128xf32, #tpu.memory_space<vmem>>, %arg12: memref<1x1x128xf32, #tpu.memory_space<vmem>>) attributes {dimension_semantics = [#tpu.dimension_semantics<parallel>], iteration_bounds = array<i64: 2>, scalar_prefetch = 0 : i64, scratch_operands = 0 : i64, tpu.core_type = #tpu.core_type<tc>, window_params = [{transform_indices = @transform_0, window_bounds = array<i64: 1, 32, 32>}, {pipeline_mode = #tpu.pipeline_mode<synchronous>, transform_indices = @transform_1, window_bounds = array<i64: 5, 32, 224>}, {pipeline_mode = #tpu.pipeline_mode<synchronous>, transform_indices = @transform_2, window_bounds = array<i64: 5, 32, 224>}, {pipeline_mode = #tpu.pipeline_mode<synchronous>, transform_indices = @transform_3, window_bounds = array<i64: 1, 224>}, {pipeline_mode = #tpu.pipeline_mode<synchronous>, transform_indices = @transform_4, window_bounds = array<i64: 1, 224>}, {pipeline_mode = #tpu.pipeline_mode<synchronous>, transform_indices = @transform_5, window_bounds = array<i64: 5, 224, 224>}, {pipeline_mode = #tpu.pipeline_mode<synchronous>, transform_indices = @transform_6, window_bounds = array<i64: 5, 224, 224>}, {pipeline_mode = #tpu.pipeline_mode<synchronous>, transform_indices = @transform_7, window_bounds = array<i64: 1, 224>}, {pipeline_mode = #tpu.pipeline_mode<synchronous>, transform_indices = @transform_8, window_bounds = array<i64: 1, 224>}, {pipeline_mode = #tpu.pipeline_mode<synchronous>, transform_indices = @transform_9, window_bounds = array<i64: 7, 224, 128>}, {pipeline_mode = #tpu.pipeline_mode<synchronous>, transform_indices = @transform_10, window_bounds = array<i64: 1, 128>}, {transform_indices = @transform_11, window_bounds = array<i64: 1, 1, 128>}]} {
    %0 = tpu.iota {dimensions = array<i32: 0>} : vector<18x27xi32>
    %1 = tpu.iota {dimensions = array<i32: 1>} : vector<18x27xi32>
    %c2_i32 = arith.constant 2 : i32
    %2 = vector.broadcast %c2_i32 : i32 to vector<18x27xi32>
    %3 = arith.cmpi sge, %0, %2 : vector<18x27xi32>
    %c16_i32 = arith.constant 16 : i32
    %4 = vector.broadcast %c16_i32 : i32 to vector<18x27xi32>
    %5 = arith.cmpi slt, %0, %4 : vector<18x27xi32>
    %6 = arith.andi %3, %5 : vector<18x27xi1>
    %c2_i32_0 = arith.constant 2 : i32
    %7 = vector.broadcast %c2_i32_0 : i32 to vector<18x27xi32>
    %8 = arith.subi %0, %7 : vector<18x27xi32>
    %c2_i32_1 = arith.constant 2 : i32
    %9 = vector.broadcast %c2_i32_1 : i32 to vector<18x27xi32>
    %10 = arith.muli %9, %8 : vector<18x27xi32>
    %11 = arith.cmpi eq, %1, %10 : vector<18x27xi32>
    %12 = arith.andi %6, %11 : vector<18x27xi1>
    %13 = arith.extui %12 : vector<18x27xi1> to vector<18x27xi32>
    %14 = arith.sitofp %13 : vector<18x27xi32> to vector<18x27xf32>
    %15 = tpu.iota {dimensions = array<i32: 0>} : vector<7x13xi32>
    %16 = tpu.iota {dimensions = array<i32: 1>} : vector<7x13xi32>
    %c2_i32_2 = arith.constant 2 : i32
    %17 = vector.broadcast %c2_i32_2 : i32 to vector<7x13xi32>
    %18 = arith.muli %17, %15 : vector<7x13xi32>
    %19 = arith.cmpi eq, %16, %18 : vector<7x13xi32>
    %20 = arith.extui %19 : vector<7x13xi1> to vector<7x13xi32>
    %21 = arith.sitofp %20 : vector<7x13xi32> to vector<7x13xf32>
    %c0 = arith.constant 0 : index
    %c0_3 = arith.constant 0 : index
    %22 = vector.load %arg4[%c0, %c0_3] : memref<1x224xf32, #tpu.memory_space<vmem>>, vector<1x224xf32>
    %c0_4 = arith.constant 0 : index
    %c0_5 = arith.constant 0 : index
    %23 = vector.load %arg5[%c0_4, %c0_5] : memref<1x224xf32, #tpu.memory_space<vmem>>, vector<1x224xf32>
    %c0_6 = arith.constant 0 : index
    %c0_7 = arith.constant 0 : index
    %24 = vector.load %arg8[%c0_6, %c0_7] : memref<1x224xf32, #tpu.memory_space<vmem>>, vector<1x224xf32>
    %c0_8 = arith.constant 0 : index
    %c0_9 = arith.constant 0 : index
    %25 = vector.load %arg9[%c0_8, %c0_9] : memref<1x224xf32, #tpu.memory_space<vmem>>, vector<1x224xf32>
    %c0_10 = arith.constant 0 : index
    %c0_11 = arith.constant 0 : index
    %26 = vector.load %arg11[%c0_10, %c0_11] : memref<1x128xf32, #tpu.memory_space<vmem>>, vector<1x128xf32>
    %c0_12 = arith.constant 0 : index
    %c0_13 = arith.constant 0 : index
    %c0_14 = arith.constant 0 : index
    %27 = vector.load %arg1[%c0_12, %c0_13, %c0_14] : memref<1x32x32xf32, #tpu.memory_space<vmem>>, vector<1x32x32xf32>
    %28 = vector.shape_cast %27 : vector<1x32x32xf32> to vector<32x32xf32>
    %29 = vector.extract_strided_slice %28 {offsets = [0, 0], sizes = [28, 32], strides = [1, 1]} : vector<32x32xf32> to vector<28x32xf32>
    %c0_15 = arith.constant 0 : index
    %c0_16 = arith.constant 0 : index
    %c0_17 = arith.constant 0 : index
    %30 = vector.load %arg2[%c0_15, %c0_16, %c0_17] : memref<5x32x224xf32, #tpu.memory_space<vmem>>, vector<1x32x224xf32>
    %31 = vector.shape_cast %30 : vector<1x32x224xf32> to vector<32x224xf32>
    %cst = arith.constant dense<0.000000e+00> : vector<28x224xf32>
    %32 = tpu.matmul %29, %31, %cst {dimension_numbers = #tpu.dot_dimension_numbers<[1], [0], [0], [1], [0, 0, 1, 1], [], []>} : vector<28x32xf32>, vector<32x224xf32>, vector<28x224xf32> -> vector<28x224xf32>
    %33 = vector.extract_strided_slice %28 {offsets = [0, 0], sizes = [28, 32], strides = [1, 1]} : vector<32x32xf32> to vector<28x32xf32>
    %c0_18 = arith.constant 0 : index
    %c0_19 = arith.constant 0 : index
    %c0_20 = arith.constant 0 : index
    %34 = vector.load %arg3[%c0_18, %c0_19, %c0_20] : memref<5x32x224xf32, #tpu.memory_space<vmem>>, vector<1x32x224xf32>
    %35 = vector.shape_cast %34 : vector<1x32x224xf32> to vector<32x224xf32>
    %cst_21 = arith.constant dense<0.000000e+00> : vector<28x224xf32>
    %36 = tpu.matmul %33, %35, %cst_21 {dimension_numbers = #tpu.dot_dimension_numbers<[1], [0], [0], [1], [0, 0, 1, 1], [], []>} : vector<28x32xf32>, vector<32x224xf32>, vector<28x224xf32> -> vector<28x224xf32>
    %37 = vector.extract_strided_slice %28 {offsets = [1, 0], sizes = [28, 32], strides = [1, 1]} : vector<32x32xf32> to vector<28x32xf32>
    %c1 = arith.constant 1 : index
    %c0_22 = arith.constant 0 : index
    %c0_23 = arith.constant 0 : index
    %38 = vector.load %arg2[%c1, %c0_22, %c0_23] : memref<5x32x224xf32, #tpu.memory_space<vmem>>, vector<1x32x224xf32>
    %39 = vector.shape_cast %38 : vector<1x32x224xf32> to vector<32x224xf32>
    %cst_24 = arith.constant dense<0.000000e+00> : vector<28x224xf32>
    %40 = tpu.matmul %37, %39, %cst_24 {dimension_numbers = #tpu.dot_dimension_numbers<[1], [0], [0], [1], [0, 0, 1, 1], [], []>} : vector<28x32xf32>, vector<32x224xf32>, vector<28x224xf32> -> vector<28x224xf32>
    %41 = arith.addf %32, %40 : vector<28x224xf32>
    %c1_25 = arith.constant 1 : index
    %c0_26 = arith.constant 0 : index
    %c0_27 = arith.constant 0 : index
    %42 = vector.load %arg3[%c1_25, %c0_26, %c0_27] : memref<5x32x224xf32, #tpu.memory_space<vmem>>, vector<1x32x224xf32>
    %43 = vector.shape_cast %42 : vector<1x32x224xf32> to vector<32x224xf32>
    %cst_28 = arith.constant dense<0.000000e+00> : vector<28x224xf32>
    %44 = tpu.matmul %37, %43, %cst_28 {dimension_numbers = #tpu.dot_dimension_numbers<[1], [0], [0], [1], [0, 0, 1, 1], [], []>} : vector<28x32xf32>, vector<32x224xf32>, vector<28x224xf32> -> vector<28x224xf32>
    %45 = arith.addf %36, %44 : vector<28x224xf32>
    %46 = vector.extract_strided_slice %28 {offsets = [2, 0], sizes = [28, 32], strides = [1, 1]} : vector<32x32xf32> to vector<28x32xf32>
    %c2 = arith.constant 2 : index
    %c0_29 = arith.constant 0 : index
    %c0_30 = arith.constant 0 : index
    %47 = vector.load %arg2[%c2, %c0_29, %c0_30] : memref<5x32x224xf32, #tpu.memory_space<vmem>>, vector<1x32x224xf32>
    %48 = vector.shape_cast %47 : vector<1x32x224xf32> to vector<32x224xf32>
    %cst_31 = arith.constant dense<0.000000e+00> : vector<28x224xf32>
    %49 = tpu.matmul %46, %48, %cst_31 {dimension_numbers = #tpu.dot_dimension_numbers<[1], [0], [0], [1], [0, 0, 1, 1], [], []>} : vector<28x32xf32>, vector<32x224xf32>, vector<28x224xf32> -> vector<28x224xf32>
    %50 = arith.addf %41, %49 : vector<28x224xf32>
    %c2_32 = arith.constant 2 : index
    %c0_33 = arith.constant 0 : index
    %c0_34 = arith.constant 0 : index
    %51 = vector.load %arg3[%c2_32, %c0_33, %c0_34] : memref<5x32x224xf32, #tpu.memory_space<vmem>>, vector<1x32x224xf32>
    %52 = vector.shape_cast %51 : vector<1x32x224xf32> to vector<32x224xf32>
    %cst_35 = arith.constant dense<0.000000e+00> : vector<28x224xf32>
    %53 = tpu.matmul %46, %52, %cst_35 {dimension_numbers = #tpu.dot_dimension_numbers<[1], [0], [0], [1], [0, 0, 1, 1], [], []>} : vector<28x32xf32>, vector<32x224xf32>, vector<28x224xf32> -> vector<28x224xf32>
    %54 = arith.addf %45, %53 : vector<28x224xf32>
    %55 = vector.extract_strided_slice %28 {offsets = [3, 0], sizes = [28, 32], strides = [1, 1]} : vector<32x32xf32> to vector<28x32xf32>
    %c3 = arith.constant 3 : index
    %c0_36 = arith.constant 0 : index
    %c0_37 = arith.constant 0 : index
    %56 = vector.load %arg2[%c3, %c0_36, %c0_37] : memref<5x32x224xf32, #tpu.memory_space<vmem>>, vector<1x32x224xf32>
    %57 = vector.shape_cast %56 : vector<1x32x224xf32> to vector<32x224xf32>
    %cst_38 = arith.constant dense<0.000000e+00> : vector<28x224xf32>
    %58 = tpu.matmul %55, %57, %cst_38 {dimension_numbers = #tpu.dot_dimension_numbers<[1], [0], [0], [1], [0, 0, 1, 1], [], []>} : vector<28x32xf32>, vector<32x224xf32>, vector<28x224xf32> -> vector<28x224xf32>
    %59 = arith.addf %50, %58 : vector<28x224xf32>
    %c3_39 = arith.constant 3 : index
    %c0_40 = arith.constant 0 : index
    %c0_41 = arith.constant 0 : index
    %60 = vector.load %arg3[%c3_39, %c0_40, %c0_41] : memref<5x32x224xf32, #tpu.memory_space<vmem>>, vector<1x32x224xf32>
    %61 = vector.shape_cast %60 : vector<1x32x224xf32> to vector<32x224xf32>
    %cst_42 = arith.constant dense<0.000000e+00> : vector<28x224xf32>
    %62 = tpu.matmul %55, %61, %cst_42 {dimension_numbers = #tpu.dot_dimension_numbers<[1], [0], [0], [1], [0, 0, 1, 1], [], []>} : vector<28x32xf32>, vector<32x224xf32>, vector<28x224xf32> -> vector<28x224xf32>
    %63 = arith.addf %54, %62 : vector<28x224xf32>
    %64 = vector.extract_strided_slice %28 {offsets = [4, 0], sizes = [28, 32], strides = [1, 1]} : vector<32x32xf32> to vector<28x32xf32>
    %c4 = arith.constant 4 : index
    %c0_43 = arith.constant 0 : index
    %c0_44 = arith.constant 0 : index
    %65 = vector.load %arg2[%c4, %c0_43, %c0_44] : memref<5x32x224xf32, #tpu.memory_space<vmem>>, vector<1x32x224xf32>
    %66 = vector.shape_cast %65 : vector<1x32x224xf32> to vector<32x224xf32>
    %cst_45 = arith.constant dense<0.000000e+00> : vector<28x224xf32>
    %67 = tpu.matmul %64, %66, %cst_45 {dimension_numbers = #tpu.dot_dimension_numbers<[1], [0], [0], [1], [0, 0, 1, 1], [], []>} : vector<28x32xf32>, vector<32x224xf32>, vector<28x224xf32> -> vector<28x224xf32>
    %68 = arith.addf %59, %67 : vector<28x224xf32>
    %c4_46 = arith.constant 4 : index
    %c0_47 = arith.constant 0 : index
    %c0_48 = arith.constant 0 : index
    %69 = vector.load %arg3[%c4_46, %c0_47, %c0_48] : memref<5x32x224xf32, #tpu.memory_space<vmem>>, vector<1x32x224xf32>
    %70 = vector.shape_cast %69 : vector<1x32x224xf32> to vector<32x224xf32>
    %cst_49 = arith.constant dense<0.000000e+00> : vector<28x224xf32>
    %71 = tpu.matmul %64, %70, %cst_49 {dimension_numbers = #tpu.dot_dimension_numbers<[1], [0], [0], [1], [0, 0, 1, 1], [], []>} : vector<28x32xf32>, vector<32x224xf32>, vector<28x224xf32> -> vector<28x224xf32>
    %72 = arith.addf %63, %71 : vector<28x224xf32>
    %73 = vector.broadcast %22 : vector<1x224xf32> to vector<28x224xf32>
    %74 = arith.mulf %68, %73 : vector<28x224xf32>
    %75 = vector.broadcast %23 : vector<1x224xf32> to vector<28x224xf32>
    %76 = arith.addf %74, %75 : vector<28x224xf32>
    %cst_50 = arith.constant 0.000000e+00 : f32
    %77 = vector.broadcast %cst_50 : f32 to vector<28x224xf32>
    %78 = arith.maximumf %76, %77 : vector<28x224xf32>
    %79 = vector.broadcast %22 : vector<1x224xf32> to vector<28x224xf32>
    %80 = arith.mulf %72, %79 : vector<28x224xf32>
    %81 = vector.broadcast %23 : vector<1x224xf32> to vector<28x224xf32>
    %82 = arith.addf %80, %81 : vector<28x224xf32>
    %cst_51 = arith.constant 0.000000e+00 : f32
    %83 = vector.broadcast %cst_51 : f32 to vector<28x224xf32>
    %84 = arith.maximumf %82, %83 : vector<28x224xf32>
    %85 = arith.maximumf %78, %84 : vector<28x224xf32>
    %86 = vector.extract_strided_slice %85 {offsets = [0, 0], sizes = [27, 224], strides = [1, 1]} : vector<28x224xf32> to vector<27x224xf32>
    %87 = vector.extract_strided_slice %85 {offsets = [1, 0], sizes = [27, 224], strides = [1, 1]} : vector<28x224xf32> to vector<27x224xf32>
    %88 = arith.maximumf %86, %87 : vector<27x224xf32>
    %cst_52 = arith.constant dense<0.000000e+00> : vector<18x224xf32>
    %89 = tpu.matmul %14, %88, %cst_52 {dimension_numbers = #tpu.dot_dimension_numbers<[1], [0], [0], [1], [0, 0, 1, 1], [], []>} : vector<18x27xf32>, vector<27x224xf32>, vector<18x224xf32> -> vector<18x224xf32>
    %90 = vector.extract_strided_slice %89 {offsets = [0, 0], sizes = [14, 224], strides = [1, 1]} : vector<18x224xf32> to vector<14x224xf32>
    %c0_53 = arith.constant 0 : index
    %c0_54 = arith.constant 0 : index
    %c0_55 = arith.constant 0 : index
    %91 = vector.load %arg6[%c0_53, %c0_54, %c0_55] : memref<5x224x224xf32, #tpu.memory_space<vmem>>, vector<1x224x224xf32>
    %92 = vector.shape_cast %91 : vector<1x224x224xf32> to vector<224x224xf32>
    %cst_56 = arith.constant dense<0.000000e+00> : vector<14x224xf32>
    %93 = tpu.matmul %90, %92, %cst_56 {dimension_numbers = #tpu.dot_dimension_numbers<[1], [0], [0], [1], [0, 0, 1, 1], [], []>} : vector<14x224xf32>, vector<224x224xf32>, vector<14x224xf32> -> vector<14x224xf32>
    %94 = vector.extract_strided_slice %89 {offsets = [0, 0], sizes = [14, 224], strides = [1, 1]} : vector<18x224xf32> to vector<14x224xf32>
    %c0_57 = arith.constant 0 : index
    %c0_58 = arith.constant 0 : index
    %c0_59 = arith.constant 0 : index
    %95 = vector.load %arg7[%c0_57, %c0_58, %c0_59] : memref<5x224x224xf32, #tpu.memory_space<vmem>>, vector<1x224x224xf32>
    %96 = vector.shape_cast %95 : vector<1x224x224xf32> to vector<224x224xf32>
    %cst_60 = arith.constant dense<0.000000e+00> : vector<14x224xf32>
    %97 = tpu.matmul %94, %96, %cst_60 {dimension_numbers = #tpu.dot_dimension_numbers<[1], [0], [0], [1], [0, 0, 1, 1], [], []>} : vector<14x224xf32>, vector<224x224xf32>, vector<14x224xf32> -> vector<14x224xf32>
    %98 = vector.extract_strided_slice %89 {offsets = [1, 0], sizes = [14, 224], strides = [1, 1]} : vector<18x224xf32> to vector<14x224xf32>
    %c1_61 = arith.constant 1 : index
    %c0_62 = arith.constant 0 : index
    %c0_63 = arith.constant 0 : index
    %99 = vector.load %arg6[%c1_61, %c0_62, %c0_63] : memref<5x224x224xf32, #tpu.memory_space<vmem>>, vector<1x224x224xf32>
    %100 = vector.shape_cast %99 : vector<1x224x224xf32> to vector<224x224xf32>
    %cst_64 = arith.constant dense<0.000000e+00> : vector<14x224xf32>
    %101 = tpu.matmul %98, %100, %cst_64 {dimension_numbers = #tpu.dot_dimension_numbers<[1], [0], [0], [1], [0, 0, 1, 1], [], []>} : vector<14x224xf32>, vector<224x224xf32>, vector<14x224xf32> -> vector<14x224xf32>
    %102 = arith.addf %93, %101 : vector<14x224xf32>
    %c1_65 = arith.constant 1 : index
    %c0_66 = arith.constant 0 : index
    %c0_67 = arith.constant 0 : index
    %103 = vector.load %arg7[%c1_65, %c0_66, %c0_67] : memref<5x224x224xf32, #tpu.memory_space<vmem>>, vector<1x224x224xf32>
    %104 = vector.shape_cast %103 : vector<1x224x224xf32> to vector<224x224xf32>
    %cst_68 = arith.constant dense<0.000000e+00> : vector<14x224xf32>
    %105 = tpu.matmul %98, %104, %cst_68 {dimension_numbers = #tpu.dot_dimension_numbers<[1], [0], [0], [1], [0, 0, 1, 1], [], []>} : vector<14x224xf32>, vector<224x224xf32>, vector<14x224xf32> -> vector<14x224xf32>
    %106 = arith.addf %97, %105 : vector<14x224xf32>
    %107 = vector.extract_strided_slice %89 {offsets = [2, 0], sizes = [14, 224], strides = [1, 1]} : vector<18x224xf32> to vector<14x224xf32>
    %c2_69 = arith.constant 2 : index
    %c0_70 = arith.constant 0 : index
    %c0_71 = arith.constant 0 : index
    %108 = vector.load %arg6[%c2_69, %c0_70, %c0_71] : memref<5x224x224xf32, #tpu.memory_space<vmem>>, vector<1x224x224xf32>
    %109 = vector.shape_cast %108 : vector<1x224x224xf32> to vector<224x224xf32>
    %cst_72 = arith.constant dense<0.000000e+00> : vector<14x224xf32>
    %110 = tpu.matmul %107, %109, %cst_72 {dimension_numbers = #tpu.dot_dimension_numbers<[1], [0], [0], [1], [0, 0, 1, 1], [], []>} : vector<14x224xf32>, vector<224x224xf32>, vector<14x224xf32> -> vector<14x224xf32>
    %111 = arith.addf %102, %110 : vector<14x224xf32>
    %c2_73 = arith.constant 2 : index
    %c0_74 = arith.constant 0 : index
    %c0_75 = arith.constant 0 : index
    %112 = vector.load %arg7[%c2_73, %c0_74, %c0_75] : memref<5x224x224xf32, #tpu.memory_space<vmem>>, vector<1x224x224xf32>
    %113 = vector.shape_cast %112 : vector<1x224x224xf32> to vector<224x224xf32>
    %cst_76 = arith.constant dense<0.000000e+00> : vector<14x224xf32>
    %114 = tpu.matmul %107, %113, %cst_76 {dimension_numbers = #tpu.dot_dimension_numbers<[1], [0], [0], [1], [0, 0, 1, 1], [], []>} : vector<14x224xf32>, vector<224x224xf32>, vector<14x224xf32> -> vector<14x224xf32>
    %115 = arith.addf %106, %114 : vector<14x224xf32>
    %116 = vector.extract_strided_slice %89 {offsets = [3, 0], sizes = [14, 224], strides = [1, 1]} : vector<18x224xf32> to vector<14x224xf32>
    %c3_77 = arith.constant 3 : index
    %c0_78 = arith.constant 0 : index
    %c0_79 = arith.constant 0 : index
    %117 = vector.load %arg6[%c3_77, %c0_78, %c0_79] : memref<5x224x224xf32, #tpu.memory_space<vmem>>, vector<1x224x224xf32>
    %118 = vector.shape_cast %117 : vector<1x224x224xf32> to vector<224x224xf32>
    %cst_80 = arith.constant dense<0.000000e+00> : vector<14x224xf32>
    %119 = tpu.matmul %116, %118, %cst_80 {dimension_numbers = #tpu.dot_dimension_numbers<[1], [0], [0], [1], [0, 0, 1, 1], [], []>} : vector<14x224xf32>, vector<224x224xf32>, vector<14x224xf32> -> vector<14x224xf32>
    %120 = arith.addf %111, %119 : vector<14x224xf32>
    %c3_81 = arith.constant 3 : index
    %c0_82 = arith.constant 0 : index
    %c0_83 = arith.constant 0 : index
    %121 = vector.load %arg7[%c3_81, %c0_82, %c0_83] : memref<5x224x224xf32, #tpu.memory_space<vmem>>, vector<1x224x224xf32>
    %122 = vector.shape_cast %121 : vector<1x224x224xf32> to vector<224x224xf32>
    %cst_84 = arith.constant dense<0.000000e+00> : vector<14x224xf32>
    %123 = tpu.matmul %116, %122, %cst_84 {dimension_numbers = #tpu.dot_dimension_numbers<[1], [0], [0], [1], [0, 0, 1, 1], [], []>} : vector<14x224xf32>, vector<224x224xf32>, vector<14x224xf32> -> vector<14x224xf32>
    %124 = arith.addf %115, %123 : vector<14x224xf32>
    %125 = vector.extract_strided_slice %89 {offsets = [4, 0], sizes = [14, 224], strides = [1, 1]} : vector<18x224xf32> to vector<14x224xf32>
    %c4_85 = arith.constant 4 : index
    %c0_86 = arith.constant 0 : index
    %c0_87 = arith.constant 0 : index
    %126 = vector.load %arg6[%c4_85, %c0_86, %c0_87] : memref<5x224x224xf32, #tpu.memory_space<vmem>>, vector<1x224x224xf32>
    %127 = vector.shape_cast %126 : vector<1x224x224xf32> to vector<224x224xf32>
    %cst_88 = arith.constant dense<0.000000e+00> : vector<14x224xf32>
    %128 = tpu.matmul %125, %127, %cst_88 {dimension_numbers = #tpu.dot_dimension_numbers<[1], [0], [0], [1], [0, 0, 1, 1], [], []>} : vector<14x224xf32>, vector<224x224xf32>, vector<14x224xf32> -> vector<14x224xf32>
    %129 = arith.addf %120, %128 : vector<14x224xf32>
    %c4_89 = arith.constant 4 : index
    %c0_90 = arith.constant 0 : index
    %c0_91 = arith.constant 0 : index
    %130 = vector.load %arg7[%c4_89, %c0_90, %c0_91] : memref<5x224x224xf32, #tpu.memory_space<vmem>>, vector<1x224x224xf32>
    %131 = vector.shape_cast %130 : vector<1x224x224xf32> to vector<224x224xf32>
    %cst_92 = arith.constant dense<0.000000e+00> : vector<14x224xf32>
    %132 = tpu.matmul %125, %131, %cst_92 {dimension_numbers = #tpu.dot_dimension_numbers<[1], [0], [0], [1], [0, 0, 1, 1], [], []>} : vector<14x224xf32>, vector<224x224xf32>, vector<14x224xf32> -> vector<14x224xf32>
    %133 = arith.addf %124, %132 : vector<14x224xf32>
    %134 = vector.broadcast %24 : vector<1x224xf32> to vector<14x224xf32>
    %135 = arith.mulf %129, %134 : vector<14x224xf32>
    %136 = vector.broadcast %25 : vector<1x224xf32> to vector<14x224xf32>
    %137 = arith.addf %135, %136 : vector<14x224xf32>
    %cst_93 = arith.constant 0.000000e+00 : f32
    %138 = vector.broadcast %cst_93 : f32 to vector<14x224xf32>
    %139 = arith.maximumf %137, %138 : vector<14x224xf32>
    %140 = vector.broadcast %24 : vector<1x224xf32> to vector<14x224xf32>
    %141 = arith.mulf %133, %140 : vector<14x224xf32>
    %142 = vector.broadcast %25 : vector<1x224xf32> to vector<14x224xf32>
    %143 = arith.addf %141, %142 : vector<14x224xf32>
    %cst_94 = arith.constant 0.000000e+00 : f32
    %144 = vector.broadcast %cst_94 : f32 to vector<14x224xf32>
    %145 = arith.maximumf %143, %144 : vector<14x224xf32>
    %146 = arith.maximumf %139, %145 : vector<14x224xf32>
    %147 = vector.extract_strided_slice %146 {offsets = [0, 0], sizes = [13, 224], strides = [1, 1]} : vector<14x224xf32> to vector<13x224xf32>
    %148 = vector.extract_strided_slice %146 {offsets = [1, 0], sizes = [13, 224], strides = [1, 1]} : vector<14x224xf32> to vector<13x224xf32>
    %149 = arith.maximumf %147, %148 : vector<13x224xf32>
    %cst_95 = arith.constant dense<0.000000e+00> : vector<7x224xf32>
    %150 = tpu.matmul %21, %149, %cst_95 {dimension_numbers = #tpu.dot_dimension_numbers<[1], [0], [0], [1], [0, 0, 1, 1], [], []>} : vector<7x13xf32>, vector<13x224xf32>, vector<7x224xf32> -> vector<7x224xf32>
    %151 = vector.extract_strided_slice %150 {offsets = [0, 0], sizes = [1, 224], strides = [1, 1]} : vector<7x224xf32> to vector<1x224xf32>
    %c0_96 = arith.constant 0 : index
    %c0_97 = arith.constant 0 : index
    %c0_98 = arith.constant 0 : index
    %152 = vector.load %arg10[%c0_96, %c0_97, %c0_98] : memref<7x224x128xf32, #tpu.memory_space<vmem>>, vector<1x224x128xf32>
    %153 = vector.shape_cast %152 : vector<1x224x128xf32> to vector<224x128xf32>
    %cst_99 = arith.constant dense<0.000000e+00> : vector<1x128xf32>
    %154 = tpu.matmul %151, %153, %cst_99 {dimension_numbers = #tpu.dot_dimension_numbers<[1], [0], [0], [1], [0, 0, 1, 1], [], []>} : vector<1x224xf32>, vector<224x128xf32>, vector<1x128xf32> -> vector<1x128xf32>
    %155 = arith.addf %26, %154 : vector<1x128xf32>
    %156 = vector.extract_strided_slice %150 {offsets = [1, 0], sizes = [1, 224], strides = [1, 1]} : vector<7x224xf32> to vector<1x224xf32>
    %c1_100 = arith.constant 1 : index
    %c0_101 = arith.constant 0 : index
    %c0_102 = arith.constant 0 : index
    %157 = vector.load %arg10[%c1_100, %c0_101, %c0_102] : memref<7x224x128xf32, #tpu.memory_space<vmem>>, vector<1x224x128xf32>
    %158 = vector.shape_cast %157 : vector<1x224x128xf32> to vector<224x128xf32>
    %cst_103 = arith.constant dense<0.000000e+00> : vector<1x128xf32>
    %159 = tpu.matmul %156, %158, %cst_103 {dimension_numbers = #tpu.dot_dimension_numbers<[1], [0], [0], [1], [0, 0, 1, 1], [], []>} : vector<1x224xf32>, vector<224x128xf32>, vector<1x128xf32> -> vector<1x128xf32>
    %160 = arith.addf %155, %159 : vector<1x128xf32>
    %161 = vector.extract_strided_slice %150 {offsets = [2, 0], sizes = [1, 224], strides = [1, 1]} : vector<7x224xf32> to vector<1x224xf32>
    %c2_104 = arith.constant 2 : index
    %c0_105 = arith.constant 0 : index
    %c0_106 = arith.constant 0 : index
    %162 = vector.load %arg10[%c2_104, %c0_105, %c0_106] : memref<7x224x128xf32, #tpu.memory_space<vmem>>, vector<1x224x128xf32>
    %163 = vector.shape_cast %162 : vector<1x224x128xf32> to vector<224x128xf32>
    %cst_107 = arith.constant dense<0.000000e+00> : vector<1x128xf32>
    %164 = tpu.matmul %161, %163, %cst_107 {dimension_numbers = #tpu.dot_dimension_numbers<[1], [0], [0], [1], [0, 0, 1, 1], [], []>} : vector<1x224xf32>, vector<224x128xf32>, vector<1x128xf32> -> vector<1x128xf32>
    %165 = arith.addf %160, %164 : vector<1x128xf32>
    %166 = vector.extract_strided_slice %150 {offsets = [3, 0], sizes = [1, 224], strides = [1, 1]} : vector<7x224xf32> to vector<1x224xf32>
    %c3_108 = arith.constant 3 : index
    %c0_109 = arith.constant 0 : index
    %c0_110 = arith.constant 0 : index
    %167 = vector.load %arg10[%c3_108, %c0_109, %c0_110] : memref<7x224x128xf32, #tpu.memory_space<vmem>>, vector<1x224x128xf32>
    %168 = vector.shape_cast %167 : vector<1x224x128xf32> to vector<224x128xf32>
    %cst_111 = arith.constant dense<0.000000e+00> : vector<1x128xf32>
    %169 = tpu.matmul %166, %168, %cst_111 {dimension_numbers = #tpu.dot_dimension_numbers<[1], [0], [0], [1], [0, 0, 1, 1], [], []>} : vector<1x224xf32>, vector<224x128xf32>, vector<1x128xf32> -> vector<1x128xf32>
    %170 = arith.addf %165, %169 : vector<1x128xf32>
    %171 = vector.extract_strided_slice %150 {offsets = [4, 0], sizes = [1, 224], strides = [1, 1]} : vector<7x224xf32> to vector<1x224xf32>
    %c4_112 = arith.constant 4 : index
    %c0_113 = arith.constant 0 : index
    %c0_114 = arith.constant 0 : index
    %172 = vector.load %arg10[%c4_112, %c0_113, %c0_114] : memref<7x224x128xf32, #tpu.memory_space<vmem>>, vector<1x224x128xf32>
    %173 = vector.shape_cast %172 : vector<1x224x128xf32> to vector<224x128xf32>
    %cst_115 = arith.constant dense<0.000000e+00> : vector<1x128xf32>
    %174 = tpu.matmul %171, %173, %cst_115 {dimension_numbers = #tpu.dot_dimension_numbers<[1], [0], [0], [1], [0, 0, 1, 1], [], []>} : vector<1x224xf32>, vector<224x128xf32>, vector<1x128xf32> -> vector<1x128xf32>
    %175 = arith.addf %170, %174 : vector<1x128xf32>
    %176 = vector.extract_strided_slice %150 {offsets = [5, 0], sizes = [1, 224], strides = [1, 1]} : vector<7x224xf32> to vector<1x224xf32>
    %c5 = arith.constant 5 : index
    %c0_116 = arith.constant 0 : index
    %c0_117 = arith.constant 0 : index
    %177 = vector.load %arg10[%c5, %c0_116, %c0_117] : memref<7x224x128xf32, #tpu.memory_space<vmem>>, vector<1x224x128xf32>
    %178 = vector.shape_cast %177 : vector<1x224x128xf32> to vector<224x128xf32>
    %cst_118 = arith.constant dense<0.000000e+00> : vector<1x128xf32>
    %179 = tpu.matmul %176, %178, %cst_118 {dimension_numbers = #tpu.dot_dimension_numbers<[1], [0], [0], [1], [0, 0, 1, 1], [], []>} : vector<1x224xf32>, vector<224x128xf32>, vector<1x128xf32> -> vector<1x128xf32>
    %180 = arith.addf %175, %179 : vector<1x128xf32>
    %181 = vector.extract_strided_slice %150 {offsets = [6, 0], sizes = [1, 224], strides = [1, 1]} : vector<7x224xf32> to vector<1x224xf32>
    %c6 = arith.constant 6 : index
    %c0_119 = arith.constant 0 : index
    %c0_120 = arith.constant 0 : index
    %182 = vector.load %arg10[%c6, %c0_119, %c0_120] : memref<7x224x128xf32, #tpu.memory_space<vmem>>, vector<1x224x128xf32>
    %183 = vector.shape_cast %182 : vector<1x224x128xf32> to vector<224x128xf32>
    %cst_121 = arith.constant dense<0.000000e+00> : vector<1x128xf32>
    %184 = tpu.matmul %181, %183, %cst_121 {dimension_numbers = #tpu.dot_dimension_numbers<[1], [0], [0], [1], [0, 0, 1, 1], [], []>} : vector<1x224xf32>, vector<224x128xf32>, vector<1x128xf32> -> vector<1x128xf32>
    %185 = arith.addf %180, %184 : vector<1x128xf32>
    %c0_122 = arith.constant 0 : index
    %c0_123 = arith.constant 0 : index
    %c0_124 = arith.constant 0 : index
    %186 = vector.load %arg12[%c0_122, %c0_123, %c0_124] : memref<1x1x128xf32, #tpu.memory_space<vmem>>, vector<1x1x128xf32>
    %187 = vector.shape_cast %186 : vector<1x1x128xf32> to vector<1x128xf32>
    %188 = vector.shape_cast %185 : vector<1x128xf32> to vector<1x1x128xf32>
    tpu.vector_store %arg12[%c0_122, %c0_123, %c0_124], %188 {strides = array<i32>} : memref<1x1x128xf32, #tpu.memory_space<vmem>>, vector<1x1x128xf32>,
    return
  }
  func.func @transform_0(%arg0: i32) -> (i32, i32, i32) {
    %c0_i32 = arith.constant 0 : i32
    %c0_i32_0 = arith.constant 0 : i32
    %c0_i32_1 = arith.constant 0 : i32
    return %arg0, %c0_i32, %c0_i32_0 : i32, i32, i32
  }
  func.func @transform_1(%arg0: i32) -> (i32, i32, i32) {
    %c0_i32 = arith.constant 0 : i32
    %c0_i32_0 = arith.constant 0 : i32
    %c0_i32_1 = arith.constant 0 : i32
    %c0_i32_2 = arith.constant 0 : i32
    return %c0_i32, %c0_i32_0, %c0_i32_1 : i32, i32, i32
  }
  func.func @transform_2(%arg0: i32) -> (i32, i32, i32) {
    %c0_i32 = arith.constant 0 : i32
    %c0_i32_0 = arith.constant 0 : i32
    %c0_i32_1 = arith.constant 0 : i32
    %c0_i32_2 = arith.constant 0 : i32
    return %c0_i32, %c0_i32_0, %c0_i32_1 : i32, i32, i32
  }
  func.func @transform_3(%arg0: i32) -> (i32, i32) {
    %c0_i32 = arith.constant 0 : i32
    %c0_i32_0 = arith.constant 0 : i32
    %c0_i32_1 = arith.constant 0 : i32
    return %c0_i32, %c0_i32_0 : i32, i32
  }
  func.func @transform_4(%arg0: i32) -> (i32, i32) {
    %c0_i32 = arith.constant 0 : i32
    %c0_i32_0 = arith.constant 0 : i32
    %c0_i32_1 = arith.constant 0 : i32
    return %c0_i32, %c0_i32_0 : i32, i32
  }
  func.func @transform_5(%arg0: i32) -> (i32, i32, i32) {
    %c0_i32 = arith.constant 0 : i32
    %c0_i32_0 = arith.constant 0 : i32
    %c0_i32_1 = arith.constant 0 : i32
    %c0_i32_2 = arith.constant 0 : i32
    return %c0_i32, %c0_i32_0, %c0_i32_1 : i32, i32, i32
  }
  func.func @transform_6(%arg0: i32) -> (i32, i32, i32) {
    %c0_i32 = arith.constant 0 : i32
    %c0_i32_0 = arith.constant 0 : i32
    %c0_i32_1 = arith.constant 0 : i32
    %c0_i32_2 = arith.constant 0 : i32
    return %c0_i32, %c0_i32_0, %c0_i32_1 : i32, i32, i32
  }
  func.func @transform_7(%arg0: i32) -> (i32, i32) {
    %c0_i32 = arith.constant 0 : i32
    %c0_i32_0 = arith.constant 0 : i32
    %c0_i32_1 = arith.constant 0 : i32
    return %c0_i32, %c0_i32_0 : i32, i32
  }
  func.func @transform_8(%arg0: i32) -> (i32, i32) {
    %c0_i32 = arith.constant 0 : i32
    %c0_i32_0 = arith.constant 0 : i32
    %c0_i32_1 = arith.constant 0 : i32
    return %c0_i32, %c0_i32_0 : i32, i32
  }
  func.func @transform_9(%arg0: i32) -> (i32, i32, i32) {
    %c0_i32 = arith.constant 0 : i32
    %c0_i32_0 = arith.constant 0 : i32
    %c0_i32_1 = arith.constant 0 : i32
    %c0_i32_2 = arith.constant 0 : i32
    return %c0_i32, %c0_i32_0, %c0_i32_1 : i32, i32, i32
  }
  func.func @transform_10(%arg0: i32) -> (i32, i32) {
    %c0_i32 = arith.constant 0 : i32
    %c0_i32_0 = arith.constant 0 : i32
    %c0_i32_1 = arith.constant 0 : i32
    return %c0_i32, %c0_i32_0 : i32, i32
  }
  func.func @transform_11(%arg0: i32) -> (i32, i32, i32) {
    %c0_i32 = arith.constant 0 : i32
    %c0_i32_0 = arith.constant 0 : i32
    %c0_i32_1 = arith.constant 0 : i32
    return %arg0, %c0_i32, %c0_i32_0 : i32, i32, i32
  }
}

</mosaic_0001>

<llo_original>
// kernel: cnn_forward.1
$region0: #{cnn_forward.1}
  #allocation0 [shape = 'u32[]', space=smem, size = 0x4, offset = 0x4, fixed_abs, tag = 'smem constant byte address 0x4 - core index']
  #allocation1 [shape = 'u32[72,128]{1,0:T(1,128)}', space=vmem, size = 0x9000, scoped, tag = 'internal scratch']
  %s0 = inlined_call_operand.vmem [shape: f32[2,32,32], index: 0, kind: input, shape index: {}]
  %s1 = inlined_call_operand.hbm [shape: f32[5,32,224], index: 1, kind: input, shape index: {}]
  %s2 = inlined_call_operand.hbm [shape: f32[5,32,224], index: 2, kind: input, shape index: {}]
  %s3 = inlined_call_operand.hbm [shape: f32[1,224], index: 3, kind: input, shape index: {}]
  %s4 = inlined_call_operand.hbm [shape: f32[1,224], index: 4, kind: input, shape index: {}]
  %s5 = inlined_call_operand.hbm [shape: f32[5,224,224], index: 5, kind: input, shape index: {}]
  %s6 = inlined_call_operand.hbm [shape: f32[5,224,224], index: 6, kind: input, shape index: {}]
  %s7 = inlined_call_operand.hbm [shape: f32[1,224], index: 7, kind: input, shape index: {}]
  %s8 = inlined_call_operand.hbm [shape: f32[1,224], index: 8, kind: input, shape index: {}]
  %s9 = inlined_call_operand.hbm [shape: f32[7,224,128], index: 9, kind: input, shape index: {}]
  %s10 = inlined_call_operand.hbm [shape: f32[1,128], index: 10, kind: input, shape index: {}]
  %s11 = inlined_call_operand.hbm [shape: f32[2,1,128], index: 11, kind: output, shape index: {}]
  %s12 = sld [smem:[#allocation0]]
  $region117: #{cnn_forward.1} parent=0
    _
  %s14 = ssub.s32 1, %s12
  %s15 = scalar_select 0, %s14, %s12
  $region1: #{cnn_forward.1} parent=0
    #allocation2 [shape = 'u8[163840]{0}', space=vmem, size = 0x28000, scoped, tag = 'input window, operand 1, single buffered']
    #allocation3 [shape = 's32[2]{0}', space=sflag, size = 0x8, scoped, tag = 'scoped memory for cnn_forward.1']
    #allocation4 [shape = 's32[2]{0}', space=sflag, size = 0x8, scoped, tag = 'scoped memory for cnn_forward.1']
    #allocation5 [shape = 'u8[163840]{0}', space=vmem, size = 0x28000, scoped, tag = 'input window, operand 2, single buffered']
    #allocation6 [shape = 's32[1]{0}', space=sflag, size = 0x4, scoped, tag = 'scoped memory for cnn_forward.1']
    #allocation7 [shape = 'u8[1024]{0}', space=vmem, size = 0x400, scoped, tag = 'input window, operand 3, single buffered']
    #allocation8 [shape = 'u8[1024]{0}', space=vmem, size = 0x400, scoped, tag = 'input window, operand 4, single buffered']
    #allocation9 [shape = 's32[1]{0}', space=sflag, size = 0x4, scoped, tag = 'scoped memory for cnn_forward.1']
    #allocation10 [shape = 'u8[1146880]{0}', space=vmem, size = 0x118000, scoped, tag = 'input window, operand 5, single buffered']
    #allocation11 [shape = 'u8[1146880]{0}', space=vmem, size = 0x118000, scoped, tag = 'input window, operand 6, single buffered']
    #allocation12 [shape = 's32[1]{0}', space=sflag, size = 0x4, scoped, tag = 'scoped memory for cnn_forward.1']
    #allocation13 [shape = 'u8[1024]{0}', space=vmem, size = 0x400, scoped, tag = 'input window, operand 7, single buffered']
    #allocation14 [shape = 'u8[1024]{0}', space=vmem, size = 0x400, scoped, tag = 'input window, operand 8, single buffered']
    #allocation15 [shape = 's32[1]{0}', space=sflag, size = 0x4, scoped, tag = 'scoped memory for cnn_forward.1']
    #allocation16 [shape = 'u8[802816]{0}', space=vmem, size = 0xc4000, scoped, tag = 'input window, operand 9, single buffered']
    #allocation17 [shape = 'u8[512]{0}', space=vmem, size = 0x400, scoped, tag = 'input window, operand 10, single buffered']
    #allocation18 [shape = 's32[1]{0}', space=sflag, size = 0x4, scoped, tag = 'scoped memory for cnn_forward.1']
    #allocation19 [shape = 'u8[1024]{0}', space=vmem, size = 0x400, scoped, tag = 'output window, operand 0']
    %16 = vsyncpa [#allocation3], 0
    %17 = vsyncpa [#allocation6], 0
    %18 = vsyncpa [#allocation9], 0
    %19 = vsyncpa [#allocation12], 0
    %20 = vsyncpa [#allocation15], 0
    %21 = vsyncpa [#allocation18], 0
    %22 = vsyncpa [#allocation4], 0
    %s23 = scalar_lea.sflag [#allocation4], 1
    %24 = vsyncpa %s23, 0
    loop: start=0, step=1, limit=4
    $region2: #{cnn_forward.1} parent=1 // loop_pre_header
      _
    $region3: #{cnn_forward.1} parent=1 // loop_header
      %s26 = sphi 0, %s30
      %p27 = scmp.ge.s32.totalorder %s26, 4
      %s36 = sphi 0, %s38
      %s39 = sphi 0, %s36
      %s40 = sphi 0, %s39
      %s56 = sphi 0, %s40
      %s60 = sphi 0, %s60
      %s62 = sphi 0, %s60
      %s63 = sphi 0, %s62
      %s77 = sphi 0, %s63
      %s81 = sphi 0, %s81
      %s83 = sphi 0, %s81
      %s84 = sphi 0, %s83
      %s98 = sphi 0, %s84
      %s102 = sphi 0, %s102
      %s104 = sphi 0, %s102
      %s105 = sphi 0, %s104
      %s119 = sphi 0, %s105
      %s123 = sphi 0, %s123
      %s125 = sphi 0, %s123
      %s126 = sphi 0, %s125
      %s140 = sphi 0, %s126
      %s144 = sphi 0, %s144
      %s146 = sphi 0, %s144
      %s147 = sphi 0, %s146
      %s161 = sphi 0, %s147
      %s165 = sphi 0, %s165
      %s167 = sphi 0, %s165
      %s168 = sphi 0, %s167
      %s182 = sphi 0, %s168
      %s186 = sphi 0, %s186
      %s188 = sphi 0, %s186
      %s189 = sphi 0, %s188
      %s203 = sphi 0, %s189
      %s207 = sphi 0, %s207
      %s209 = sphi 0, %s207
      %s210 = sphi 0, %s209
      %s224 = sphi 0, %s210
      %s228 = sphi 0, %s228
      %s230 = sphi 0, %s228
      %s231 = sphi 0, %s230
      %s245 = sphi 0, %s231
      %s249 = sphi 0, %s249
      %s251 = sphi 0, %s249
      %s252 = sphi 0, %s251
      %s266 = sphi 0, %s252
      %s272 = sphi 0, %s274
      %s275 = sphi 0, %s272
      %s276 = sphi 0, %s275
      %s292 = sphi 0, %s276
    $region4: #{cnn_forward.1} parent=1 // loop_header_branch
      %29 = sbr.rel (%p27) target = $region8
    $region5: #{cnn_forward.1} parent=1 // loop_body
      %s31 = ssub.s32 %s26, 1
      %s32 = ssub.s32 %s26, 2
      %s33 = sadd.s32 %s26, 1
      %s34 = ssub.s32 %s26, %s33
      %p35 = scmp.eq.s32.totalorder %s34, 0
      %s37 = sadd.s32 %s36, 1
      %s38 = scalar_select %p35, %s36, %s37
      %p41 = pneg %p35
      %p42 = scmp.eq.s32.totalorder %s26, 1
      %p43 = por %p41, %p42
      %p44 = scmp.ne.s32.totalorder %s36, %s39
      %p45 = scmp.eq.s32.totalorder %s26, 0
      %p46 = por %p44, %p45
      %p47 = scmp.ne.s32.totalorder %s36, %s39
      %p48 = scmp.eq.s32.totalorder %s31, 1
      %p49 = por %p47, %p48
      %p50 = scmp.ne.s32.totalorder %s39, %s40
      %p51 = scmp.eq.s32.totalorder %s31, 0
      %p52 = por %p50, %p51
      %p53 = scmp.ne.s32.totalorder %s39, %s40
      %p54 = scmp.eq.s32.totalorder %s32, 1
      %p55 = por %p53, %p54
      %p57 = scmp.ne.s32.totalorder %s40, %s56
      %p58 = scmp.eq.s32.totalorder %s32, 0
      %p59 = por %p57, %p58
      %s61 = sadd.s32 %s60, 1
      %p64 = scmp.eq.s32.totalorder %s26, 1
      %p65 = scmp.ne.s32.totalorder %s60, %s62
      %p66 = scmp.eq.s32.totalorder %s26, 0
      %p67 = por %p65, %p66
      %p68 = scmp.ne.s32.totalorder %s60, %s62
      %p69 = scmp.eq.s32.totalorder %s31, 1
      %p70 = por %p68, %p69
      %p71 = scmp.ne.s32.totalorder %s62, %s63
      %p72 = scmp.eq.s32.totalorder %s31, 0
      %p73 = por %p71, %p72
      %p74 = scmp.ne.s32.totalorder %s62, %s63
      %p75 = scmp.eq.s32.totalorder %s32, 1
      %p76 = por %p74, %p75
      %p78 = scmp.ne.s32.totalorder %s63, %s77
      %p79 = scmp.eq.s32.totalorder %s32, 0
      %p80 = por %p78, %p79
      %s82 = sadd.s32 %s81, 1
      %p85 = scmp.eq.s32.totalorder %s26, 1
      %p86 = scmp.ne.s32.totalorder %s81, %s83
      %p87 = scmp.eq.s32.totalorder %s26, 0
      %p88 = por %p86, %p87
      %p89 = scmp.ne.s32.totalorder %s81, %s83
      %p90 = scmp.eq.s32.totalorder %s31, 1
      %p91 = por %p89, %p90
      %p92 = scmp.ne.s32.totalorder %s83, %s84
      %p93 = scmp.eq.s32.totalorder %s31, 0
      %p94 = por %p92, %p93
      %p95 = scmp.ne.s32.totalorder %s83, %s84
      %p96 = scmp.eq.s32.totalorder %s32, 1
      %p97 = por %p95, %p96
      %p99 = scmp.ne.s32.totalorder %s84, %s98
      %p100 = scmp.eq.s32.totalorder %s32, 0
      %p101 = por %p99, %p100
      %s103 = sadd.s32 %s102, 1
      %p106 = scmp.eq.s32.totalorder %s26, 1
      %p107 = scmp.ne.s32.totalorder %s102, %s104
      %p108 = scmp.eq.s32.totalorder %s26, 0
      %p109 = por %p107, %p108
      %p110 = scmp.ne.s32.totalorder %s102, %s104
      %p111 = scmp.eq.s32.totalorder %s31, 1
      %p112 = por %p110, %p111
      %p113 = scmp.ne.s32.totalorder %s104, %s105
      %p114 = scmp.eq.s32.totalorder %s31, 0
      %p115 = por %p113, %p114
      %p116 = scmp.ne.s32.totalorder %s104, %s105
      %p117 = scmp.eq.s32.totalorder %s32, 1
      %p118 = por %p116, %p117
      %p120 = scmp.ne.s32.totalorder %s105, %s119
      %p121 = scmp.eq.s32.totalorder %s32, 0
      %p122 = por %p120, %p121
      %s124 = sadd.s32 %s123, 1
      %p127 = scmp.eq.s32.totalorder %s26, 1
      %p128 = scmp.ne.s32.totalorder %s123, %s125
      %p129 = scmp.eq.s32.totalorder %s26, 0
      %p130 = por %p128, %p129
      %p131 = scmp.ne.s32.totalorder %s123, %s125
      %p132 = scmp.eq.s32.totalorder %s31, 1
      %p133 = por %p131, %p132
      %p134 = scmp.ne.s32.totalorder %s125, %s126
      %p135 = scmp.eq.s32.totalorder %s31, 0
      %p136 = por %p134, %p135
      %p137 = scmp.ne.s32.totalorder %s125, %s126
      %p138 = scmp.eq.s32.totalorder %s32, 1
      %p139 = por %p137, %p138
      %p141 = scmp.ne.s32.totalorder %s126, %s140
      %p142 = scmp.eq.s32.totalorder %s32, 0
      %p143 = por %p141, %p142
      %s145 = sadd.s32 %s144, 1
      %p148 = scmp.eq.s32.totalorder %s26, 1
      %p149 = scmp.ne.s32.totalorder %s144, %s146
      %p150 = scmp.eq.s32.totalorder %s26, 0
      %p151 = por %p149, %p150
      %p152 = scmp.ne.s32.totalorder %s144, %s146
      %p153 = scmp.eq.s32.totalorder %s31, 1
      %p154 = por %p152, %p153
      %p155 = scmp.ne.s32.totalorder %s146, %s147
      %p156 = scmp.eq.s32.totalorder %s31, 0
      %p157 = por %p155, %p156
      %p158 = scmp.ne.s32.totalorder %s146, %s147
      %p159 = scmp.eq.s32.totalorder %s32, 1
      %p160 = por %p158, %p159
      %p162 = scmp.ne.s32.totalorder %s147, %s161
      %p163 = scmp.eq.s32.totalorder %s32, 0
      %p164 = por %p162, %p163
      %s166 = sadd.s32 %s165, 1
      %p169 = scmp.eq.s32.totalorder %s26, 1
      %p170 = scmp.ne.s32.totalorder %s165, %s167
      %p171 = scmp.eq.s32.totalorder %s26, 0
      %p172 = por %p170, %p171
      %p173 = scmp.ne.s32.totalorder %s165, %s167
      %p174 = scmp.eq.s32.totalorder %s31, 1
      %p175 = por %p173, %p174
      %p176 = scmp.ne.s32.totalorder %s167, %s168
      %p177 = scmp.eq.s32.totalorder %s31, 0
      %p178 = por %p176, %p177
      %p179 = scmp.ne.s32.totalorder %s167, %s168
      %p180 = scmp.eq.s32.totalorder %s32, 1
      %p181 = por %p179, %p180
      %p183 = scmp.ne.s32.totalorder %s168, %s182
      %p184 = scmp.eq.s32.totalorder %s32, 0
      %p185 = por %p183, %p184
      %s187 = sadd.s32 %s186, 1
      %p190 = scmp.eq.s32.totalorder %s26, 1
      %p191 = scmp.ne.s32.totalorder %s186, %s188
      %p192 = scmp.eq.s32.totalorder %s26, 0
      %p193 = por %p191, %p192
      %p194 = scmp.ne.s32.totalorder %s186, %s188
      %p195 = scmp.eq.s32.totalorder %s31, 1
      %p196 = por %p194, %p195
      %p197 = scmp.ne.s32.totalorder %s188, %s189
      %p198 = scmp.eq.s32.totalorder %s31, 0
      %p199 = por %p197, %p198
      %p200 = scmp.ne.s32.totalorder %s188, %s189
      %p201 = scmp.eq.s32.totalorder %s32, 1
      %p202 = por %p200, %p201
      %p204 = scmp.ne.s32.totalorder %s189, %s203
      %p205 = scmp.eq.s32.totalorder %s32, 0
      %p206 = por %p204, %p205
      %s208 = sadd.s32 %s207, 1
      %p211 = scmp.eq.s32.totalorder %s26, 1
      %p212 = scmp.ne.s32.totalorder %s207, %s209
      %p213 = scmp.eq.s32.totalorder %s26, 0
      %p214 = por %p212, %p213
      %p215 = scmp.ne.s32.totalorder %s207, %s209
      %p216 = scmp.eq.s32.totalorder %s31, 1
      %p217 = por %p215, %p216
      %p218 = scmp.ne.s32.totalorder %s209, %s210
      %p219 = scmp.eq.s32.totalorder %s31, 0
      %p220 = por %p218, %p219
      %p221 = scmp.ne.s32.totalorder %s209, %s210
      %p222 = scmp.eq.s32.totalorder %s32, 1
      %p223 = por %p221, %p222
      %p225 = scmp.ne.s32.totalorder %s210, %s224
      %p226 = scmp.eq.s32.totalorder %s32, 0
      %p227 = por %p225, %p226
      %s229 = sadd.s32 %s228, 1
      %p232 = scmp.eq.s32.totalorder %s26, 1
      %p233 = scmp.ne.s32.totalorder %s228, %s230
      %p234 = scmp.eq.s32.totalorder %s26, 0
      %p235 = por %p233, %p234
      %p236 = scmp.ne.s32.totalorder %s228, %s230
      %p237 = scmp.eq.s32.totalorder %s31, 1
      %p238 = por %p236, %p237
      %p239 = scmp.ne.s32.totalorder %s230, %s231
      %p240 = scmp.eq.s32.totalorder %s31, 0
      %p241 = por %p239, %p240
      %p242 = scmp.ne.s32.totalorder %s230, %s231
      %p243 = scmp.eq.s32.totalorder %s32, 1
      %p244 = por %p242, %p243
      %p246 = scmp.ne.s32.totalorder %s231, %s245
      %p247 = scmp.eq.s32.totalorder %s32, 0
      %p248 = por %p246, %p247
      %s250 = sadd.s32 %s249, 1
      %p253 = scmp.eq.s32.totalorder %s26, 1
      %p254 = scmp.ne.s32.totalorder %s249, %s251
      %p255 = scmp.eq.s32.totalorder %s26, 0
      %p256 = por %p254, %p255
      %p257 = scmp.ne.s32.totalorder %s249, %s251
      %p258 = scmp.eq.s32.totalorder %s31, 1
      %p259 = por %p257, %p258
      %p260 = scmp.ne.s32.totalorder %s251, %s252
      %p261 = scmp.eq.s32.totalorder %s31, 0
      %p262 = por %p260, %p261
      %p263 = scmp.ne.s32.totalorder %s251, %s252
      %p264 = scmp.eq.s32.totalorder %s32, 1
      %p265 = por %p263, %p264
      %p267 = scmp.ne.s32.totalorder %s252, %s266
      %p268 = scmp.eq.s32.totalorder %s32, 0
      %p269 = por %p267, %p268
      %s270 = ssub.s32 %s26, %s33
      %p271 = scmp.eq.s32.totalorder %s270, 0
      %s273 = sadd.s32 %s272, 1
      %s274 = scalar_select %p271, %s272, %s273
      %p277 = pneg %p271
      %p278 = scmp.eq.s32.totalorder %s26, 1
      %p279 = por %p277, %p278
      %p280 = scmp.ne.s32.totalorder %s272, %s275
      %p281 = scmp.eq.s32.totalorder %s26, 0
      %p282 = por %p280, %p281
      %p283 = scmp.ne.s32.totalorder %s272, %s275
      %p284 = scmp.eq.s32.totalorder %s31, 1
      %p285 = por %p283, %p284
      %p286 = scmp.ne.s32.totalorder %s275, %s276
      %p287 = scmp.eq.s32.totalorder %s31, 0
      %p288 = por %p286, %p287
      %p289 = scmp.ne.s32.totalorder %s275, %s276
      %p290 = scmp.eq.s32.totalorder %s32, 1
      %p291 = por %p289, %p290
      %p293 = scmp.ne.s32.totalorder %s276, %s292
      %p294 = scmp.eq.s32.totalorder %s32, 0
      %p295 = por %p293, %p294
      %p296 = scmp.le.s32.totalorder 1, %s26
      %p297 = scmp.lt.s32.totalorder %s26, 3
      %p298 = pnand %p296, %p297
      %p299 = pneg %p298
      // Predicated region
      $region9: #{cnn_forward.1} parent=5 // pred_check
        _
      $region10: #{cnn_forward.1} parent=5 // pred_check_branch
        %301 = sbr.rel (%p298) target = $region12
      $region11: #{cnn_forward.1} parent=5 // pred_region
        %s302 = ssub.s32 %s26, 1
        // Predicated region
        $region13: #{cnn_forward.1} parent=11 // pred_check
          %p303 = pneg %p73
        $region14: #{cnn_forward.1} parent=11 // pred_check_branch
          %305 = sbr.rel (%p303) target = $region16
        $region15: #{cnn_forward.1} parent=11 // pred_region
          %307 = vsyncadd [#allocation3], 0
          %s308 = sshll.u32 %s1, 4
          %s309 = int_to_ptr.hbm [resolvable:$true] %s308
          %s310 = sshll.u32 [#allocation2], 4
          %s311 = int_to_ptr.vmem [resolvable:$true] %s310
          %316 = dma.hbm_to_vmem [thread:$0]  %s309, 5120, %s311, [#allocation3], 256, 256, 16
        $region16: #{cnn_forward.1} parent=11 // pred_fallthru
          _
        // Predicated region
        $region17: #{cnn_forward.1} parent=11 // pred_check
          %p317 = pneg %p94
        $region18: #{cnn_forward.1} parent=11 // pred_check_branch
          %319 = sbr.rel (%p317) target = $region20
        $region19: #{cnn_forward.1} parent=11 // pred_region
          %321 = vsyncadd [#allocation6], 0
          %s322 = sshll.u32 %s2, 4
          %s323 = int_to_ptr.hbm [resolvable:$true] %s322
          %s324 = sshll.u32 [#allocation5], 4
          %s325 = int_to_ptr.vmem [resolvable:$true] %s324
          %330 = dma.hbm_to_vmem [thread:$0]  %s323, 5120, %s325, [#allocation6], 256, 256, 16
        $region20: #{cnn_forward.1} parent=11 // pred_fallthru
          _
        // Predicated region
        $region21: #{cnn_forward.1} parent=11 // pred_check
          %p331 = pneg %p115
        $region22: #{cnn_forward.1} parent=11 // pred_check_branch
          %333 = sbr.rel (%p331) target = $region24
        $region23: #{cnn_forward.1} parent=11 // pred_region
          %335 = vsyncadd [#allocation6], 0
          %s337 = sshll.u32 %s3, 4
          %s338 = int_to_ptr.hbm [resolvable:$true] %s337
          %s339 = sshll.u32 [#allocation7], 4
          %s340 = int_to_ptr.vmem [resolvable:$true] %s339
          %342 = dma.hbm_to_vmem [thread:$0]  %s338, 32, %s340, [#allocation6]
        $region24: #{cnn_forward.1} parent=11 // pred_fallthru
          _
        // Predicated region
        $region25: #{cnn_forward.1} parent=11 // pred_check
          %p343 = pneg %p136
        $region26: #{cnn_forward.1} parent=11 // pred_check_branch
          %345 = sbr.rel (%p343) target = $region28
        $region27: #{cnn_forward.1} parent=11 // pred_region
          %347 = vsyncadd [#allocation9], 0
          %s349 = sshll.u32 %s4, 4
          %s350 = int_to_ptr.hbm [resolvable:$true] %s349
          %s351 = sshll.u32 [#allocation8], 4
          %s352 = int_to_ptr.vmem [resolvable:$true] %s351
          %354 = dma.hbm_to_vmem [thread:$0]  %s350, 32, %s352, [#allocation9]
        $region28: #{cnn_forward.1} parent=11 // pred_fallthru
          _
        // Predicated region
        $region29: #{cnn_forward.1} parent=11 // pred_check
          %p355 = pneg %p157
        $region30: #{cnn_forward.1} parent=11 // pred_check_branch
          %357 = sbr.rel (%p355) target = $region32
        $region31: #{cnn_forward.1} parent=11 // pred_region
          %359 = vsyncadd [#allocation9], 0
          %s360 = sshll.u32 %s5, 4
          %s361 = int_to_ptr.hbm [resolvable:$true] %s360
          %s362 = sshll.u32 [#allocation10], 4
          %s363 = int_to_ptr.vmem [resolvable:$true] %s362
          %368 = dma.hbm_to_vmem [thread:$0]  %s361, 35840, %s363, [#allocation9], 256, 256, 16
        $region32: #{cnn_forward.1} parent=11 // pred_fallthru
          _
        // Predicated region
        $region33: #{cnn_forward.1} parent=11 // pred_check
          %p369 = pneg %p178
        $region34: #{cnn_forward.1} parent=11 // pred_check_branch
          %371 = sbr.rel (%p369) target = $region36
        $region35: #{cnn_forward.1} parent=11 // pred_region
          %373 = vsyncadd [#allocation12], 0
          %s374 = sshll.u32 %s6, 4
          %s375 = int_to_ptr.hbm [resolvable:$true] %s374
          %s376 = sshll.u32 [#allocation11], 4
          %s377 = int_to_ptr.vmem [resolvable:$true] %s376
          %382 = dma.hbm_to_vmem [thread:$0]  %s375, 35840, %s377, [#allocation12], 256, 256, 16
        $region36: #{cnn_forward.1} parent=11 // pred_fallthru
          _
        // Predicated region
        $region37: #{cnn_forward.1} parent=11 // pred_check
          %p383 = pneg %p199
        $region38: #{cnn_forward.1} parent=11 // pred_check_branch
          %385 = sbr.rel (%p383) target = $region40
        $region39: #{cnn_forward.1} parent=11 // pred_region
          %387 = vsyncadd [#allocation12], 0
          %s389 = sshll.u32 %s7, 4
          %s390 = int_to_ptr.hbm [resolvable:$true] %s389
          %s391 = sshll.u32 [#allocation13], 4
          %s392 = int_to_ptr.vmem [resolvable:$true] %s391
          %394 = dma.hbm_to_vmem [thread:$0]  %s390, 32, %s392, [#allocation12]
        $region40: #{cnn_forward.1} parent=11 // pred_fallthru
          _
        // Predicated region
        $region41: #{cnn_forward.1} parent=11 // pred_check
          %p395 = pneg %p220
        $region42: #{cnn_forward.1} parent=11 // pred_check_branch
          %397 = sbr.rel (%p395) target = $region44
        $region43: #{cnn_forward.1} parent=11 // pred_region
          %399 = vsyncadd [#allocation15], 0
          %s401 = sshll.u32 %s8, 4
          %s402 = int_to_ptr.hbm [resolvable:$true] %s401
          %s403 = sshll.u32 [#allocation14], 4
          %s404 = int_to_ptr.vmem [resolvable:$true] %s403
          %406 = dma.hbm_to_vmem [thread:$0]  %s402, 32, %s404, [#allocation15]
        $region44: #{cnn_forward.1} parent=11 // pred_fallthru
          _
        // Predicated region
        $region45: #{cnn_forward.1} parent=11 // pred_check
          %p407 = pneg %p241
        $region46: #{cnn_forward.1} parent=11 // pred_check_branch
          %409 = sbr.rel (%p407) target = $region48
        $region47: #{cnn_forward.1} parent=11 // pred_region
          %411 = vsyncadd [#allocation15], 0
          %s412 = sshll.u32 %s9, 4
          %s413 = int_to_ptr.hbm [resolvable:$true] %s412
          %s414 = sshll.u32 [#allocation16], 4
          %s415 = int_to_ptr.vmem [resolvable:$true] %s414
          %420 = dma.hbm_to_vmem [thread:$0]  %s413, 25088, %s415, [#allocation15], 128, 128, 8
        $region48: #{cnn_forward.1} parent=11 // pred_fallthru
          _
        // Predicated region
        $region49: #{cnn_forward.1} parent=11 // pred_check
          %p421 = pneg %p262
        $region50: #{cnn_forward.1} parent=11 // pred_check_branch
          %423 = sbr.rel (%p421) target = $region52
        $region51: #{cnn_forward.1} parent=11 // pred_region
          %425 = vsyncadd [#allocation18], 0
          %s427 = sshll.u32 %s10, 4
          %s428 = int_to_ptr.hbm [resolvable:$true] %s427
          %s429 = sshll.u32 [#allocation17], 4
          %s430 = int_to_ptr.vmem [resolvable:$true] %s429
          %432 = dma.hbm_to_vmem [thread:$0]  %s428, 16, %s430, [#allocation18]
        $region52: #{cnn_forward.1} parent=11 // pred_fallthru
          _
      $region12: #{cnn_forward.1} parent=5 // pred_fallthru
        _
      %p433 = scmp.lt.s32.totalorder %s26, 2
      // Predicated region
      $region53: #{cnn_forward.1} parent=5 // pred_check
        %p434 = pneg %p433
      $region54: #{cnn_forward.1} parent=5 // pred_check_branch
        %436 = sbr.rel (%p434) target = $region56
      $region55: #{cnn_forward.1} parent=5 // pred_region
        // Predicated region
        $region57: #{cnn_forward.1} parent=55 // pred_check
          %p437 = pneg %p46
        $region58: #{cnn_forward.1} parent=55 // pred_check_branch
          %439 = sbr.rel (%p437) target = $region60
        $region59: #{cnn_forward.1} parent=55 // pred_region
          %p440 = scmp.lt.s32.totalorder %s26, 1
          %s441 = scalar_select %p440, %s26, 1
          %s442 = smul.addr %s441, 4
          %s443 = smul.addr %s442, 8
          %s444 = scalar_lea.vmem %s0, %s443
        $region60: #{cnn_forward.1} parent=55 // pred_fallthru
          _
      $region56: #{cnn_forward.1} parent=5 // pred_fallthru
        _
      %p445 = scmp.le.s32.totalorder 1, %s26
      %p446 = scmp.lt.s32.totalorder %s26, 3
      %p447 = pnand %p445, %p446
      %p448 = pneg %p447
      // Predicated region
      $region61: #{cnn_forward.1} parent=5 // pred_check
        _
      $region62: #{cnn_forward.1} parent=5 // pred_check_branch
        %450 = sbr.rel (%p447) target = $region64
      $region63: #{cnn_forward.1} parent=5 // pred_region
        %s451 = ssub.s32 %s26, 1
        // Predicated region
        $region65: #{cnn_forward.1} parent=63 // pred_check
          %p452 = pneg %p73
        $region66: #{cnn_forward.1} parent=63 // pred_check_branch
          %454 = sbr.rel (%p452) target = $region68
        $region67: #{cnn_forward.1} parent=63 // pred_region
          %456 = dma.done [#allocation3], 5120
        $region68: #{cnn_forward.1} parent=63 // pred_fallthru
          _
        // Predicated region
        $region69: #{cnn_forward.1} parent=63 // pred_check
          %p457 = pneg %p94
        $region70: #{cnn_forward.1} parent=63 // pred_check_branch
          %459 = sbr.rel (%p457) target = $region72
        $region71: #{cnn_forward.1} parent=63 // pred_region
          %461 = dma.done [#allocation6], 5120
        $region72: #{cnn_forward.1} parent=63 // pred_fallthru
          _
        // Predicated region
        $region73: #{cnn_forward.1} parent=63 // pred_check
          %p462 = pneg %p115
        $region74: #{cnn_forward.1} parent=63 // pred_check_branch
          %464 = sbr.rel (%p462) target = $region76
        $region75: #{cnn_forward.1} parent=63 // pred_region
          %466 = dma.done [#allocation6], 32
        $region76: #{cnn_forward.1} parent=63 // pred_fallthru
          _
        // Predicated region
        $region77: #{cnn_forward.1} parent=63 // pred_check
          %p467 = pneg %p136
        $region78: #{cnn_forward.1} parent=63 // pred_check_branch
          %469 = sbr.rel (%p467) target = $region80
        $region79: #{cnn_forward.1} parent=63 // pred_region
          %471 = dma.done [#allocation9], 32
        $region80: #{cnn_forward.1} parent=63 // pred_fallthru
          _
        // Predicated region
        $region81: #{cnn_forward.1} parent=63 // pred_check
          %p472 = pneg %p157
        $region82: #{cnn_forward.1} parent=63 // pred_check_branch
          %474 = sbr.rel (%p472) target = $region84
        $region83: #{cnn_forward.1} parent=63 // pred_region
          %476 = dma.done [#allocation9], 35840
        $region84: #{cnn_forward.1} parent=63 // pred_fallthru
          _
        // Predicated region
        $region85: #{cnn_forward.1} parent=63 // pred_check
          %p477 = pneg %p178
        $region86: #{cnn_forward.1} parent=63 // pred_check_branch
          %479 = sbr.rel (%p477) target = $region88
        $region87: #{cnn_forward.1} parent=63 // pred_region
          %481 = dma.done [#allocation12], 35840
        $region88: #{cnn_forward.1} parent=63 // pred_fallthru
          _
        // Predicated region
        $region89: #{cnn_forward.1} parent=63 // pred_check
          %p482 = pneg %p199
        $region90: #{cnn_forward.1} parent=63 // pred_check_branch
          %484 = sbr.rel (%p482) target = $region92
        $region91: #{cnn_forward.1} parent=63 // pred_region
          %486 = dma.done [#allocation12], 32
        $region92: #{cnn_forward.1} parent=63 // pred_fallthru
          _
        // Predicated region
        $region93: #{cnn_forward.1} parent=63 // pred_check
          %p487 = pneg %p220
        $region94: #{cnn_forward.1} parent=63 // pred_check_branch
          %489 = sbr.rel (%p487) target = $region96
        $region95: #{cnn_forward.1} parent=63 // pred_region
          %491 = dma.done [#allocation15], 32
        $region96: #{cnn_forward.1} parent=63 // pred_fallthru
          _
        // Predicated region
        $region97: #{cnn_forward.1} parent=63 // pred_check
          %p492 = pneg %p241
        $region98: #{cnn_forward.1} parent=63 // pred_check_branch
          %494 = sbr.rel (%p492) target = $region100
        $region99: #{cnn_forward.1} parent=63 // pred_region
          %496 = dma.done [#allocation15], 25088
        $region100: #{cnn_forward.1} parent=63 // pred_fallthru
          _
        // Predicated region
        $region101: #{cnn_forward.1} parent=63 // pred_check
          %p497 = pneg %p262
        $region102: #{cnn_forward.1} parent=63 // pred_check_branch
          %499 = sbr.rel (%p497) target = $region104
        $region103: #{cnn_forward.1} parent=63 // pred_region
          %501 = dma.done [#allocation18], 16
        $region104: #{cnn_forward.1} parent=63 // pred_fallthru
          _
        %p502 = scmp.lt.s32.totalorder %s31, 1
        %s503 = scalar_select %p502, %s31, 1
        %s504 = smul.addr %s503, 4
        %s505 = smul.addr %s504, 8
        %s506 = scalar_lea.vmem %s0, %s505
        %p507 = pneg %p52
        %p508 = pneg %p49
        %p509 = pneg %p73
        %p510 = pneg %p70
        %p511 = pneg %p94
        %p512 = pneg %p91
        %p513 = pneg %p115
        %p514 = pneg %p112
        %p515 = pneg %p136
        %p516 = pneg %p133
        %p517 = pneg %p157
        %p518 = pneg %p154
        %p519 = pneg %p178
        %p520 = pneg %p175
        %p521 = pneg %p199
        %p522 = pneg %p196
        %p523 = pneg %p220
        %p524 = pneg %p217
        %p525 = pneg %p241
        %p526 = pneg %p238
        %p527 = pneg %p262
        %p528 = pneg %p259
        %p529 = pneg %p288
        %p530 = pneg %p285
        %s531 = sand.u32 %s275, 1
        %s532 = scalar_lea.sflag [#allocation4], %s531
        %s533 = sand.u32 %s275, 1
        %s534 = scalar_lea.vmem [#allocation19], %s533
        %p535 = scmp.lt.s32.totalorder %s31, 1
        %s536 = scalar_select %p535, %s31, 1
        %s537 = smul.addr %s536, 4
        %s538 = smul.addr %s537, 8
        %s539 = scalar_lea.vmem %s0, %s538
        %v540 = vlaneseq
        %v541 = vshrl.u32 %v540, 7
        %v542 = vadd.s32 %v541, 8
        %v543 = vadd.s32 %v541, 16
        %v544 = vlaneseq
        %v545 = vand.u32 %v544, 127
        %vm546 = vcmp.ge.s32.totalorder %v541, 2
        %vm547 = vcmp.ge.s32.totalorder %v542, 2
        %vm548 = vcmp.ge.s32.totalorder %v543, 2
        %vm549 = vcmp.lt.s32.totalorder %v541, 16
        %vm550 = vcmp.lt.s32.totalorder %v542, 16
        %vm551 = vcmp.lt.s32.totalorder %v543, 16
        %vm552 = vmand %vm546, %vm549
        %vm553 = vmand %vm547, %vm550
        %vm554 = vmand %vm548, %vm551
        %v555 = vsub.s32 %v541, 2
        %v556 = vsub.s32 %v542, 2
        %v557 = vsub.s32 %v543, 2
        %v558 = vmul.u32 %v555, 2
        %v559 = vmul.u32 %v556, 2
        %v560 = vmul.u32 %v557, 2
        %vm561 = vcmp.eq.s32.totalorder %v545, %v558
        %vm562 = vcmp.eq.s32.totalorder %v545, %v559
        %vm563 = vcmp.eq.s32.totalorder %v545, %v560
        %vm564 = vmand %vm552, %vm561
        %vm565 = vmand %vm553, %vm562
        %vm566 = vmand %vm554, %vm563
        %v567 = vsel %vm564, 1, 0
        %v568 = vsel %vm565, 1, 0
        %v569 = vsel %vm566, 1, 0
        %v570 = vcvt.s32.f32 %v567
        %v571 = vcvt.s32.f32 %v568
        %v572 = vcvt.s32.f32 %v569
        %v573 = vmul.u32 %v541, 2
        %vm574 = vcmp.eq.s32.totalorder %v545, %v573
        %v575 = vsel %vm574, 1, 0
        %v576 = vcvt.s32.f32 %v575
        %v577 = vld [vmem:[#allocation7] sm:$0x3]
        %v578 = vld [vmem:[#allocation8] sm:$0x3]
        %v579 = vld [vmem:[#allocation13] sm:$0x3]
        %v580 = vld [vmem:[#allocation14] sm:$0x3]
        %v581 = vld [vmem:[#allocation17] sm:$0x1]
        %v582 = vld [vmem:[%s539] sm:$0xff]
        %v583 = vld [vmem:[%s539 + $0x8] sm:$0xff]
        %v584 = vld [vmem:[%s539 + $0x10] sm:$0xff]
        %v585 = vld [vmem:[%s539 + $0x18] sm:$0xff]
        %v586 = vld [vmem:[#allocation2] sm:$0xff]
        %v587 = vld [vmem:[#allocation2 + $0x8] sm:$0xff]
        %v588 = vld [vmem:[#allocation2 + $0x10] sm:$0xff]
        %v589 = vld [vmem:[#allocation2 + $0x18] sm:$0xff]
        %v590 = vld [vmem:[#allocation2 + $0x20] sm:$0xff]
        %v591 = vld [vmem:[#allocation2 + $0x28] sm:$0xff]
        %v592 = vld [vmem:[#allocation2 + $0x30] sm:$0xff]
        %v593 = vld [vmem:[#allocation2 + $0x38] sm:$0xff]
        %v594 = vld [vmem:[#allocation5] sm:$0xff]
        %v595 = vld [vmem:[#allocation5 + $0x8] sm:$0xff]
        %v596 = vld [vmem:[#allocation5 + $0x10] sm:$0xff]
        %v597 = vld [vmem:[#allocation5 + $0x18] sm:$0xff]
        %v598 = vld [vmem:[#allocation5 + $0x20] sm:$0xff]
        %v599 = vld [vmem:[#allocation5 + $0x28] sm:$0xff]
        %v600 = vld [vmem:[#allocation5 + $0x30] sm:$0xff]
        %v601 = vld [vmem:[#allocation5 + $0x38] sm:$0xff]
        %s602 = scalar_lea.vmem [#allocation2], 64
        %v603 = vld [vmem:[%s602] sm:$0xff]
        %v604 = vld [vmem:[%s602 + $0x8] sm:$0xff]
        %v605 = vld [vmem:[%s602 + $0x10] sm:$0xff]
        %v606 = vld [vmem:[%s602 + $0x18] sm:$0xff]
        %v607 = vld [vmem:[%s602 + $0x20] sm:$0xff]
        %v608 = vld [vmem:[%s602 + $0x28] sm:$0xff]
        %v609 = vld [vmem:[%s602 + $0x30] sm:$0xff]
        %v610 = vld [vmem:[%s602 + $0x38] sm:$0xff]
        %vm615 = vcmask 1046528
        %v616 = vrot.slane %v582, 1
        %v617 = vrot.slane %v583, 1
        %v618 = vsel %vm615, %v616, %v617
        %v619 = vrot.slane %v584, 1
        %v620 = vsel %vm615, %v617, %v619
        %v621 = vrot.slane %v585, 1
        %v622 = vsel %vm615, %v619, %v621
        %vm623 = vcmask 261120
        %v624 = vsel %vm623, %v618, 0
        %v626 = vsel %vm623, %v620, 0
        %v628 = vsel %vm623, %v622, 0
        %v630 = vsel %vm623, %v621, 0
        %632 = vmatpush.msra.mxu0 0.0
        %633 = vmatpush.msra.mxu0 0.0
        %634 = vmatpush.msra.mxu0 0.0
        %635 = vmatpush.msra.mxu0 0.0
        %636 = vmatpush.msra.mxu0 0.0
        %637 = vmatpush.msra.mxu0 0.0
        %638 = vmatpush.msra.mxu0 0.0
        %639 = vmatpush.msra.mxu0 0.0
        %640 = vmatpush.msra.mxu0 0.0
        %641 = vmatpush.msra.mxu0 0.0
        %642 = vmatpush.msra.mxu0 0.0
        %643 = vmatpush.msra.mxu0 0.0
        %644 = vmatpush.msra.mxu0 %v609
        %645 = vmatpush.msra.mxu0 %v607
        %646 = vmatpush.msra.mxu0 %v605
        %647 = vmatpush.msra.mxu0 %v603
        %648 = vmatmul.f32.gmra.mxu0 %v624
        %v649 = vpop.f32.mrf.mxu0
        %v650 = vadd.f32 0.0, %v649
        %651 = vmatmul.f32.gmra.mxu0 %v626
        %v652 = vpop.f32.mrf.mxu0
        %v653 = vadd.f32 0.0, %v652
        %654 = vmatmul.f32.gmra.mxu0 %v628
        %v655 = vpop.f32.mrf.mxu0
        %v656 = vadd.f32 0.0, %v655
        %657 = vmatmul.f32.gmra.mxu0 %v630
        %v658 = vpop.f32.mrf.mxu0
        %v659 = vadd.f32 0.0, %v658
        %660 = vdwg.mxu0
        %661 = vmatpush.msra.mxu0 0.0
        %662 = vmatpush.msra.mxu0 0.0
        %663 = vmatpush.msra.mxu0 0.0
        %664 = vmatpush.msra.mxu0 0.0
        %665 = vmatpush.msra.mxu0 0.0
        %666 = vmatpush.msra.mxu0 0.0
        %667 = vmatpush.msra.mxu0 0.0
        %668 = vmatpush.msra.mxu0 0.0
        %669 = vmatpush.msra.mxu0 0.0
        %670 = vmatpush.msra.mxu0 0.0
        %671 = vmatpush.msra.mxu0 0.0
        %672 = vmatpush.msra.mxu0 0.0
        %673 = vmatpush.msra.mxu0 %v610
        %674 = vmatpush.msra.mxu0 %v608
        %675 = vmatpush.msra.mxu0 %v606
        %676 = vmatpush.msra.mxu0 %v604
        %677 = vmatmul.f32.gmra.mxu0 %v624
        %v678 = vpop.f32.mrf.mxu0
        %v679 = vadd.f32 0.0, %v678
        %680 = vmatmul.f32.gmra.mxu0 %v626
        %v681 = vpop.f32.mrf.mxu0
        %v682 = vadd.f32 0.0, %v681
        %683 = vmatmul.f32.gmra.mxu0 %v628
        %v684 = vpop.f32.mrf.mxu0
        %v685 = vadd.f32 0.0, %v684
        %686 = vmatmul.f32.gmra.mxu0 %v630
        %v687 = vpop.f32.mrf.mxu0
        %v688 = vadd.f32 0.0, %v687
        %689 = vdwg.mxu0
        %v690 = vsel %vm623, %v582, 0
        %v692 = vsel %vm623, %v583, 0
        %v694 = vsel %vm623, %v584, 0
        %v696 = vsel %vm623, %v585, 0
        %698 = vmatpush.msra.mxu0 0.0
        %699 = vmatpush.msra.mxu0 0.0
        %700 = vmatpush.msra.mxu0 0.0
        %701 = vmatpush.msra.mxu0 0.0
        %702 = vmatpush.msra.mxu0 0.0
        %703 = vmatpush.msra.mxu0 0.0
        %704 = vmatpush.msra.mxu0 0.0
        %705 = vmatpush.msra.mxu0 0.0
        %706 = vmatpush.msra.mxu0 0.0
        %707 = vmatpush.msra.mxu0 0.0
        %708 = vmatpush.msra.mxu0 0.0
        %709 = vmatpush.msra.mxu0 0.0
        %710 = vmatpush.msra.mxu0 %v592
        %711 = vmatpush.msra.mxu0 %v590
        %712 = vmatpush.msra.mxu0 %v588
        %713 = vmatpush.msra.mxu0 %v586
        %714 = vmatmul.f32.gmra.mxu0 %v690
        %v715 = vpop.f32.mrf.mxu0
        %v716 = vadd.f32 %v650, %v715
        %717 = vmatmul.f32.gmra.mxu0 %v692
        %v718 = vpop.f32.mrf.mxu0
        %v719 = vadd.f32 %v653, %v718
        %720 = vmatmul.f32.gmra.mxu0 %v694
        %v721 = vpop.f32.mrf.mxu0
        %v722 = vadd.f32 %v656, %v721
        %723 = vmatmul.f32.gmra.mxu0 %v696
        %v724 = vpop.f32.mrf.mxu0
        %v725 = vadd.f32 %v659, %v724
        %726 = vdwg.mxu0
        %727 = vmatpush.msra.mxu0 0.0
        %728 = vmatpush.msra.mxu0 0.0
        %729 = vmatpush.msra.mxu0 0.0
        %730 = vmatpush.msra.mxu0 0.0
        %731 = vmatpush.msra.mxu0 0.0
        %732 = vmatpush.msra.mxu0 0.0
        %733 = vmatpush.msra.mxu0 0.0
        %734 = vmatpush.msra.mxu0 0.0
        %735 = vmatpush.msra.mxu0 0.0
        %736 = vmatpush.msra.mxu0 0.0
        %737 = vmatpush.msra.mxu0 0.0
        %738 = vmatpush.msra.mxu0 0.0
        %739 = vmatpush.msra.mxu0 %v593
        %740 = vmatpush.msra.mxu0 %v591
        %741 = vmatpush.msra.mxu0 %v589
        %742 = vmatpush.msra.mxu0 %v587
        %743 = vmatmul.f32.gmra.mxu0 %v690
        %v744 = vpop.f32.mrf.mxu0
        %v745 = vadd.f32 %v679, %v744
        %746 = vmatmul.f32.gmra.mxu0 %v692
        %v747 = vpop.f32.mrf.mxu0
        %v748 = vadd.f32 %v682, %v747
        %749 = vmatmul.f32.gmra.mxu0 %v694
        %v750 = vpop.f32.mrf.mxu0
        %v751 = vadd.f32 %v685, %v750
        %752 = vmatmul.f32.gmra.mxu0 %v696
        %v753 = vpop.f32.mrf.mxu0
        %v754 = vadd.f32 %v688, %v753
        %755 = vdwg.mxu0
        %s756 = scalar_lea.vmem [#allocation5], 64
        %v757 = vld [vmem:[%s756] sm:$0xff]
        %v758 = vld [vmem:[%s756 + $0x8] sm:$0xff]
        %v759 = vld [vmem:[%s756 + $0x10] sm:$0xff]
        %v760 = vld [vmem:[%s756 + $0x18] sm:$0xff]
        %v761 = vld [vmem:[%s756 + $0x20] sm:$0xff]
        %v762 = vld [vmem:[%s756 + $0x28] sm:$0xff]
        %v763 = vld [vmem:[%s756 + $0x30] sm:$0xff]
        %v764 = vld [vmem:[%s756 + $0x38] sm:$0xff]
        %765 = vmatpush.msra.mxu0 0.0
        %766 = vmatpush.msra.mxu0 0.0
        %767 = vmatpush.msra.mxu0 0.0
        %768 = vmatpush.msra.mxu0 0.0
        %769 = vmatpush.msra.mxu0 0.0
        %770 = vmatpush.msra.mxu0 0.0
        %771 = vmatpush.msra.mxu0 0.0
        %772 = vmatpush.msra.mxu0 0.0
        %773 = vmatpush.msra.mxu0 0.0
        %774 = vmatpush.msra.mxu0 0.0
        %775 = vmatpush.msra.mxu0 0.0
        %776 = vmatpush.msra.mxu0 0.0
        %777 = vmatpush.msra.mxu0 %v763
        %778 = vmatpush.msra.mxu0 %v761
        %779 = vmatpush.msra.mxu0 %v759
        %780 = vmatpush.msra.mxu0 %v757
        %781 = vmatmul.f32.gmra.mxu0 %v624
        %v782 = vpop.f32.mrf.mxu0
        %v783 = vadd.f32 0.0, %v782
        %784 = vmatmul.f32.gmra.mxu0 %v626
        %v785 = vpop.f32.mrf.mxu0
        %v786 = vadd.f32 0.0, %v785
        %787 = vmatmul.f32.gmra.mxu0 %v628
        %v788 = vpop.f32.mrf.mxu0
        %v789 = vadd.f32 0.0, %v788
        %790 = vmatmul.f32.gmra.mxu0 %v630
        %v791 = vpop.f32.mrf.mxu0
        %v792 = vadd.f32 0.0, %v791
        %793 = vdwg.mxu0
        %794 = vmatpush.msra.mxu0 0.0
        %795 = vmatpush.msra.mxu0 0.0
        %796 = vmatpush.msra.mxu0 0.0
        %797 = vmatpush.msra.mxu0 0.0
        %798 = vmatpush.msra.mxu0 0.0
        %799 = vmatpush.msra.mxu0 0.0
        %800 = vmatpush.msra.mxu0 0.0
        %801 = vmatpush.msra.mxu0 0.0
        %802 = vmatpush.msra.mxu0 0.0
        %803 = vmatpush.msra.mxu0 0.0
        %804 = vmatpush.msra.mxu0 0.0
        %805 = vmatpush.msra.mxu0 0.0
        %806 = vmatpush.msra.mxu0 %v764
        %807 = vmatpush.msra.mxu0 %v762
        %808 = vmatpush.msra.mxu0 %v760
        %809 = vmatpush.msra.mxu0 %v758
        %810 = vmatmul.f32.gmra.mxu0 %v624
        %v811 = vpop.f32.mrf.mxu0
        %v812 = vadd.f32 0.0, %v811
        %813 = vmatmul.f32.gmra.mxu0 %v626
        %v814 = vpop.f32.mrf.mxu0
        %v815 = vadd.f32 0.0, %v814
        %816 = vmatmul.f32.gmra.mxu0 %v628
        %v817 = vpop.f32.mrf.mxu0
        %v818 = vadd.f32 0.0, %v817
        %819 = vmatmul.f32.gmra.mxu0 %v630
        %v820 = vpop.f32.mrf.mxu0
        %v821 = vadd.f32 0.0, %v820
        %822 = vdwg.mxu0
        %823 = vmatpush.msra.mxu0 0.0
        %824 = vmatpush.msra.mxu0 0.0
        %825 = vmatpush.msra.mxu0 0.0
        %826 = vmatpush.msra.mxu0 0.0
        %827 = vmatpush.msra.mxu0 0.0
        %828 = vmatpush.msra.mxu0 0.0
        %829 = vmatpush.msra.mxu0 0.0
        %830 = vmatpush.msra.mxu0 0.0
        %831 = vmatpush.msra.mxu0 0.0
        %832 = vmatpush.msra.mxu0 0.0
        %833 = vmatpush.msra.mxu0 0.0
        %834 = vmatpush.msra.mxu0 0.0
        %835 = vmatpush.msra.mxu0 %v600
        %836 = vmatpush.msra.mxu0 %v598
        %837 = vmatpush.msra.mxu0 %v596
        %838 = vmatpush.msra.mxu0 %v594
        %839 = vmatmul.f32.gmra.mxu0 %v690
        %v840 = vpop.f32.mrf.mxu0
        %v841 = vadd.f32 %v783, %v840
        %842 = vmatmul.f32.gmra.mxu0 %v692
        %v843 = vpop.f32.mrf.mxu0
        %v844 = vadd.f32 %v786, %v843
        %845 = vmatmul.f32.gmra.mxu0 %v694
        %v846 = vpop.f32.mrf.mxu0
        %v847 = vadd.f32 %v789, %v846
        %848 = vmatmul.f32.gmra.mxu0 %v696
        %v849 = vpop.f32.mrf.mxu0
        %v850 = vadd.f32 %v792, %v849
        %851 = vdwg.mxu0
        %852 = vmatpush.msra.mxu0 0.0
        %853 = vmatpush.msra.mxu0 0.0
        %854 = vmatpush.msra.mxu0 0.0
        %855 = vmatpush.msra.mxu0 0.0
        %856 = vmatpush.msra.mxu0 0.0
        %857 = vmatpush.msra.mxu0 0.0
        %858 = vmatpush.msra.mxu0 0.0
        %859 = vmatpush.msra.mxu0 0.0
        %860 = vmatpush.msra.mxu0 0.0
        %861 = vmatpush.msra.mxu0 0.0
        %862 = vmatpush.msra.mxu0 0.0
        %863 = vmatpush.msra.mxu0 0.0
        %864 = vmatpush.msra.mxu0 %v601
        %865 = vmatpush.msra.mxu0 %v599
        %866 = vmatpush.msra.mxu0 %v597
        %867 = vmatpush.msra.mxu0 %v595
        %868 = vmatmul.f32.gmra.mxu0 %v690
        %v869 = vpop.f32.mrf.mxu0
        %v870 = vadd.f32 %v812, %v869
        %871 = vmatmul.f32.gmra.mxu0 %v692
        %v872 = vpop.f32.mrf.mxu0
        %v873 = vadd.f32 %v815, %v872
        %874 = vmatmul.f32.gmra.mxu0 %v694
        %v875 = vpop.f32.mrf.mxu0
        %v876 = vadd.f32 %v818, %v875
        %877 = vmatmul.f32.gmra.mxu0 %v696
        %v878 = vpop.f32.mrf.mxu0
        %v879 = vadd.f32 %v821, %v878
        %880 = vdwg.mxu0
        %s881 = scalar_lea.vmem [#allocation2], 128
        %v882 = vld [vmem:[%s881] sm:$0xff]
        %v883 = vld [vmem:[%s881 + $0x8] sm:$0xff]
        %v884 = vld [vmem:[%s881 + $0x10] sm:$0xff]
        %v885 = vld [vmem:[%s881 + $0x18] sm:$0xff]
        %v886 = vld [vmem:[%s881 + $0x20] sm:$0xff]
        %v887 = vld [vmem:[%s881 + $0x28] sm:$0xff]
        %v888 = vld [vmem:[%s881 + $0x30] sm:$0xff]
        %v889 = vld [vmem:[%s881 + $0x38] sm:$0xff]
        %vm890 = vcmask 1045504
        %v891 = vrot.slane %v582, 2
        %v892 = vrot.slane %v583, 2
        %v893 = vsel %vm890, %v891, %v892
        %v894 = vrot.slane %v584, 2
        %v895 = vsel %vm890, %v892, %v894
        %v896 = vrot.slane %v585, 2
        %v897 = vsel %vm890, %v894, %v896
        %v898 = vsel %vm623, %v893, 0
        %v900 = vsel %vm623, %v895, 0
        %v902 = vsel %vm623, %v897, 0
        %v904 = vsel %vm623, %v896, 0
        %906 = vmatpush.msra.mxu0 0.0
        %907 = vmatpush.msra.mxu0 0.0
        %908 = vmatpush.msra.mxu0 0.0
        %909 = vmatpush.msra.mxu0 0.0
        %910 = vmatpush.msra.mxu0 0.0
        %911 = vmatpush.msra.mxu0 0.0
        %912 = vmatpush.msra.mxu0 0.0
        %913 = vmatpush.msra.mxu0 0.0
        %914 = vmatpush.msra.mxu0 0.0
        %915 = vmatpush.msra.mxu0 0.0
        %916 = vmatpush.msra.mxu0 0.0
        %917 = vmatpush.msra.mxu0 0.0
        %918 = vmatpush.msra.mxu0 %v888
        %919 = vmatpush.msra.mxu0 %v886
        %920 = vmatpush.msra.mxu0 %v884
        %921 = vmatpush.msra.mxu0 %v882
        %922 = vmatmul.f32.gmra.mxu0 %v898
        %v923 = vpop.f32.mrf.mxu0
        %v924 = vadd.f32 0.0, %v923
        %925 = vmatmul.f32.gmra.mxu0 %v900
        %v926 = vpop.f32.mrf.mxu0
        %v927 = vadd.f32 0.0, %v926
        %928 = vmatmul.f32.gmra.mxu0 %v902
        %v929 = vpop.f32.mrf.mxu0
        %v930 = vadd.f32 0.0, %v929
        %931 = vmatmul.f32.gmra.mxu0 %v904
        %v932 = vpop.f32.mrf.mxu0
        %v933 = vadd.f32 0.0, %v932
        %934 = vdwg.mxu0
        %935 = vmatpush.msra.mxu0 0.0
        %936 = vmatpush.msra.mxu0 0.0
        %937 = vmatpush.msra.mxu0 0.0
        %938 = vmatpush.msra.mxu0 0.0
        %939 = vmatpush.msra.mxu0 0.0
        %940 = vmatpush.msra.mxu0 0.0
        %941 = vmatpush.msra.mxu0 0.0
        %942 = vmatpush.msra.mxu0 0.0
        %943 = vmatpush.msra.mxu0 0.0
        %944 = vmatpush.msra.mxu0 0.0
        %945 = vmatpush.msra.mxu0 0.0
        %946 = vmatpush.msra.mxu0 0.0
        %947 = vmatpush.msra.mxu0 %v889
        %948 = vmatpush.msra.mxu0 %v887
        %949 = vmatpush.msra.mxu0 %v885
        %950 = vmatpush.msra.mxu0 %v883
        %951 = vmatmul.f32.gmra.mxu0 %v898
        %v952 = vpop.f32.mrf.mxu0
        %v953 = vadd.f32 0.0, %v952
        %954 = vmatmul.f32.gmra.mxu0 %v900
        %v955 = vpop.f32.mrf.mxu0
        %v956 = vadd.f32 0.0, %v955
        %957 = vmatmul.f32.gmra.mxu0 %v902
        %v958 = vpop.f32.mrf.mxu0
        %v959 = vadd.f32 0.0, %v958
        %960 = vmatmul.f32.gmra.mxu0 %v904
        %v961 = vpop.f32.mrf.mxu0
        %v962 = vadd.f32 0.0, %v961
        %963 = vdwg.mxu0
        %v964 = vadd.f32 %v716, %v924
        %v965 = vadd.f32 %v745, %v953
        %v966 = vadd.f32 %v719, %v927
        %v967 = vadd.f32 %v748, %v956
        %v968 = vadd.f32 %v722, %v930
        %v969 = vadd.f32 %v751, %v959
        %v970 = vadd.f32 %v725, %v933
        %v971 = vadd.f32 %v754, %v962
        %s972 = scalar_lea.vmem [#allocation5], 128
        %v973 = vld [vmem:[%s972] sm:$0xff]
        %v974 = vld [vmem:[%s972 + $0x8] sm:$0xff]
        %v975 = vld [vmem:[%s972 + $0x10] sm:$0xff]
        %v976 = vld [vmem:[%s972 + $0x18] sm:$0xff]
        %v977 = vld [vmem:[%s972 + $0x20] sm:$0xff]
        %v978 = vld [vmem:[%s972 + $0x28] sm:$0xff]
        %v979 = vld [vmem:[%s972 + $0x30] sm:$0xff]
        %v980 = vld [vmem:[%s972 + $0x38] sm:$0xff]
        %981 = vmatpush.msra.mxu0 0.0
        %982 = vmatpush.msra.mxu0 0.0
        %983 = vmatpush.msra.mxu0 0.0
        %984 = vmatpush.msra.mxu0 0.0
        %985 = vmatpush.msra.mxu0 0.0
        %986 = vmatpush.msra.mxu0 0.0
        %987 = vmatpush.msra.mxu0 0.0
        %988 = vmatpush.msra.mxu0 0.0
        %989 = vmatpush.msra.mxu0 0.0
        %990 = vmatpush.msra.mxu0 0.0
        %991 = vmatpush.msra.mxu0 0.0
        %992 = vmatpush.msra.mxu0 0.0
        %993 = vmatpush.msra.mxu0 %v979
        %994 = vmatpush.msra.mxu0 %v977
        %995 = vmatpush.msra.mxu0 %v975
        %996 = vmatpush.msra.mxu0 %v973
        %997 = vmatmul.f32.gmra.mxu0 %v898
        %v998 = vpop.f32.mrf.mxu0
        %v999 = vadd.f32 0.0, %v998
        %1000 = vmatmul.f32.gmra.mxu0 %v900
        %v1001 = vpop.f32.mrf.mxu0
        %v1002 = vadd.f32 0.0, %v1001
        %1003 = vmatmul.f32.gmra.mxu0 %v902
        %v1004 = vpop.f32.mrf.mxu0
        %v1005 = vadd.f32 0.0, %v1004
        %1006 = vmatmul.f32.gmra.mxu0 %v904
        %v1007 = vpop.f32.mrf.mxu0
        %v1008 = vadd.f32 0.0, %v1007
        %1009 = vdwg.mxu0
        %1010 = vmatpush.msra.mxu0 0.0
        %1011 = vmatpush.msra.mxu0 0.0
        %1012 = vmatpush.msra.mxu0 0.0
        %1013 = vmatpush.msra.mxu0 0.0
        %1014 = vmatpush.msra.mxu0 0.0
        %1015 = vmatpush.msra.mxu0 0.0
        %1016 = vmatpush.msra.mxu0 0.0
        %1017 = vmatpush.msra.mxu0 0.0
        %1018 = vmatpush.msra.mxu0 0.0
        %1019 = vmatpush.msra.mxu0 0.0
        %1020 = vmatpush.msra.mxu0 0.0
        %1021 = vmatpush.msra.mxu0 0.0
        %1022 = vmatpush.msra.mxu0 %v980
        %1023 = vmatpush.msra.mxu0 %v978
        %1024 = vmatpush.msra.mxu0 %v976
        %1025 = vmatpush.msra.mxu0 %v974
        %1026 = vmatmul.f32.gmra.mxu0 %v898
        %v1027 = vpop.f32.mrf.mxu0
        %v1028 = vadd.f32 0.0, %v1027
        %1029 = vmatmul.f32.gmra.mxu0 %v900
        %v1030 = vpop.f32.mrf.mxu0
        %v1031 = vadd.f32 0.0, %v1030
        %1032 = vmatmul.f32.gmra.mxu0 %v902
        %v1033 = vpop.f32.mrf.mxu0
        %v1034 = vadd.f32 0.0, %v1033
        %1035 = vmatmul.f32.gmra.mxu0 %v904
        %v1036 = vpop.f32.mrf.mxu0
        %v1037 = vadd.f32 0.0, %v1036
        %1038 = vdwg.mxu0
        %v1039 = vadd.f32 %v841, %v999
        %v1040 = vadd.f32 %v870, %v1028
        %v1041 = vadd.f32 %v844, %v1002
        %v1042 = vadd.f32 %v873, %v1031
        %v1043 = vadd.f32 %v847, %v1005
        %v1044 = vadd.f32 %v876, %v1034
        %v1045 = vadd.f32 %v850, %v1008
        %v1046 = vadd.f32 %v879, %v1037
        %s1047 = scalar_lea.vmem [#allocation2], 192
        %v1048 = vld [vmem:[%s1047] sm:$0xff]
        %v1049 = vld [vmem:[%s1047 + $0x8] sm:$0xff]
        %v1050 = vld [vmem:[%s1047 + $0x10] sm:$0xff]
        %v1051 = vld [vmem:[%s1047 + $0x18] sm:$0xff]
        %v1052 = vld [vmem:[%s1047 + $0x20] sm:$0xff]
        %v1053 = vld [vmem:[%s1047 + $0x28] sm:$0xff]
        %v1054 = vld [vmem:[%s1047 + $0x30] sm:$0xff]
        %v1055 = vld [vmem:[%s1047 + $0x38] sm:$0xff]
        %vm1056 = vcmask 1044480
        %v1057 = vrot.slane %v582, 3
        %v1058 = vrot.slane %v583, 3
        %v1059 = vsel %vm1056, %v1057, %v1058
        %v1060 = vrot.slane %v584, 3
        %v1061 = vsel %vm1056, %v1058, %v1060
        %v1062 = vrot.slane %v585, 3
        %v1063 = vsel %vm1056, %v1060, %v1062
        %v1064 = vsel %vm623, %v1059, 0
        %v1066 = vsel %vm623, %v1061, 0
        %v1068 = vsel %vm623, %v1063, 0
        %v1070 = vsel %vm623, %v1062, 0
        %1072 = vmatpush.msra.mxu0 0.0
        %1073 = vmatpush.msra.mxu0 0.0
        %1074 = vmatpush.msra.mxu0 0.0
        %1075 = vmatpush.msra.mxu0 0.0
        %1076 = vmatpush.msra.mxu0 0.0
        %1077 = vmatpush.msra.mxu0 0.0
        %1078 = vmatpush.msra.mxu0 0.0
        %1079 = vmatpush.msra.mxu0 0.0
        %1080 = vmatpush.msra.mxu0 0.0
        %1081 = vmatpush.msra.mxu0 0.0
        %1082 = vmatpush.msra.mxu0 0.0
        %1083 = vmatpush.msra.mxu0 0.0
        %1084 = vmatpush.msra.mxu0 %v1054
        %1085 = vmatpush.msra.mxu0 %v1052
        %1086 = vmatpush.msra.mxu0 %v1050
        %1087 = vmatpush.msra.mxu0 %v1048
        %1088 = vmatmul.f32.gmra.mxu0 %v1064
        %v1089 = vpop.f32.mrf.mxu0
        %v1090 = vadd.f32 0.0, %v1089
        %1091 = vmatmul.f32.gmra.mxu0 %v1066
        %v1092 = vpop.f32.mrf.mxu0
        %v1093 = vadd.f32 0.0, %v1092
        %1094 = vmatmul.f32.gmra.mxu0 %v1068
        %v1095 = vpop.f32.mrf.mxu0
        %v1096 = vadd.f32 0.0, %v1095
        %1097 = vmatmul.f32.gmra.mxu0 %v1070
        %v1098 = vpop.f32.mrf.mxu0
        %v1099 = vadd.f32 0.0, %v1098
        %1100 = vdwg.mxu0
        %1101 = vmatpush.msra.mxu0 0.0
        %1102 = vmatpush.msra.mxu0 0.0
        %1103 = vmatpush.msra.mxu0 0.0
        %1104 = vmatpush.msra.mxu0 0.0
        %1105 = vmatpush.msra.mxu0 0.0
        %1106 = vmatpush.msra.mxu0 0.0
        %1107 = vmatpush.msra.mxu0 0.0
        %1108 = vmatpush.msra.mxu0 0.0
        %1109 = vmatpush.msra.mxu0 0.0
        %1110 = vmatpush.msra.mxu0 0.0
        %1111 = vmatpush.msra.mxu0 0.0
        %1112 = vmatpush.msra.mxu0 0.0
        %1113 = vmatpush.msra.mxu0 %v1055
        %1114 = vmatpush.msra.mxu0 %v1053
        %1115 = vmatpush.msra.mxu0 %v1051
        %1116 = vmatpush.msra.mxu0 %v1049
        %1117 = vmatmul.f32.gmra.mxu0 %v1064
        %v1118 = vpop.f32.mrf.mxu0
        %v1119 = vadd.f32 0.0, %v1118
        %1120 = vmatmul.f32.gmra.mxu0 %v1066
        %v1121 = vpop.f32.mrf.mxu0
        %v1122 = vadd.f32 0.0, %v1121
        %1123 = vmatmul.f32.gmra.mxu0 %v1068
        %v1124 = vpop.f32.mrf.mxu0
        %v1125 = vadd.f32 0.0, %v1124
        %1126 = vmatmul.f32.gmra.mxu0 %v1070
        %v1127 = vpop.f32.mrf.mxu0
        %v1128 = vadd.f32 0.0, %v1127
        %1129 = vdwg.mxu0
        %v1130 = vadd.f32 %v964, %v1090
        %v1131 = vadd.f32 %v965, %v1119
        %v1132 = vadd.f32 %v966, %v1093
        %v1133 = vadd.f32 %v967, %v1122
        %v1134 = vadd.f32 %v968, %v1096
        %v1135 = vadd.f32 %v969, %v1125
        %v1136 = vadd.f32 %v970, %v1099
        %v1137 = vadd.f32 %v971, %v1128
        %s1138 = scalar_lea.vmem [#allocation5], 192
        %v1139 = vld [vmem:[%s1138] sm:$0xff]
        %v1140 = vld [vmem:[%s1138 + $0x8] sm:$0xff]
        %v1141 = vld [vmem:[%s1138 + $0x10] sm:$0xff]
        %v1142 = vld [vmem:[%s1138 + $0x18] sm:$0xff]
        %v1143 = vld [vmem:[%s1138 + $0x20] sm:$0xff]
        %v1144 = vld [vmem:[%s1138 + $0x28] sm:$0xff]
        %v1145 = vld [vmem:[%s1138 + $0x30] sm:$0xff]
        %v1146 = vld [vmem:[%s1138 + $0x38] sm:$0xff]
        %1147 = vmatpush.msra.mxu0 0.0
        %1148 = vmatpush.msra.mxu0 0.0
        %1149 = vmatpush.msra.mxu0 0.0
        %1150 = vmatpush.msra.mxu0 0.0
        %1151 = vmatpush.msra.mxu0 0.0
        %1152 = vmatpush.msra.mxu0 0.0
        %1153 = vmatpush.msra.mxu0 0.0
        %1154 = vmatpush.msra.mxu0 0.0
        %1155 = vmatpush.msra.mxu0 0.0
        %1156 = vmatpush.msra.mxu0 0.0
        %1157 = vmatpush.msra.mxu0 0.0
        %1158 = vmatpush.msra.mxu0 0.0
        %1159 = vmatpush.msra.mxu0 %v1145
        %1160 = vmatpush.msra.mxu0 %v1143
        %1161 = vmatpush.msra.mxu0 %v1141
        %1162 = vmatpush.msra.mxu0 %v1139
        %1163 = vmatmul.f32.gmra.mxu0 %v1064
        %v1164 = vpop.f32.mrf.mxu0
        %v1165 = vadd.f32 0.0, %v1164
        %1166 = vmatmul.f32.gmra.mxu0 %v1066
        %v1167 = vpop.f32.mrf.mxu0
        %v1168 = vadd.f32 0.0, %v1167
        %1169 = vmatmul.f32.gmra.mxu0 %v1068
        %v1170 = vpop.f32.mrf.mxu0
        %v1171 = vadd.f32 0.0, %v1170
        %1172 = vmatmul.f32.gmra.mxu0 %v1070
        %v1173 = vpop.f32.mrf.mxu0
        %v1174 = vadd.f32 0.0, %v1173
        %1175 = vdwg.mxu0
        %1176 = vmatpush.msra.mxu0 0.0
        %1177 = vmatpush.msra.mxu0 0.0
        %1178 = vmatpush.msra.mxu0 0.0
        %1179 = vmatpush.msra.mxu0 0.0
        %1180 = vmatpush.msra.mxu0 0.0
        %1181 = vmatpush.msra.mxu0 0.0
        %1182 = vmatpush.msra.mxu0 0.0
        %1183 = vmatpush.msra.mxu0 0.0
        %1184 = vmatpush.msra.mxu0 0.0
        %1185 = vmatpush.msra.mxu0 0.0
        %1186 = vmatpush.msra.mxu0 0.0
        %1187 = vmatpush.msra.mxu0 0.0
        %1188 = vmatpush.msra.mxu0 %v1146
        %1189 = vmatpush.msra.mxu0 %v1144
        %1190 = vmatpush.msra.mxu0 %v1142
        %1191 = vmatpush.msra.mxu0 %v1140
        %1192 = vmatmul.f32.gmra.mxu0 %v1064
        %v1193 = vpop.f32.mrf.mxu0
        %v1194 = vadd.f32 0.0, %v1193
        %1195 = vmatmul.f32.gmra.mxu0 %v1066
        %v1196 = vpop.f32.mrf.mxu0
        %v1197 = vadd.f32 0.0, %v1196
        %1198 = vmatmul.f32.gmra.mxu0 %v1068
        %v1199 = vpop.f32.mrf.mxu0
        %v1200 = vadd.f32 0.0, %v1199
        %1201 = vmatmul.f32.gmra.mxu0 %v1070
        %v1202 = vpop.f32.mrf.mxu0
        %v1203 = vadd.f32 0.0, %v1202
        %1204 = vdwg.mxu0
        %v1205 = vadd.f32 %v1039, %v1165
        %v1206 = vadd.f32 %v1040, %v1194
        %v1207 = vadd.f32 %v1041, %v1168
        %v1208 = vadd.f32 %v1042, %v1197
        %v1209 = vadd.f32 %v1043, %v1171
        %v1210 = vadd.f32 %v1044, %v1200
        %v1211 = vadd.f32 %v1045, %v1174
        %v1212 = vadd.f32 %v1046, %v1203
        %s1213 = scalar_lea.vmem [#allocation2], 256
        %v1214 = vld [vmem:[%s1213] sm:$0xff]
        %v1215 = vld [vmem:[%s1213 + $0x8] sm:$0xff]
        %v1216 = vld [vmem:[%s1213 + $0x10] sm:$0xff]
        %v1217 = vld [vmem:[%s1213 + $0x18] sm:$0xff]
        %v1218 = vld [vmem:[%s1213 + $0x20] sm:$0xff]
        %v1219 = vld [vmem:[%s1213 + $0x28] sm:$0xff]
        %v1220 = vld [vmem:[%s1213 + $0x30] sm:$0xff]
        %v1221 = vld [vmem:[%s1213 + $0x38] sm:$0xff]
        %vm1222 = vcmask 1043456
        %v1223 = vrot.slane %v582, 4
        %v1224 = vrot.slane %v583, 4
        %v1225 = vsel %vm1222, %v1223, %v1224
        %v1226 = vrot.slane %v584, 4
        %v1227 = vsel %vm1222, %v1224, %v1226
        %v1228 = vrot.slane %v585, 4
        %v1229 = vsel %vm1222, %v1226, %v1228
        %v1230 = vsel %vm623, %v1225, 0
        %v1232 = vsel %vm623, %v1227, 0
        %v1234 = vsel %vm623, %v1229, 0
        %v1236 = vsel %vm623, %v1228, 0
        %1238 = vmatpush.msra.mxu0 0.0
        %1239 = vmatpush.msra.mxu0 0.0
        %1240 = vmatpush.msra.mxu0 0.0
        %1241 = vmatpush.msra.mxu0 0.0
        %1242 = vmatpush.msra.mxu0 0.0
        %1243 = vmatpush.msra.mxu0 0.0
        %1244 = vmatpush.msra.mxu0 0.0
        %1245 = vmatpush.msra.mxu0 0.0
        %1246 = vmatpush.msra.mxu0 0.0
        %1247 = vmatpush.msra.mxu0 0.0
        %1248 = vmatpush.msra.mxu0 0.0
        %1249 = vmatpush.msra.mxu0 0.0
        %1250 = vmatpush.msra.mxu0 %v1220
        %1251 = vmatpush.msra.mxu0 %v1218
        %1252 = vmatpush.msra.mxu0 %v1216
        %1253 = vmatpush.msra.mxu0 %v1214
        %1254 = vmatmul.f32.gmra.mxu0 %v1230
        %v1255 = vpop.f32.mrf.mxu0
        %v1256 = vadd.f32 0.0, %v1255
        %1257 = vmatmul.f32.gmra.mxu0 %v1232
        %v1258 = vpop.f32.mrf.mxu0
        %v1259 = vadd.f32 0.0, %v1258
        %1260 = vmatmul.f32.gmra.mxu0 %v1234
        %v1261 = vpop.f32.mrf.mxu0
        %v1262 = vadd.f32 0.0, %v1261
        %1263 = vmatmul.f32.gmra.mxu0 %v1236
        %v1264 = vpop.f32.mrf.mxu0
        %v1265 = vadd.f32 0.0, %v1264
        %1266 = vdwg.mxu0
        %1267 = vmatpush.msra.mxu0 0.0
        %1268 = vmatpush.msra.mxu0 0.0
        %1269 = vmatpush.msra.mxu0 0.0
        %1270 = vmatpush.msra.mxu0 0.0
        %1271 = vmatpush.msra.mxu0 0.0
        %1272 = vmatpush.msra.mxu0 0.0
        %1273 = vmatpush.msra.mxu0 0.0
        %1274 = vmatpush.msra.mxu0 0.0
        %1275 = vmatpush.msra.mxu0 0.0
        %1276 = vmatpush.msra.mxu0 0.0
        %1277 = vmatpush.msra.mxu0 0.0
        %1278 = vmatpush.msra.mxu0 0.0
        %1279 = vmatpush.msra.mxu0 %v1221
        %1280 = vmatpush.msra.mxu0 %v1219
        %1281 = vmatpush.msra.mxu0 %v1217
        %1282 = vmatpush.msra.mxu0 %v1215
        %1283 = vmatmul.f32.gmra.mxu0 %v1230
        %v1284 = vpop.f32.mrf.mxu0
        %v1285 = vadd.f32 0.0, %v1284
        %1286 = vmatmul.f32.gmra.mxu0 %v1232
        %v1287 = vpop.f32.mrf.mxu0
        %v1288 = vadd.f32 0.0, %v1287
        %1289 = vmatmul.f32.gmra.mxu0 %v1234
        %v1290 = vpop.f32.mrf.mxu0
        %v1291 = vadd.f32 0.0, %v1290
        %1292 = vmatmul.f32.gmra.mxu0 %v1236
        %v1293 = vpop.f32.mrf.mxu0
        %v1294 = vadd.f32 0.0, %v1293
        %1295 = vdwg.mxu0
        %v1296 = vadd.f32 %v1130, %v1256
        %v1297 = vadd.f32 %v1131, %v1285
        %v1298 = vadd.f32 %v1132, %v1259
        %v1299 = vadd.f32 %v1133, %v1288
        %v1300 = vadd.f32 %v1134, %v1262
        %v1301 = vadd.f32 %v1135, %v1291
        %v1302 = vadd.f32 %v1136, %v1265
        %v1303 = vadd.f32 %v1137, %v1294
        %s1304 = scalar_lea.vmem [#allocation5], 256
        %v1305 = vld [vmem:[%s1304] sm:$0xff]
        %v1306 = vld [vmem:[%s1304 + $0x8] sm:$0xff]
        %v1307 = vld [vmem:[%s1304 + $0x10] sm:$0xff]
        %v1308 = vld [vmem:[%s1304 + $0x18] sm:$0xff]
        %v1309 = vld [vmem:[%s1304 + $0x20] sm:$0xff]
        %v1310 = vld [vmem:[%s1304 + $0x28] sm:$0xff]
        %v1311 = vld [vmem:[%s1304 + $0x30] sm:$0xff]
        %v1312 = vld [vmem:[%s1304 + $0x38] sm:$0xff]
        %1313 = vmatpush.msra.mxu0 0.0
        %1314 = vmatpush.msra.mxu0 0.0
        %1315 = vmatpush.msra.mxu0 0.0
        %1316 = vmatpush.msra.mxu0 0.0
        %1317 = vmatpush.msra.mxu0 0.0
        %1318 = vmatpush.msra.mxu0 0.0
        %1319 = vmatpush.msra.mxu0 0.0
        %1320 = vmatpush.msra.mxu0 0.0
        %1321 = vmatpush.msra.mxu0 0.0
        %1322 = vmatpush.msra.mxu0 0.0
        %1323 = vmatpush.msra.mxu0 0.0
        %1324 = vmatpush.msra.mxu0 0.0
        %1325 = vmatpush.msra.mxu0 %v1311
        %1326 = vmatpush.msra.mxu0 %v1309
        %1327 = vmatpush.msra.mxu0 %v1307
        %1328 = vmatpush.msra.mxu0 %v1305
        %1329 = vmatmul.f32.gmra.mxu0 %v1230
        %v1330 = vpop.f32.mrf.mxu0
        %v1331 = vadd.f32 0.0, %v1330
        %1332 = vmatmul.f32.gmra.mxu0 %v1232
        %v1333 = vpop.f32.mrf.mxu0
        %v1334 = vadd.f32 0.0, %v1333
        %1335 = vmatmul.f32.gmra.mxu0 %v1234
        %v1336 = vpop.f32.mrf.mxu0
        %v1337 = vadd.f32 0.0, %v1336
        %1338 = vmatmul.f32.gmra.mxu0 %v1236
        %v1339 = vpop.f32.mrf.mxu0
        %v1340 = vadd.f32 0.0, %v1339
        %1341 = vdwg.mxu0
        %1342 = vmatpush.msra.mxu0 0.0
        %1343 = vmatpush.msra.mxu0 0.0
        %1344 = vmatpush.msra.mxu0 0.0
        %1345 = vmatpush.msra.mxu0 0.0
        %1346 = vmatpush.msra.mxu0 0.0
        %1347 = vmatpush.msra.mxu0 0.0
        %1348 = vmatpush.msra.mxu0 0.0
        %1349 = vmatpush.msra.mxu0 0.0
        %1350 = vmatpush.msra.mxu0 0.0
        %1351 = vmatpush.msra.mxu0 0.0
        %1352 = vmatpush.msra.mxu0 0.0
        %1353 = vmatpush.msra.mxu0 0.0
        %1354 = vmatpush.msra.mxu0 %v1312
        %1355 = vmatpush.msra.mxu0 %v1310
        %1356 = vmatpush.msra.mxu0 %v1308
        %1357 = vmatpush.msra.mxu0 %v1306
        %1358 = vmatmul.f32.gmra.mxu0 %v1230
        %v1359 = vpop.f32.mrf.mxu0
        %v1360 = vadd.f32 0.0, %v1359
        %1361 = vmatmul.f32.gmra.mxu0 %v1232
        %v1362 = vpop.f32.mrf.mxu0
        %v1363 = vadd.f32 0.0, %v1362
        %1364 = vmatmul.f32.gmra.mxu0 %v1234
        %v1365 = vpop.f32.mrf.mxu0
        %v1366 = vadd.f32 0.0, %v1365
        %1367 = vmatmul.f32.gmra.mxu0 %v1236
        %v1368 = vpop.f32.mrf.mxu0
        %v1369 = vadd.f32 0.0, %v1368
        %1370 = vdwg.mxu0
        %v1371 = vadd.f32 %v1205, %v1331
        %v1372 = vadd.f32 %v1206, %v1360
        %v1373 = vadd.f32 %v1207, %v1334
        %v1374 = vadd.f32 %v1208, %v1363
        %v1375 = vadd.f32 %v1209, %v1337
        %v1376 = vadd.f32 %v1210, %v1366
        %v1377 = vadd.f32 %v1211, %v1340
        %v1378 = vadd.f32 %v1212, %v1369
        %v1380 = vperm.slane %v577, 0
        %v1381 = vperm.slane %v577, 1
        %v1384 = vmul.f32 %v1296, %v1380
        %v1385 = vmul.f32 %v1297, %v1381
        %v1386 = vmul.f32 %v1298, %v1380
        %v1387 = vmul.f32 %v1299, %v1381
        %v1388 = vmul.f32 %v1300, %v1380
        %v1389 = vmul.f32 %v1301, %v1381
        %v1390 = vmul.f32 %v1302, %v1380
        %v1391 = vmul.f32 %v1303, %v1381
        %v1393 = vperm.slane %v578, 0
        %v1394 = vperm.slane %v578, 1
        %v1397 = vadd.f32 %v1384, %v1393
        %v1398 = vadd.f32 %v1385, %v1394
        %v1399 = vadd.f32 %v1386, %v1393
        %v1400 = vadd.f32 %v1387, %v1394
        %v1401 = vadd.f32 %v1388, %v1393
        %v1402 = vadd.f32 %v1389, %v1394
        %v1403 = vadd.f32 %v1390, %v1393
        %v1404 = vadd.f32 %v1391, %v1394
        %v1405 = vmax.f32 %v1397, 0.0
        %v1406 = vmax.f32 %v1398, 0.0
        %v1407 = vmax.f32 %v1399, 0.0
        %v1408 = vmax.f32 %v1400, 0.0
        %v1409 = vmax.f32 %v1401, 0.0
        %v1410 = vmax.f32 %v1402, 0.0
        %v1411 = vmax.f32 %v1403, 0.0
        %v1412 = vmax.f32 %v1404, 0.0
        %v1413 = vmul.f32 %v1371, %v1380
        %v1414 = vmul.f32 %v1372, %v1381
        %v1415 = vmul.f32 %v1373, %v1380
        %v1416 = vmul.f32 %v1374, %v1381
        %v1417 = vmul.f32 %v1375, %v1380
        %v1418 = vmul.f32 %v1376, %v1381
        %v1419 = vmul.f32 %v1377, %v1380
        %v1420 = vmul.f32 %v1378, %v1381
        %v1421 = vadd.f32 %v1413, %v1393
        %v1422 = vadd.f32 %v1414, %v1394
        %v1423 = vadd.f32 %v1415, %v1393
        %v1424 = vadd.f32 %v1416, %v1394
        %v1425 = vadd.f32 %v1417, %v1393
        %v1426 = vadd.f32 %v1418, %v1394
        %v1427 = vadd.f32 %v1419, %v1393
        %v1428 = vadd.f32 %v1420, %v1394
        %v1429 = vmax.f32 %v1421, 0.0
        %v1430 = vmax.f32 %v1422, 0.0
        %v1431 = vmax.f32 %v1423, 0.0
        %v1432 = vmax.f32 %v1424, 0.0
        %v1433 = vmax.f32 %v1425, 0.0
        %v1434 = vmax.f32 %v1426, 0.0
        %v1435 = vmax.f32 %v1427, 0.0
        %v1436 = vmax.f32 %v1428, 0.0
        %v1437 = vmax.f32 %v1405, %v1429
        %v1438 = vmax.f32 %v1406, %v1430
        %v1439 = vmax.f32 %v1407, %v1431
        %v1440 = vmax.f32 %v1408, %v1432
        %v1441 = vmax.f32 %v1409, %v1433
        %v1442 = vmax.f32 %v1410, %v1434
        %v1443 = vmax.f32 %v1411, %v1435
        %v1444 = vmax.f32 %v1412, %v1436
        %v1453 = vrot.slane %v1437, 1
        %v1454 = vrot.slane %v1439, 1
        %v1455 = vsel %vm615, %v1453, %v1454
        %v1456 = vrot.slane %v1438, 1
        %v1457 = vrot.slane %v1440, 1
        %v1458 = vsel %vm615, %v1456, %v1457
        %v1459 = vrot.slane %v1441, 1
        %v1460 = vsel %vm615, %v1454, %v1459
        %v1461 = vrot.slane %v1442, 1
        %v1462 = vsel %vm615, %v1457, %v1461
        %v1463 = vrot.slane %v1443, 1
        %v1464 = vsel %vm615, %v1459, %v1463
        %v1465 = vrot.slane %v1444, 1
        %v1466 = vsel %vm615, %v1461, %v1465
        %v1475 = vmax.f32 %v1437, %v1455
        %v1476 = vmax.f32 %v1438, %v1458
        %v1477 = vmax.f32 %v1439, %v1460
        %v1478 = vmax.f32 %v1440, %v1462
        %v1479 = vmax.f32 %v1441, %v1464
        %v1480 = vmax.f32 %v1442, %v1466
        %v1481 = vmax.f32 %v1443, %v1463
        %v1482 = vmax.f32 %v1444, %v1465
        %vm1483 = vcmask 220160
        %v1485 = vsel %vm1483, %v570, 0
        %v1488 = vsel %vm1483, %v571, 0
        %v1491 = vsel %vm1483, %v572, 0
        %vm1493 = vcmask 1042432
        %v1495 = vsel %vm1493, %v1481, 0
        %v1498 = vsel %vm1493, %v1482, 0
        %1500 = vmatpush.msra.mxu0 0.0
        %1501 = vmatpush.msra.mxu0 0.0
        %1502 = vmatpush.msra.mxu0 0.0
        %1503 = vmatpush.msra.mxu0 0.0
        %1504 = vmatpush.msra.mxu0 0.0
        %1505 = vmatpush.msra.mxu0 0.0
        %1506 = vmatpush.msra.mxu0 0.0
        %1507 = vmatpush.msra.mxu0 0.0
        %1508 = vmatpush.msra.mxu0 0.0
        %1509 = vmatpush.msra.mxu0 0.0
        %1510 = vmatpush.msra.mxu0 0.0
        %1511 = vmatpush.msra.mxu0 0.0
        %1512 = vmatpush.msra.mxu0 %v1495
        %1513 = vmatpush.msra.mxu0 %v1479
        %1514 = vmatpush.msra.mxu0 %v1477
        %1515 = vmatpush.msra.mxu0 %v1475
        %1516 = vmatmul.f32.gmra.mxu0 %v1485
        %v1517 = vpop.f32.mrf.mxu0
        %v1518 = vadd.f32 0.0, %v1517
        %1519 = vmatmul.f32.gmra.mxu0 %v1488
        %v1520 = vpop.f32.mrf.mxu0
        %v1521 = vadd.f32 0.0, %v1520
        %1522 = vmatmul.f32.gmra.mxu0 %v1491
        %v1523 = vpop.f32.mrf.mxu0
        %v1524 = vadd.f32 0.0, %v1523
        %1525 = vdwg.mxu0
        %1526 = vmatpush.msra.mxu0 0.0
        %1527 = vmatpush.msra.mxu0 0.0
        %1528 = vmatpush.msra.mxu0 0.0
        %1529 = vmatpush.msra.mxu0 0.0
        %1530 = vmatpush.msra.mxu0 0.0
        %1531 = vmatpush.msra.mxu0 0.0
        %1532 = vmatpush.msra.mxu0 0.0
        %1533 = vmatpush.msra.mxu0 0.0
        %1534 = vmatpush.msra.mxu0 0.0
        %1535 = vmatpush.msra.mxu0 0.0
        %1536 = vmatpush.msra.mxu0 0.0
        %1537 = vmatpush.msra.mxu0 0.0
        %1538 = vmatpush.msra.mxu0 %v1498
        %1539 = vmatpush.msra.mxu0 %v1480
        %1540 = vmatpush.msra.mxu0 %v1478
        %1541 = vmatpush.msra.mxu0 %v1476
        %1542 = vmatmul.f32.gmra.mxu0 %v1485
        %v1543 = vpop.f32.mrf.mxu0
        %v1544 = vadd.f32 0.0, %v1543
        %1545 = vmatmul.f32.gmra.mxu0 %v1488
        %v1546 = vpop.f32.mrf.mxu0
        %v1547 = vadd.f32 0.0, %v1546
        %1548 = vmatmul.f32.gmra.mxu0 %v1491
        %v1549 = vpop.f32.mrf.mxu0
        %v1550 = vadd.f32 0.0, %v1549
        %1551 = vdwg.mxu0
        %v1552 = vld [vmem:[#allocation10] sm:$0xff]
        %v1553 = vld [vmem:[#allocation10 + $0x8] sm:$0xff]
        %v1554 = vld [vmem:[#allocation10 + $0x10] sm:$0xff]
        %v1555 = vld [vmem:[#allocation10 + $0x18] sm:$0xff]
        %v1556 = vld [vmem:[#allocation10 + $0x20] sm:$0xff]
        %v1557 = vld [vmem:[#allocation10 + $0x28] sm:$0xff]
        %v1558 = vld [vmem:[#allocation10 + $0x30] sm:$0xff]
        %v1559 = vld [vmem:[#allocation10 + $0x38] sm:$0xff]
        %v1560 = vld [vmem:[#allocation10 + $0x40] sm:$0xff]
        %v1561 = vld [vmem:[#allocation10 + $0x48] sm:$0xff]
        %v1562 = vld [vmem:[#allocation10 + $0x50] sm:$0xff]
        %v1563 = vld [vmem:[#allocation10 + $0x58] sm:$0xff]
        %v1564 = vld [vmem:[#allocation10 + $0x60] sm:$0xff]
        %v1565 = vld [vmem:[#allocation10 + $0x68] sm:$0xff]
        %v1566 = vld [vmem:[#allocation10 + $0x70] sm:$0xff]
        %v1567 = vld [vmem:[#allocation10 + $0x78] sm:$0xff]
        %v1568 = vld [vmem:[#allocation10 + $0x80] sm:$0xff]
        %v1569 = vld [vmem:[#allocation10 + $0x88] sm:$0xff]
        %v1570 = vld [vmem:[#allocation10 + $0x90] sm:$0xff]
        %v1571 = vld [vmem:[#allocation10 + $0x98] sm:$0xff]
        %v1572 = vld [vmem:[#allocation10 + $0xa0] sm:$0xff]
        %v1573 = vld [vmem:[#allocation10 + $0xa8] sm:$0xff]
        %v1574 = vld [vmem:[#allocation10 + $0xb0] sm:$0xff]
        %v1575 = vld [vmem:[#allocation10 + $0xb8] sm:$0xff]
        %v1576 = vld [vmem:[#allocation10 + $0xc0] sm:$0xff]
        %v1577 = vld [vmem:[#allocation10 + $0xc8] sm:$0xff]
        %v1578 = vld [vmem:[#allocation10 + $0xd0] sm:$0xff]
        %v1579 = vld [vmem:[#allocation10 + $0xd8] sm:$0xff]
        %v1580 = vld [vmem:[#allocation10 + $0xe0] sm:$0xff]
        %v1581 = vld [vmem:[#allocation10 + $0xe8] sm:$0xff]
        %v1582 = vld [vmem:[#allocation10 + $0xf0] sm:$0xff]
        %v1583 = vld [vmem:[#allocation10 + $0xf8] sm:$0xff]
        %v1584 = vld [vmem:[#allocation10 + $0x100] sm:$0xff]
        %v1585 = vld [vmem:[#allocation10 + $0x108] sm:$0xff]
        %v1586 = vld [vmem:[#allocation10 + $0x110] sm:$0xff]
        %v1587 = vld [vmem:[#allocation10 + $0x118] sm:$0xff]
        %v1588 = vld [vmem:[#allocation10 + $0x120] sm:$0xff]
        %v1589 = vld [vmem:[#allocation10 + $0x128] sm:$0xff]
        %v1590 = vld [vmem:[#allocation10 + $0x130] sm:$0xff]
        %v1591 = vld [vmem:[#allocation10 + $0x138] sm:$0xff]
        %v1592 = vld [vmem:[#allocation10 + $0x140] sm:$0xff]
        %v1593 = vld [vmem:[#allocation10 + $0x148] sm:$0xff]
        %v1594 = vld [vmem:[#allocation10 + $0x150] sm:$0xff]
        %v1595 = vld [vmem:[#allocation10 + $0x158] sm:$0xff]
        %v1596 = vld [vmem:[#allocation10 + $0x160] sm:$0xff]
        %v1597 = vld [vmem:[#allocation10 + $0x168] sm:$0xff]
        %v1598 = vld [vmem:[#allocation10 + $0x170] sm:$0xff]
        %v1599 = vld [vmem:[#allocation10 + $0x178] sm:$0xff]
        %v1600 = vld [vmem:[#allocation10 + $0x180] sm:$0xff]
        %v1601 = vld [vmem:[#allocation10 + $0x188] sm:$0xff]
        %v1602 = vld [vmem:[#allocation10 + $0x190] sm:$0xff]
        %v1603 = vld [vmem:[#allocation10 + $0x198] sm:$0xff]
        %v1604 = vld [vmem:[#allocation10 + $0x1a0] sm:$0xff]
        %v1605 = vld [vmem:[#allocation10 + $0x1a8] sm:$0xff]
        %v1606 = vld [vmem:[#allocation10 + $0x1b0] sm:$0xff]
        %v1607 = vld [vmem:[#allocation10 + $0x1b8] sm:$0xff]
        %v1608 = vld [vmem:[#allocation11] sm:$0xff]
        %v1609 = vld [vmem:[#allocation11 + $0x8] sm:$0xff]
        %v1610 = vld [vmem:[#allocation11 + $0x10] sm:$0xff]
        %v1611 = vld [vmem:[#allocation11 + $0x18] sm:$0xff]
        %v1612 = vld [vmem:[#allocation11 + $0x20] sm:$0xff]
        %v1613 = vld [vmem:[#allocation11 + $0x28] sm:$0xff]
        %v1614 = vld [vmem:[#allocation11 + $0x30] sm:$0xff]
        %v1615 = vld [vmem:[#allocation11 + $0x38] sm:$0xff]
        %v1616 = vld [vmem:[#allocation11 + $0x40] sm:$0xff]
        %v1617 = vld [vmem:[#allocation11 + $0x48] sm:$0xff]
        %v1618 = vld [vmem:[#allocation11 + $0x50] sm:$0xff]
        %v1619 = vld [vmem:[#allocation11 + $0x58] sm:$0xff]
        %v1620 = vld [vmem:[#allocation11 + $0x60] sm:$0xff]
        %v1621 = vld [vmem:[#allocation11 + $0x68] sm:$0xff]
        %v1622 = vld [vmem:[#allocation11 + $0x70] sm:$0xff]
        %v1623 = vld [vmem:[#allocation11 + $0x78] sm:$0xff]
        %v1624 = vld [vmem:[#allocation11 + $0x80] sm:$0xff]
        %v1625 = vld [vmem:[#allocation11 + $0x88] sm:$0xff]
        %v1626 = vld [vmem:[#allocation11 + $0x90] sm:$0xff]
        %v1627 = vld [vmem:[#allocation11 + $0x98] sm:$0xff]
        %v1628 = vld [vmem:[#allocation11 + $0xa0] sm:$0xff]
        %v1629 = vld [vmem:[#allocation11 + $0xa8] sm:$0xff]
        %v1630 = vld [vmem:[#allocation11 + $0xb0] sm:$0xff]
        %v1631 = vld [vmem:[#allocation11 + $0xb8] sm:$0xff]
        %v1632 = vld [vmem:[#allocation11 + $0xc0] sm:$0xff]
        %v1633 = vld [vmem:[#allocation11 + $0xc8] sm:$0xff]
        %v1634 = vld [vmem:[#allocation11 + $0xd0] sm:$0xff]
        %v1635 = vld [vmem:[#allocation11 + $0xd8] sm:$0xff]
        %v1636 = vld [vmem:[#allocation11 + $0xe0] sm:$0xff]
        %v1637 = vld [vmem:[#allocation11 + $0xe8] sm:$0xff]
        %v1638 = vld [vmem:[#allocation11 + $0xf0] sm:$0xff]
        %v1639 = vld [vmem:[#allocation11 + $0xf8] sm:$0xff]
        %v1640 = vld [vmem:[#allocation11 + $0x100] sm:$0xff]
        %v1641 = vld [vmem:[#allocation11 + $0x108] sm:$0xff]
        %v1642 = vld [vmem:[#allocation11 + $0x110] sm:$0xff]
        %v1643 = vld [vmem:[#allocation11 + $0x118] sm:$0xff]
        %v1644 = vld [vmem:[#allocation11 + $0x120] sm:$0xff]
        %v1645 = vld [vmem:[#allocation11 + $0x128] sm:$0xff]
        %v1646 = vld [vmem:[#allocation11 + $0x130] sm:$0xff]
        %v1647 = vld [vmem:[#allocation11 + $0x138] sm:$0xff]
        %v1648 = vld [vmem:[#allocation11 + $0x140] sm:$0xff]
        %v1649 = vld [vmem:[#allocation11 + $0x148] sm:$0xff]
        %v1650 = vld [vmem:[#allocation11 + $0x150] sm:$0xff]
        %v1651 = vld [vmem:[#allocation11 + $0x158] sm:$0xff]
        %v1652 = vld [vmem:[#allocation11 + $0x160] sm:$0xff]
        %v1653 = vld [vmem:[#allocation11 + $0x168] sm:$0xff]
        %v1654 = vld [vmem:[#allocation11 + $0x170] sm:$0xff]
        %v1655 = vld [vmem:[#allocation11 + $0x178] sm:$0xff]
        %v1656 = vld [vmem:[#allocation11 + $0x180] sm:$0xff]
        %v1657 = vld [vmem:[#allocation11 + $0x188] sm:$0xff]
        %v1658 = vld [vmem:[#allocation11 + $0x190] sm:$0xff]
        %v1659 = vld [vmem:[#allocation11 + $0x198] sm:$0xff]
        %v1660 = vld [vmem:[#allocation11 + $0x1a0] sm:$0xff]
        %v1661 = vld [vmem:[#allocation11 + $0x1a8] sm:$0xff]
        %v1662 = vld [vmem:[#allocation11 + $0x1b0] sm:$0xff]
        %v1663 = vld [vmem:[#allocation11 + $0x1b8] sm:$0xff]
        %s1664 = scalar_lea.vmem [#allocation10], 448
        %v1665 = vld [vmem:[%s1664] sm:$0xff]
        %v1666 = vld [vmem:[%s1664 + $0x8] sm:$0xff]
        %v1667 = vld [vmem:[%s1664 + $0x10] sm:$0xff]
        %v1668 = vld [vmem:[%s1664 + $0x18] sm:$0xff]
        %v1669 = vld [vmem:[%s1664 + $0x20] sm:$0xff]
        %v1670 = vld [vmem:[%s1664 + $0x28] sm:$0xff]
        %v1671 = vld [vmem:[%s1664 + $0x30] sm:$0xff]
        %v1672 = vld [vmem:[%s1664 + $0x38] sm:$0xff]
        %v1673 = vld [vmem:[%s1664 + $0x40] sm:$0xff]
        %v1674 = vld [vmem:[%s1664 + $0x48] sm:$0xff]
        %v1675 = vld [vmem:[%s1664 + $0x50] sm:$0xff]
        %v1676 = vld [vmem:[%s1664 + $0x58] sm:$0xff]
        %v1677 = vld [vmem:[%s1664 + $0x60] sm:$0xff]
        %v1678 = vld [vmem:[%s1664 + $0x68] sm:$0xff]
        %v1679 = vld [vmem:[%s1664 + $0x70] sm:$0xff]
        %v1680 = vld [vmem:[%s1664 + $0x78] sm:$0xff]
        %v1681 = vld [vmem:[%s1664 + $0x80] sm:$0xff]
        %v1682 = vld [vmem:[%s1664 + $0x88] sm:$0xff]
        %v1683 = vld [vmem:[%s1664 + $0x90] sm:$0xff]
        %v1684 = vld [vmem:[%s1664 + $0x98] sm:$0xff]
        %v1685 = vld [vmem:[%s1664 + $0xa0] sm:$0xff]
        %v1686 = vld [vmem:[%s1664 + $0xa8] sm:$0xff]
        %v1687 = vld [vmem:[%s1664 + $0xb0] sm:$0xff]
        %v1688 = vld [vmem:[%s1664 + $0xb8] sm:$0xff]
        %v1689 = vld [vmem:[%s1664 + $0xc0] sm:$0xff]
        %v1690 = vld [vmem:[%s1664 + $0xc8] sm:$0xff]
        %v1691 = vld [vmem:[%s1664 + $0xd0] sm:$0xff]
        %v1692 = vld [vmem:[%s1664 + $0xd8] sm:$0xff]
        %v1693 = vld [vmem:[%s1664 + $0xe0] sm:$0xff]
        %v1694 = vld [vmem:[%s1664 + $0xe8] sm:$0xff]
        %v1695 = vld [vmem:[%s1664 + $0xf0] sm:$0xff]
        %v1696 = vld [vmem:[%s1664 + $0xf8] sm:$0xff]
        %v1697 = vld [vmem:[%s1664 + $0x100] sm:$0xff]
        %v1698 = vld [vmem:[%s1664 + $0x108] sm:$0xff]
        %v1699 = vld [vmem:[%s1664 + $0x110] sm:$0xff]
        %v1700 = vld [vmem:[%s1664 + $0x118] sm:$0xff]
        %v1701 = vld [vmem:[%s1664 + $0x120] sm:$0xff]
        %v1702 = vld [vmem:[%s1664 + $0x128] sm:$0xff]
        %v1703 = vld [vmem:[%s1664 + $0x130] sm:$0xff]
        %v1704 = vld [vmem:[%s1664 + $0x138] sm:$0xff]
        %v1705 = vld [vmem:[%s1664 + $0x140] sm:$0xff]
        %v1706 = vld [vmem:[%s1664 + $0x148] sm:$0xff]
        %v1707 = vld [vmem:[%s1664 + $0x150] sm:$0xff]
        %v1708 = vld [vmem:[%s1664 + $0x158] sm:$0xff]
        %v1709 = vld [vmem:[%s1664 + $0x160] sm:$0xff]
        %v1710 = vld [vmem:[%s1664 + $0x168] sm:$0xff]
        %v1711 = vld [vmem:[%s1664 + $0x170] sm:$0xff]
        %v1712 = vld [vmem:[%s1664 + $0x178] sm:$0xff]
        %v1713 = vld [vmem:[%s1664 + $0x180] sm:$0xff]
        %v1714 = vld [vmem:[%s1664 + $0x188] sm:$0xff]
        %v1715 = vld [vmem:[%s1664 + $0x190] sm:$0xff]
        %v1716 = vld [vmem:[%s1664 + $0x198] sm:$0xff]
        %v1717 = vld [vmem:[%s1664 + $0x1a0] sm:$0xff]
        %v1718 = vld [vmem:[%s1664 + $0x1a8] sm:$0xff]
        %v1719 = vld [vmem:[%s1664 + $0x1b0] sm:$0xff]
        %v1720 = vld [vmem:[%s1664 + $0x1b8] sm:$0xff]
        %v1725 = vrot.slane %v1518, 1
        %v1726 = vrot.slane %v1521, 1
        %v1727 = vsel %vm615, %v1725, %v1726
        %v1728 = vrot.slane %v1544, 1
        %v1729 = vrot.slane %v1547, 1
        %v1730 = vsel %vm615, %v1728, %v1729
        %vm1733 = vcmask 785408
        %v1734 = vsel %vm1733, %v1730, 0
        %v1736 = vsel %vm1733, %v1729, 0
        %1738 = vmatpush.msra.mxu0 %v1695
        %1739 = vmatpush.msra.mxu0 %v1693
        %1740 = vmatpush.msra.mxu0 %v1691
        %1741 = vmatpush.msra.mxu0 %v1689
        %1742 = vmatpush.msra.mxu0 %v1687
        %1743 = vmatpush.msra.mxu0 %v1685
        %1744 = vmatpush.msra.mxu0 %v1683
        %1745 = vmatpush.msra.mxu0 %v1681
        %1746 = vmatpush.msra.mxu0 %v1679
        %1747 = vmatpush.msra.mxu0 %v1677
        %1748 = vmatpush.msra.mxu0 %v1675
        %1749 = vmatpush.msra.mxu0 %v1673
        %1750 = vmatpush.msra.mxu0 %v1671
        %1751 = vmatpush.msra.mxu0 %v1669
        %1752 = vmatpush.msra.mxu0 %v1667
        %1753 = vmatpush.msra.mxu0 %v1665
        %1754 = vmatmul.f32.gmra.mxu0 %v1727
        %v1755 = vpop.f32.mrf.mxu0
        %v1756 = vadd.f32 0.0, %v1755
        %1757 = vmatmul.f32.gmra.mxu0 %v1726
        %v1758 = vpop.f32.mrf.mxu0
        %v1759 = vadd.f32 0.0, %v1758
        %1760 = vdwg.mxu0
        %1761 = vmatpush.msra.mxu0 0.0
        %1762 = vmatpush.msra.mxu0 0.0
        %1763 = vmatpush.msra.mxu0 0.0
        %1764 = vmatpush.msra.mxu0 0.0
        %1765 = vmatpush.msra.mxu0 %v1719
        %1766 = vmatpush.msra.mxu0 %v1717
        %1767 = vmatpush.msra.mxu0 %v1715
        %1768 = vmatpush.msra.mxu0 %v1713
        %1769 = vmatpush.msra.mxu0 %v1711
        %1770 = vmatpush.msra.mxu0 %v1709
        %1771 = vmatpush.msra.mxu0 %v1707
        %1772 = vmatpush.msra.mxu0 %v1705
        %1773 = vmatpush.msra.mxu0 %v1703
        %1774 = vmatpush.msra.mxu0 %v1701
        %1775 = vmatpush.msra.mxu0 %v1699
        %1776 = vmatpush.msra.mxu0 %v1697
        %1777 = vmatmul.f32.gmra.mxu0 %v1734
        %v1778 = vpop.f32.mrf.mxu0
        %v1779 = vadd.f32 %v1756, %v1778
        %1780 = vmatmul.f32.gmra.mxu0 %v1736
        %v1781 = vpop.f32.mrf.mxu0
        %v1782 = vadd.f32 %v1759, %v1781
        %1783 = vdwg.mxu0
        %1784 = vmatpush.msra.mxu0 %v1696
        %1785 = vmatpush.msra.mxu0 %v1694
        %1786 = vmatpush.msra.mxu0 %v1692
        %1787 = vmatpush.msra.mxu0 %v1690
        %1788 = vmatpush.msra.mxu0 %v1688
        %1789 = vmatpush.msra.mxu0 %v1686
        %1790 = vmatpush.msra.mxu0 %v1684
        %1791 = vmatpush.msra.mxu0 %v1682
        %1792 = vmatpush.msra.mxu0 %v1680
        %1793 = vmatpush.msra.mxu0 %v1678
        %1794 = vmatpush.msra.mxu0 %v1676
        %1795 = vmatpush.msra.mxu0 %v1674
        %1796 = vmatpush.msra.mxu0 %v1672
        %1797 = vmatpush.msra.mxu0 %v1670
        %1798 = vmatpush.msra.mxu0 %v1668
        %1799 = vmatpush.msra.mxu0 %v1666
        %1800 = vmatmul.f32.gmra.mxu0 %v1727
        %v1801 = vpop.f32.mrf.mxu0
        %v1802 = vadd.f32 0.0, %v1801
        %1803 = vmatmul.f32.gmra.mxu0 %v1726
        %v1804 = vpop.f32.mrf.mxu0
        %v1805 = vadd.f32 0.0, %v1804
        %1806 = vdwg.mxu0
        %1807 = vmatpush.msra.mxu0 0.0
        %1808 = vmatpush.msra.mxu0 0.0
        %1809 = vmatpush.msra.mxu0 0.0
        %1810 = vmatpush.msra.mxu0 0.0
        %1811 = vmatpush.msra.mxu0 %v1720
        %1812 = vmatpush.msra.mxu0 %v1718
        %1813 = vmatpush.msra.mxu0 %v1716
        %1814 = vmatpush.msra.mxu0 %v1714
        %1815 = vmatpush.msra.mxu0 %v1712
        %1816 = vmatpush.msra.mxu0 %v1710
        %1817 = vmatpush.msra.mxu0 %v1708
        %1818 = vmatpush.msra.mxu0 %v1706
        %1819 = vmatpush.msra.mxu0 %v1704
        %1820 = vmatpush.msra.mxu0 %v1702
        %1821 = vmatpush.msra.mxu0 %v1700
        %1822 = vmatpush.msra.mxu0 %v1698
        %1823 = vmatmul.f32.gmra.mxu0 %v1734
        %v1824 = vpop.f32.mrf.mxu0
        %v1825 = vadd.f32 %v1802, %v1824
        %1826 = vmatmul.f32.gmra.mxu0 %v1736
        %v1827 = vpop.f32.mrf.mxu0
        %v1828 = vadd.f32 %v1805, %v1827
        %1829 = vdwg.mxu0
        %v1830 = vsel %vm1733, %v1544, 0
        %v1832 = vsel %vm1733, %v1547, 0
        %1834 = vmatpush.msra.mxu0 %v1582
        %1835 = vmatpush.msra.mxu0 %v1580
        %1836 = vmatpush.msra.mxu0 %v1578
        %1837 = vmatpush.msra.mxu0 %v1576
        %1838 = vmatpush.msra.mxu0 %v1574
        %1839 = vmatpush.msra.mxu0 %v1572
        %1840 = vmatpush.msra.mxu0 %v1570
        %1841 = vmatpush.msra.mxu0 %v1568
        %1842 = vmatpush.msra.mxu0 %v1566
        %1843 = vmatpush.msra.mxu0 %v1564
        %1844 = vmatpush.msra.mxu0 %v1562
        %1845 = vmatpush.msra.mxu0 %v1560
        %1846 = vmatpush.msra.mxu0 %v1558
        %1847 = vmatpush.msra.mxu0 %v1556
        %1848 = vmatpush.msra.mxu0 %v1554
        %1849 = vmatpush.msra.mxu0 %v1552
        %1850 = vmatmul.f32.gmra.mxu0 %v1518
        %v1851 = vpop.f32.mrf.mxu0
        %v1852 = vadd.f32 %v1779, %v1851
        %1853 = vmatmul.f32.gmra.mxu0 %v1521
        %v1854 = vpop.f32.mrf.mxu0
        %v1855 = vadd.f32 %v1782, %v1854
        %1856 = vdwg.mxu0
        %1857 = vmatpush.msra.mxu0 0.0
        %1858 = vmatpush.msra.mxu0 0.0
        %1859 = vmatpush.msra.mxu0 0.0
        %1860 = vmatpush.msra.mxu0 0.0
        %1861 = vmatpush.msra.mxu0 %v1606
        %1862 = vmatpush.msra.mxu0 %v1604
        %1863 = vmatpush.msra.mxu0 %v1602
        %1864 = vmatpush.msra.mxu0 %v1600
        %1865 = vmatpush.msra.mxu0 %v1598
        %1866 = vmatpush.msra.mxu0 %v1596
        %1867 = vmatpush.msra.mxu0 %v1594
        %1868 = vmatpush.msra.mxu0 %v1592
        %1869 = vmatpush.msra.mxu0 %v1590
        %1870 = vmatpush.msra.mxu0 %v1588
        %1871 = vmatpush.msra.mxu0 %v1586
        %1872 = vmatpush.msra.mxu0 %v1584
        %1873 = vmatmul.f32.gmra.mxu0 %v1830
        %v1874 = vpop.f32.mrf.mxu0
        %v1875 = vadd.f32 %v1852, %v1874
        %1876 = vmatmul.f32.gmra.mxu0 %v1832
        %v1877 = vpop.f32.mrf.mxu0
        %v1878 = vadd.f32 %v1855, %v1877
        %1879 = vdwg.mxu0
        %1880 = vmatpush.msra.mxu0 %v1583
        %1881 = vmatpush.msra.mxu0 %v1581
        %1882 = vmatpush.msra.mxu0 %v1579
        %1883 = vmatpush.msra.mxu0 %v1577
        %1884 = vmatpush.msra.mxu0 %v1575
        %1885 = vmatpush.msra.mxu0 %v1573
        %1886 = vmatpush.msra.mxu0 %v1571
        %1887 = vmatpush.msra.mxu0 %v1569
        %1888 = vmatpush.msra.mxu0 %v1567
        %1889 = vmatpush.msra.mxu0 %v1565
        %1890 = vmatpush.msra.mxu0 %v1563
        %1891 = vmatpush.msra.mxu0 %v1561
        %1892 = vmatpush.msra.mxu0 %v1559
        %1893 = vmatpush.msra.mxu0 %v1557
        %1894 = vmatpush.msra.mxu0 %v1555
        %1895 = vmatpush.msra.mxu0 %v1553
        %1896 = vmatmul.f32.gmra.mxu0 %v1518
        %v1897 = vpop.f32.mrf.mxu0
        %v1898 = vadd.f32 %v1825, %v1897
        %1899 = vmatmul.f32.gmra.mxu0 %v1521
        %v1900 = vpop.f32.mrf.mxu0
        %v1901 = vadd.f32 %v1828, %v1900
        %1902 = vdwg.mxu0
        %1903 = vmatpush.msra.mxu0 0.0
        %1904 = vmatpush.msra.mxu0 0.0
        %1905 = vmatpush.msra.mxu0 0.0
        %1906 = vmatpush.msra.mxu0 0.0
        %1907 = vmatpush.msra.mxu0 %v1607
        %1908 = vmatpush.msra.mxu0 %v1605
        %1909 = vmatpush.msra.mxu0 %v1603
        %1910 = vmatpush.msra.mxu0 %v1601
        %1911 = vmatpush.msra.mxu0 %v1599
        %1912 = vmatpush.msra.mxu0 %v1597
        %1913 = vmatpush.msra.mxu0 %v1595
        %1914 = vmatpush.msra.mxu0 %v1593
        %1915 = vmatpush.msra.mxu0 %v1591
        %1916 = vmatpush.msra.mxu0 %v1589
        %1917 = vmatpush.msra.mxu0 %v1587
        %1918 = vmatpush.msra.mxu0 %v1585
        %1919 = vmatmul.f32.gmra.mxu0 %v1830
        %v1920 = vpop.f32.mrf.mxu0
        %v1921 = vadd.f32 %v1898, %v1920
        %1922 = vmatmul.f32.gmra.mxu0 %v1832
        %v1923 = vpop.f32.mrf.mxu0
        %v1924 = vadd.f32 %v1901, %v1923
        %1925 = vdwg.mxu0
        %s1926 = scalar_lea.vmem [#allocation11], 448
        %v1927 = vld [vmem:[%s1926] sm:$0xff]
        %v1928 = vld [vmem:[%s1926 + $0x8] sm:$0xff]
        %v1929 = vld [vmem:[%s1926 + $0x10] sm:$0xff]
        %v1930 = vld [vmem:[%s1926 + $0x18] sm:$0xff]
        %v1931 = vld [vmem:[%s1926 + $0x20] sm:$0xff]
        %v1932 = vld [vmem:[%s1926 + $0x28] sm:$0xff]
        %v1933 = vld [vmem:[%s1926 + $0x30] sm:$0xff]
        %v1934 = vld [vmem:[%s1926 + $0x38] sm:$0xff]
        %v1935 = vld [vmem:[%s1926 + $0x40] sm:$0xff]
        %v1936 = vld [vmem:[%s1926 + $0x48] sm:$0xff]
        %v1937 = vld [vmem:[%s1926 + $0x50] sm:$0xff]
        %v1938 = vld [vmem:[%s1926 + $0x58] sm:$0xff]
        %v1939 = vld [vmem:[%s1926 + $0x60] sm:$0xff]
        %v1940 = vld [vmem:[%s1926 + $0x68] sm:$0xff]
        %v1941 = vld [vmem:[%s1926 + $0x70] sm:$0xff]
        %v1942 = vld [vmem:[%s1926 + $0x78] sm:$0xff]
        %v1943 = vld [vmem:[%s1926 + $0x80] sm:$0xff]
        %v1944 = vld [vmem:[%s1926 + $0x88] sm:$0xff]
        %v1945 = vld [vmem:[%s1926 + $0x90] sm:$0xff]
        %v1946 = vld [vmem:[%s1926 + $0x98] sm:$0xff]
        %v1947 = vld [vmem:[%s1926 + $0xa0] sm:$0xff]
        %v1948 = vld [vmem:[%s1926 + $0xa8] sm:$0xff]
        %v1949 = vld [vmem:[%s1926 + $0xb0] sm:$0xff]
        %v1950 = vld [vmem:[%s1926 + $0xb8] sm:$0xff]
        %v1951 = vld [vmem:[%s1926 + $0xc0] sm:$0xff]
        %v1952 = vld [vmem:[%s1926 + $0xc8] sm:$0xff]
        %v1953 = vld [vmem:[%s1926 + $0xd0] sm:$0xff]
        %v1954 = vld [vmem:[%s1926 + $0xd8] sm:$0xff]
        %v1955 = vld [vmem:[%s1926 + $0xe0] sm:$0xff]
        %v1956 = vld [vmem:[%s1926 + $0xe8] sm:$0xff]
        %v1957 = vld [vmem:[%s1926 + $0xf0] sm:$0xff]
        %v1958 = vld [vmem:[%s1926 + $0xf8] sm:$0xff]
        %v1959 = vld [vmem:[%s1926 + $0x100] sm:$0xff]
        %v1960 = vld [vmem:[%s1926 + $0x108] sm:$0xff]
        %v1961 = vld [vmem:[%s1926 + $0x110] sm:$0xff]
        %v1962 = vld [vmem:[%s1926 + $0x118] sm:$0xff]
        %v1963 = vld [vmem:[%s1926 + $0x120] sm:$0xff]
        %v1964 = vld [vmem:[%s1926 + $0x128] sm:$0xff]
        %v1965 = vld [vmem:[%s1926 + $0x130] sm:$0xff]
        %v1966 = vld [vmem:[%s1926 + $0x138] sm:$0xff]
        %v1967 = vld [vmem:[%s1926 + $0x140] sm:$0xff]
        %v1968 = vld [vmem:[%s1926 + $0x148] sm:$0xff]
        %v1969 = vld [vmem:[%s1926 + $0x150] sm:$0xff]
        %v1970 = vld [vmem:[%s1926 + $0x158] sm:$0xff]
        %v1971 = vld [vmem:[%s1926 + $0x160] sm:$0xff]
        %v1972 = vld [vmem:[%s1926 + $0x168] sm:$0xff]
        %v1973 = vld [vmem:[%s1926 + $0x170] sm:$0xff]
        %v1974 = vld [vmem:[%s1926 + $0x178] sm:$0xff]
        %v1975 = vld [vmem:[%s1926 + $0x180] sm:$0xff]
        %v1976 = vld [vmem:[%s1926 + $0x188] sm:$0xff]
        %v1977 = vld [vmem:[%s1926 + $0x190] sm:$0xff]
        %v1978 = vld [vmem:[%s1926 + $0x198] sm:$0xff]
        %v1979 = vld [vmem:[%s1926 + $0x1a0] sm:$0xff]
        %v1980 = vld [vmem:[%s1926 + $0x1a8] sm:$0xff]
        %v1981 = vld [vmem:[%s1926 + $0x1b0] sm:$0xff]
        %v1982 = vld [vmem:[%s1926 + $0x1b8] sm:$0xff]
        %1983 = vmatpush.msra.mxu0 %v1957
        %1984 = vmatpush.msra.mxu0 %v1955
        %1985 = vmatpush.msra.mxu0 %v1953
        %1986 = vmatpush.msra.mxu0 %v1951
        %1987 = vmatpush.msra.mxu0 %v1949
        %1988 = vmatpush.msra.mxu0 %v1947
        %1989 = vmatpush.msra.mxu0 %v1945
        %1990 = vmatpush.msra.mxu0 %v1943
        %1991 = vmatpush.msra.mxu0 %v1941
        %1992 = vmatpush.msra.mxu0 %v1939
        %1993 = vmatpush.msra.mxu0 %v1937
        %1994 = vmatpush.msra.mxu0 %v1935
        %1995 = vmatpush.msra.mxu0 %v1933
        %1996 = vmatpush.msra.mxu0 %v1931
        %1997 = vmatpush.msra.mxu0 %v1929
        %1998 = vmatpush.msra.mxu0 %v1927
        %1999 = vmatmul.f32.gmra.mxu0 %v1727
        %v2000 = vpop.f32.mrf.mxu0
        %v2001 = vadd.f32 0.0, %v2000
        %2002 = vmatmul.f32.gmra.mxu0 %v1726
        %v2003 = vpop.f32.mrf.mxu0
        %v2004 = vadd.f32 0.0, %v2003
        %2005 = vdwg.mxu0
        %2006 = vmatpush.msra.mxu0 0.0
        %2007 = vmatpush.msra.mxu0 0.0
        %2008 = vmatpush.msra.mxu0 0.0
        %2009 = vmatpush.msra.mxu0 0.0
        %2010 = vmatpush.msra.mxu0 %v1981
        %2011 = vmatpush.msra.mxu0 %v1979
        %2012 = vmatpush.msra.mxu0 %v1977
        %2013 = vmatpush.msra.mxu0 %v1975
        %2014 = vmatpush.msra.mxu0 %v1973
        %2015 = vmatpush.msra.mxu0 %v1971
        %2016 = vmatpush.msra.mxu0 %v1969
        %2017 = vmatpush.msra.mxu0 %v1967
        %2018 = vmatpush.msra.mxu0 %v1965
        %2019 = vmatpush.msra.mxu0 %v1963
        %2020 = vmatpush.msra.mxu0 %v1961
        %2021 = vmatpush.msra.mxu0 %v1959
        %2022 = vmatmul.f32.gmra.mxu0 %v1734
        %v2023 = vpop.f32.mrf.mxu0
        %v2024 = vadd.f32 %v2001, %v2023
        %2025 = vmatmul.f32.gmra.mxu0 %v1736
        %v2026 = vpop.f32.mrf.mxu0
        %v2027 = vadd.f32 %v2004, %v2026
        %2028 = vdwg.mxu0
        %2029 = vmatpush.msra.mxu0 %v1958
        %2030 = vmatpush.msra.mxu0 %v1956
        %2031 = vmatpush.msra.mxu0 %v1954
        %2032 = vmatpush.msra.mxu0 %v1952
        %2033 = vmatpush.msra.mxu0 %v1950
        %2034 = vmatpush.msra.mxu0 %v1948
        %2035 = vmatpush.msra.mxu0 %v1946
        %2036 = vmatpush.msra.mxu0 %v1944
        %2037 = vmatpush.msra.mxu0 %v1942
        %2038 = vmatpush.msra.mxu0 %v1940
        %2039 = vmatpush.msra.mxu0 %v1938
        %2040 = vmatpush.msra.mxu0 %v1936
        %2041 = vmatpush.msra.mxu0 %v1934
        %2042 = vmatpush.msra.mxu0 %v1932
        %2043 = vmatpush.msra.mxu0 %v1930
        %2044 = vmatpush.msra.mxu0 %v1928
        %2045 = vmatmul.f32.gmra.mxu0 %v1727
        %v2046 = vpop.f32.mrf.mxu0
        %v2047 = vadd.f32 0.0, %v2046
        %2048 = vmatmul.f32.gmra.mxu0 %v1726
        %v2049 = vpop.f32.mrf.mxu0
        %v2050 = vadd.f32 0.0, %v2049
        %2051 = vdwg.mxu0
        %2052 = vmatpush.msra.mxu0 0.0
        %2053 = vmatpush.msra.mxu0 0.0
        %2054 = vmatpush.msra.mxu0 0.0
        %2055 = vmatpush.msra.mxu0 0.0
        %2056 = vmatpush.msra.mxu0 %v1982
        %2057 = vmatpush.msra.mxu0 %v1980
        %2058 = vmatpush.msra.mxu0 %v1978
        %2059 = vmatpush.msra.mxu0 %v1976
        %2060 = vmatpush.msra.mxu0 %v1974
        %2061 = vmatpush.msra.mxu0 %v1972
        %2062 = vmatpush.msra.mxu0 %v1970
        %2063 = vmatpush.msra.mxu0 %v1968
        %2064 = vmatpush.msra.mxu0 %v1966
        %2065 = vmatpush.msra.mxu0 %v1964
        %2066 = vmatpush.msra.mxu0 %v1962
        %2067 = vmatpush.msra.mxu0 %v1960
        %2068 = vmatmul.f32.gmra.mxu0 %v1734
        %v2069 = vpop.f32.mrf.mxu0
        %v2070 = vadd.f32 %v2047, %v2069
        %2071 = vmatmul.f32.gmra.mxu0 %v1736
        %v2072 = vpop.f32.mrf.mxu0
        %v2073 = vadd.f32 %v2050, %v2072
        %2074 = vdwg.mxu0
        %2075 = vmatpush.msra.mxu0 %v1638
        %2076 = vmatpush.msra.mxu0 %v1636
        %2077 = vmatpush.msra.mxu0 %v1634
        %2078 = vmatpush.msra.mxu0 %v1632
        %2079 = vmatpush.msra.mxu0 %v1630
        %2080 = vmatpush.msra.mxu0 %v1628
        %2081 = vmatpush.msra.mxu0 %v1626
        %2082 = vmatpush.msra.mxu0 %v1624
        %2083 = vmatpush.msra.mxu0 %v1622
        %2084 = vmatpush.msra.mxu0 %v1620
        %2085 = vmatpush.msra.mxu0 %v1618
        %2086 = vmatpush.msra.mxu0 %v1616
        %2087 = vmatpush.msra.mxu0 %v1614
        %2088 = vmatpush.msra.mxu0 %v1612
        %2089 = vmatpush.msra.mxu0 %v1610
        %2090 = vmatpush.msra.mxu0 %v1608
        %2091 = vmatmul.f32.gmra.mxu0 %v1518
        %v2092 = vpop.f32.mrf.mxu0
        %v2093 = vadd.f32 %v2024, %v2092
        %2094 = vmatmul.f32.gmra.mxu0 %v1521
        %v2095 = vpop.f32.mrf.mxu0
        %v2096 = vadd.f32 %v2027, %v2095
        %2097 = vdwg.mxu0
        %2098 = vmatpush.msra.mxu0 0.0
        %2099 = vmatpush.msra.mxu0 0.0
        %2100 = vmatpush.msra.mxu0 0.0
        %2101 = vmatpush.msra.mxu0 0.0
        %2102 = vmatpush.msra.mxu0 %v1662
        %2103 = vmatpush.msra.mxu0 %v1660
        %2104 = vmatpush.msra.mxu0 %v1658
        %2105 = vmatpush.msra.mxu0 %v1656
        %2106 = vmatpush.msra.mxu0 %v1654
        %2107 = vmatpush.msra.mxu0 %v1652
        %2108 = vmatpush.msra.mxu0 %v1650
        %2109 = vmatpush.msra.mxu0 %v1648
        %2110 = vmatpush.msra.mxu0 %v1646
        %2111 = vmatpush.msra.mxu0 %v1644
        %2112 = vmatpush.msra.mxu0 %v1642
        %2113 = vmatpush.msra.mxu0 %v1640
        %2114 = vmatmul.f32.gmra.mxu0 %v1830
        %v2115 = vpop.f32.mrf.mxu0
        %v2116 = vadd.f32 %v2093, %v2115
        %2117 = vmatmul.f32.gmra.mxu0 %v1832
        %v2118 = vpop.f32.mrf.mxu0
        %v2119 = vadd.f32 %v2096, %v2118
        %2120 = vdwg.mxu0
        %2121 = vmatpush.msra.mxu0 %v1639
        %2122 = vmatpush.msra.mxu0 %v1637
        %2123 = vmatpush.msra.mxu0 %v1635
        %2124 = vmatpush.msra.mxu0 %v1633
        %2125 = vmatpush.msra.mxu0 %v1631
        %2126 = vmatpush.msra.mxu0 %v1629
        %2127 = vmatpush.msra.mxu0 %v1627
        %2128 = vmatpush.msra.mxu0 %v1625
        %2129 = vmatpush.msra.mxu0 %v1623
        %2130 = vmatpush.msra.mxu0 %v1621
        %2131 = vmatpush.msra.mxu0 %v1619
        %2132 = vmatpush.msra.mxu0 %v1617
        %2133 = vmatpush.msra.mxu0 %v1615
        %2134 = vmatpush.msra.mxu0 %v1613
        %2135 = vmatpush.msra.mxu0 %v1611
        %2136 = vmatpush.msra.mxu0 %v1609
        %2137 = vmatmul.f32.gmra.mxu0 %v1518
        %v2138 = vpop.f32.mrf.mxu0
        %v2139 = vadd.f32 %v2070, %v2138
        %2140 = vmatmul.f32.gmra.mxu0 %v1521
        %v2141 = vpop.f32.mrf.mxu0
        %v2142 = vadd.f32 %v2073, %v2141
        %2143 = vdwg.mxu0
        %2144 = vmatpush.msra.mxu0 0.0
        %2145 = vmatpush.msra.mxu0 0.0
        %2146 = vmatpush.msra.mxu0 0.0
        %2147 = vmatpush.msra.mxu0 0.0
        %2148 = vmatpush.msra.mxu0 %v1663
        %2149 = vmatpush.msra.mxu0 %v1661
        %2150 = vmatpush.msra.mxu0 %v1659
        %2151 = vmatpush.msra.mxu0 %v1657
        %2152 = vmatpush.msra.mxu0 %v1655
        %2153 = vmatpush.msra.mxu0 %v1653
        %2154 = vmatpush.msra.mxu0 %v1651
        %2155 = vmatpush.msra.mxu0 %v1649
        %2156 = vmatpush.msra.mxu0 %v1647
        %2157 = vmatpush.msra.mxu0 %v1645
        %2158 = vmatpush.msra.mxu0 %v1643
        %2159 = vmatpush.msra.mxu0 %v1641
        %2160 = vmatmul.f32.gmra.mxu0 %v1830
        %v2161 = vpop.f32.mrf.mxu0
        %v2162 = vadd.f32 %v2139, %v2161
        %2163 = vmatmul.f32.gmra.mxu0 %v1832
        %v2164 = vpop.f32.mrf.mxu0
        %v2165 = vadd.f32 %v2142, %v2164
        %2166 = vdwg.mxu0
        %s2167 = scalar_lea.vmem [#allocation10], 896
        %v2168 = vld [vmem:[%s2167] sm:$0xff]
        %v2169 = vld [vmem:[%s2167 + $0x8] sm:$0xff]
        %v2170 = vld [vmem:[%s2167 + $0x10] sm:$0xff]
        %v2171 = vld [vmem:[%s2167 + $0x18] sm:$0xff]
        %v2172 = vld [vmem:[%s2167 + $0x20] sm:$0xff]
        %v2173 = vld [vmem:[%s2167 + $0x28] sm:$0xff]
        %v2174 = vld [vmem:[%s2167 + $0x30] sm:$0xff]
        %v2175 = vld [vmem:[%s2167 + $0x38] sm:$0xff]
        %v2176 = vld [vmem:[%s2167 + $0x40] sm:$0xff]
        %v2177 = vld [vmem:[%s2167 + $0x48] sm:$0xff]
        %v2178 = vld [vmem:[%s2167 + $0x50] sm:$0xff]
        %v2179 = vld [vmem:[%s2167 + $0x58] sm:$0xff]
        %v2180 = vld [vmem:[%s2167 + $0x60] sm:$0xff]
        %v2181 = vld [vmem:[%s2167 + $0x68] sm:$0xff]
        %v2182 = vld [vmem:[%s2167 + $0x70] sm:$0xff]
        %v2183 = vld [vmem:[%s2167 + $0x78] sm:$0xff]
        %v2184 = vld [vmem:[%s2167 + $0x80] sm:$0xff]
        %v2185 = vld [vmem:[%s2167 + $0x88] sm:$0xff]
        %v2186 = vld [vmem:[%s2167 + $0x90] sm:$0xff]
        %v2187 = vld [vmem:[%s2167 + $0x98] sm:$0xff]
        %v2188 = vld [vmem:[%s2167 + $0xa0] sm:$0xff]
        %v2189 = vld [vmem:[%s2167 + $0xa8] sm:$0xff]
        %v2190 = vld [vmem:[%s2167 + $0xb0] sm:$0xff]
        %v2191 = vld [vmem:[%s2167 + $0xb8] sm:$0xff]
        %v2192 = vld [vmem:[%s2167 + $0xc0] sm:$0xff]
        %v2193 = vld [vmem:[%s2167 + $0xc8] sm:$0xff]
        %v2194 = vld [vmem:[%s2167 + $0xd0] sm:$0xff]
        %v2195 = vld [vmem:[%s2167 + $0xd8] sm:$0xff]
        %v2196 = vld [vmem:[%s2167 + $0xe0] sm:$0xff]
        %v2197 = vld [vmem:[%s2167 + $0xe8] sm:$0xff]
        %v2198 = vld [vmem:[%s2167 + $0xf0] sm:$0xff]
        %v2199 = vld [vmem:[%s2167 + $0xf8] sm:$0xff]
        %v2200 = vld [vmem:[%s2167 + $0x100] sm:$0xff]
        %v2201 = vld [vmem:[%s2167 + $0x108] sm:$0xff]
        %v2202 = vld [vmem:[%s2167 + $0x110] sm:$0xff]
        %v2203 = vld [vmem:[%s2167 + $0x118] sm:$0xff]
        %v2204 = vld [vmem:[%s2167 + $0x120] sm:$0xff]
        %v2205 = vld [vmem:[%s2167 + $0x128] sm:$0xff]
        %v2206 = vld [vmem:[%s2167 + $0x130] sm:$0xff]
        %v2207 = vld [vmem:[%s2167 + $0x138] sm:$0xff]
        %v2208 = vld [vmem:[%s2167 + $0x140] sm:$0xff]
        %v2209 = vld [vmem:[%s2167 + $0x148] sm:$0xff]
        %v2210 = vld [vmem:[%s2167 + $0x150] sm:$0xff]
        %v2211 = vld [vmem:[%s2167 + $0x158] sm:$0xff]
        %v2212 = vld [vmem:[%s2167 + $0x160] sm:$0xff]
        %v2213 = vld [vmem:[%s2167 + $0x168] sm:$0xff]
        %v2214 = vld [vmem:[%s2167 + $0x170] sm:$0xff]
        %v2215 = vld [vmem:[%s2167 + $0x178] sm:$0xff]
        %v2216 = vld [vmem:[%s2167 + $0x180] sm:$0xff]
        %v2217 = vld [vmem:[%s2167 + $0x188] sm:$0xff]
        %v2218 = vld [vmem:[%s2167 + $0x190] sm:$0xff]
        %v2219 = vld [vmem:[%s2167 + $0x198] sm:$0xff]
        %v2220 = vld [vmem:[%s2167 + $0x1a0] sm:$0xff]
        %v2221 = vld [vmem:[%s2167 + $0x1a8] sm:$0xff]
        %v2222 = vld [vmem:[%s2167 + $0x1b0] sm:$0xff]
        %v2223 = vld [vmem:[%s2167 + $0x1b8] sm:$0xff]
        %v2224 = vrot.slane %v1518, 2
        %v2225 = vrot.slane %v1521, 2
        %v2226 = vsel %vm890, %v2224, %v2225
        %v2227 = vrot.slane %v1544, 2
        %v2228 = vrot.slane %v1547, 2
        %v2229 = vsel %vm890, %v2227, %v2228
        %v2232 = vsel %vm1733, %v2229, 0
        %v2234 = vsel %vm1733, %v2228, 0
        %2236 = vmatpush.msra.mxu0 %v2198
        %2237 = vmatpush.msra.mxu0 %v2196
        %2238 = vmatpush.msra.mxu0 %v2194
        %2239 = vmatpush.msra.mxu0 %v2192
        %2240 = vmatpush.msra.mxu0 %v2190
        %2241 = vmatpush.msra.mxu0 %v2188
        %2242 = vmatpush.msra.mxu0 %v2186
        %2243 = vmatpush.msra.mxu0 %v2184
        %2244 = vmatpush.msra.mxu0 %v2182
        %2245 = vmatpush.msra.mxu0 %v2180
        %2246 = vmatpush.msra.mxu0 %v2178
        %2247 = vmatpush.msra.mxu0 %v2176
        %2248 = vmatpush.msra.mxu0 %v2174
        %2249 = vmatpush.msra.mxu0 %v2172
        %2250 = vmatpush.msra.mxu0 %v2170
        %2251 = vmatpush.msra.mxu0 %v2168
        %2252 = vmatmul.f32.gmra.mxu0 %v2226
        %v2253 = vpop.f32.mrf.mxu0
        %v2254 = vadd.f32 0.0, %v2253
        %2255 = vmatmul.f32.gmra.mxu0 %v2225
        %v2256 = vpop.f32.mrf.mxu0
        %v2257 = vadd.f32 0.0, %v2256
        %2258 = vdwg.mxu0
        %2259 = vmatpush.msra.mxu0 0.0
        %2260 = vmatpush.msra.mxu0 0.0
        %2261 = vmatpush.msra.mxu0 0.0
        %2262 = vmatpush.msra.mxu0 0.0
        %2263 = vmatpush.msra.mxu0 %v2222
        %2264 = vmatpush.msra.mxu0 %v2220
        %2265 = vmatpush.msra.mxu0 %v2218
        %2266 = vmatpush.msra.mxu0 %v2216
        %2267 = vmatpush.msra.mxu0 %v2214
        %2268 = vmatpush.msra.mxu0 %v2212
        %2269 = vmatpush.msra.mxu0 %v2210
        %2270 = vmatpush.msra.mxu0 %v2208
        %2271 = vmatpush.msra.mxu0 %v2206
        %2272 = vmatpush.msra.mxu0 %v2204
        %2273 = vmatpush.msra.mxu0 %v2202
        %2274 = vmatpush.msra.mxu0 %v2200
        %2275 = vmatmul.f32.gmra.mxu0 %v2232
        %v2276 = vpop.f32.mrf.mxu0
        %v2277 = vadd.f32 %v2254, %v2276
        %2278 = vmatmul.f32.gmra.mxu0 %v2234
        %v2279 = vpop.f32.mrf.mxu0
        %v2280 = vadd.f32 %v2257, %v2279
        %2281 = vdwg.mxu0
        %2282 = vmatpush.msra.mxu0 %v2199
        %2283 = vmatpush.msra.mxu0 %v2197
        %2284 = vmatpush.msra.mxu0 %v2195
        %2285 = vmatpush.msra.mxu0 %v2193
        %2286 = vmatpush.msra.mxu0 %v2191
        %2287 = vmatpush.msra.mxu0 %v2189
        %2288 = vmatpush.msra.mxu0 %v2187
        %2289 = vmatpush.msra.mxu0 %v2185
        %2290 = vmatpush.msra.mxu0 %v2183
        %2291 = vmatpush.msra.mxu0 %v2181
        %2292 = vmatpush.msra.mxu0 %v2179
        %2293 = vmatpush.msra.mxu0 %v2177
        %2294 = vmatpush.msra.mxu0 %v2175
        %2295 = vmatpush.msra.mxu0 %v2173
        %2296 = vmatpush.msra.mxu0 %v2171
        %2297 = vmatpush.msra.mxu0 %v2169
        %2298 = vmatmul.f32.gmra.mxu0 %v2226
        %v2299 = vpop.f32.mrf.mxu0
        %v2300 = vadd.f32 0.0, %v2299
        %2301 = vmatmul.f32.gmra.mxu0 %v2225
        %v2302 = vpop.f32.mrf.mxu0
        %v2303 = vadd.f32 0.0, %v2302
        %2304 = vdwg.mxu0
        %2305 = vmatpush.msra.mxu0 0.0
        %2306 = vmatpush.msra.mxu0 0.0
        %2307 = vmatpush.msra.mxu0 0.0
        %2308 = vmatpush.msra.mxu0 0.0
        %2309 = vmatpush.msra.mxu0 %v2223
        %2310 = vmatpush.msra.mxu0 %v2221
        %2311 = vmatpush.msra.mxu0 %v2219
        %2312 = vmatpush.msra.mxu0 %v2217
        %2313 = vmatpush.msra.mxu0 %v2215
        %2314 = vmatpush.msra.mxu0 %v2213
        %2315 = vmatpush.msra.mxu0 %v2211
        %2316 = vmatpush.msra.mxu0 %v2209
        %2317 = vmatpush.msra.mxu0 %v2207
        %2318 = vmatpush.msra.mxu0 %v2205
        %2319 = vmatpush.msra.mxu0 %v2203
        %2320 = vmatpush.msra.mxu0 %v2201
        %2321 = vmatmul.f32.gmra.mxu0 %v2232
        %v2322 = vpop.f32.mrf.mxu0
        %v2323 = vadd.f32 %v2300, %v2322
        %2324 = vmatmul.f32.gmra.mxu0 %v2234
        %v2325 = vpop.f32.mrf.mxu0
        %v2326 = vadd.f32 %v2303, %v2325
        %2327 = vdwg.mxu0
        %v2328 = vadd.f32 %v1875, %v2277
        %v2329 = vadd.f32 %v1921, %v2323
        %v2330 = vadd.f32 %v1878, %v2280
        %v2331 = vadd.f32 %v1924, %v2326
        %s2332 = scalar_lea.vmem [#allocation11], 896
        %v2333 = vld [vmem:[%s2332] sm:$0xff]
        %v2334 = vld [vmem:[%s2332 + $0x8] sm:$0xff]
        %v2335 = vld [vmem:[%s2332 + $0x10] sm:$0xff]
        %v2336 = vld [vmem:[%s2332 + $0x18] sm:$0xff]
        %v2337 = vld [vmem:[%s2332 + $0x20] sm:$0xff]
        %v2338 = vld [vmem:[%s2332 + $0x28] sm:$0xff]
        %v2339 = vld [vmem:[%s2332 + $0x30] sm:$0xff]
        %v2340 = vld [vmem:[%s2332 + $0x38] sm:$0xff]
        %v2341 = vld [vmem:[%s2332 + $0x40] sm:$0xff]
        %v2342 = vld [vmem:[%s2332 + $0x48] sm:$0xff]
        %v2343 = vld [vmem:[%s2332 + $0x50] sm:$0xff]
        %v2344 = vld [vmem:[%s2332 + $0x58] sm:$0xff]
        %v2345 = vld [vmem:[%s2332 + $0x60] sm:$0xff]
        %v2346 = vld [vmem:[%s2332 + $0x68] sm:$0xff]
        %v2347 = vld [vmem:[%s2332 + $0x70] sm:$0xff]
        %v2348 = vld [vmem:[%s2332 + $0x78] sm:$0xff]
        %v2349 = vld [vmem:[%s2332 + $0x80] sm:$0xff]
        %v2350 = vld [vmem:[%s2332 + $0x88] sm:$0xff]
        %v2351 = vld [vmem:[%s2332 + $0x90] sm:$0xff]
        %v2352 = vld [vmem:[%s2332 + $0x98] sm:$0xff]
        %v2353 = vld [vmem:[%s2332 + $0xa0] sm:$0xff]
        %v2354 = vld [vmem:[%s2332 + $0xa8] sm:$0xff]
        %v2355 = vld [vmem:[%s2332 + $0xb0] sm:$0xff]
        %v2356 = vld [vmem:[%s2332 + $0xb8] sm:$0xff]
        %v2357 = vld [vmem:[%s2332 + $0xc0] sm:$0xff]
        %v2358 = vld [vmem:[%s2332 + $0xc8] sm:$0xff]
        %v2359 = vld [vmem:[%s2332 + $0xd0] sm:$0xff]
        %v2360 = vld [vmem:[%s2332 + $0xd8] sm:$0xff]
        %v2361 = vld [vmem:[%s2332 + $0xe0] sm:$0xff]
        %v2362 = vld [vmem:[%s2332 + $0xe8] sm:$0xff]
        %v2363 = vld [vmem:[%s2332 + $0xf0] sm:$0xff]
        %v2364 = vld [vmem:[%s2332 + $0xf8] sm:$0xff]
        %v2365 = vld [vmem:[%s2332 + $0x100] sm:$0xff]
        %v2366 = vld [vmem:[%s2332 + $0x108] sm:$0xff]
        %v2367 = vld [vmem:[%s2332 + $0x110] sm:$0xff]
        %v2368 = vld [vmem:[%s2332 + $0x118] sm:$0xff]
        %v2369 = vld [vmem:[%s2332 + $0x120] sm:$0xff]
        %v2370 = vld [vmem:[%s2332 + $0x128] sm:$0xff]
        %v2371 = vld [vmem:[%s2332 + $0x130] sm:$0xff]
        %v2372 = vld [vmem:[%s2332 + $0x138] sm:$0xff]
        %v2373 = vld [vmem:[%s2332 + $0x140] sm:$0xff]
        %v2374 = vld [vmem:[%s2332 + $0x148] sm:$0xff]
        %v2375 = vld [vmem:[%s2332 + $0x150] sm:$0xff]
        %v2376 = vld [vmem:[%s2332 + $0x158] sm:$0xff]
        %v2377 = vld [vmem:[%s2332 + $0x160] sm:$0xff]
        %v2378 = vld [vmem:[%s2332 + $0x168] sm:$0xff]
        %v2379 = vld [vmem:[%s2332 + $0x170] sm:$0xff]
        %v2380 = vld [vmem:[%s2332 + $0x178] sm:$0xff]
        %v2381 = vld [vmem:[%s2332 + $0x180] sm:$0xff]
        %v2382 = vld [vmem:[%s2332 + $0x188] sm:$0xff]
        %v2383 = vld [vmem:[%s2332 + $0x190] sm:$0xff]
        %v2384 = vld [vmem:[%s2332 + $0x198] sm:$0xff]
        %v2385 = vld [vmem:[%s2332 + $0x1a0] sm:$0xff]
        %v2386 = vld [vmem:[%s2332 + $0x1a8] sm:$0xff]
        %v2387 = vld [vmem:[%s2332 + $0x1b0] sm:$0xff]
        %v2388 = vld [vmem:[%s2332 + $0x1b8] sm:$0xff]
        %2389 = vmatpush.msra.mxu0 %v2363
        %2390 = vmatpush.msra.mxu0 %v2361
        %2391 = vmatpush.msra.mxu0 %v2359
        %2392 = vmatpush.msra.mxu0 %v2357
        %2393 = vmatpush.msra.mxu0 %v2355
        %2394 = vmatpush.msra.mxu0 %v2353
        %2395 = vmatpush.msra.mxu0 %v2351
        %2396 = vmatpush.msra.mxu0 %v2349
        %2397 = vmatpush.msra.mxu0 %v2347
        %2398 = vmatpush.msra.mxu0 %v2345
        %2399 = vmatpush.msra.mxu0 %v2343
        %2400 = vmatpush.msra.mxu0 %v2341
        %2401 = vmatpush.msra.mxu0 %v2339
        %2402 = vmatpush.msra.mxu0 %v2337
        %2403 = vmatpush.msra.mxu0 %v2335
        %2404 = vmatpush.msra.mxu0 %v2333
        %2405 = vmatmul.f32.gmra.mxu0 %v2226
        %v2406 = vpop.f32.mrf.mxu0
        %v2407 = vadd.f32 0.0, %v2406
        %2408 = vmatmul.f32.gmra.mxu0 %v2225
        %v2409 = vpop.f32.mrf.mxu0
        %v2410 = vadd.f32 0.0, %v2409
        %2411 = vdwg.mxu0
        %2412 = vmatpush.msra.mxu0 0.0
        %2413 = vmatpush.msra.mxu0 0.0
        %2414 = vmatpush.msra.mxu0 0.0
        %2415 = vmatpush.msra.mxu0 0.0
        %2416 = vmatpush.msra.mxu0 %v2387
        %2417 = vmatpush.msra.mxu0 %v2385
        %2418 = vmatpush.msra.mxu0 %v2383
        %2419 = vmatpush.msra.mxu0 %v2381
        %2420 = vmatpush.msra.mxu0 %v2379
        %2421 = vmatpush.msra.mxu0 %v2377
        %2422 = vmatpush.msra.mxu0 %v2375
        %2423 = vmatpush.msra.mxu0 %v2373
        %2424 = vmatpush.msra.mxu0 %v2371
        %2425 = vmatpush.msra.mxu0 %v2369
        %2426 = vmatpush.msra.mxu0 %v2367
        %2427 = vmatpush.msra.mxu0 %v2365
        %2428 = vmatmul.f32.gmra.mxu0 %v2232
        %v2429 = vpop.f32.mrf.mxu0
        %v2430 = vadd.f32 %v2407, %v2429
        %2431 = vmatmul.f32.gmra.mxu0 %v2234
        %v2432 = vpop.f32.mrf.mxu0
        %v2433 = vadd.f32 %v2410, %v2432
        %2434 = vdwg.mxu0
        %2435 = vmatpush.msra.mxu0 %v2364
        %2436 = vmatpush.msra.mxu0 %v2362
        %2437 = vmatpush.msra.mxu0 %v2360
        %2438 = vmatpush.msra.mxu0 %v2358
        %2439 = vmatpush.msra.mxu0 %v2356
        %2440 = vmatpush.msra.mxu0 %v2354
        %2441 = vmatpush.msra.mxu0 %v2352
        %2442 = vmatpush.msra.mxu0 %v2350
        %2443 = vmatpush.msra.mxu0 %v2348
        %2444 = vmatpush.msra.mxu0 %v2346
        %2445 = vmatpush.msra.mxu0 %v2344
        %2446 = vmatpush.msra.mxu0 %v2342
        %2447 = vmatpush.msra.mxu0 %v2340
        %2448 = vmatpush.msra.mxu0 %v2338
        %2449 = vmatpush.msra.mxu0 %v2336
        %2450 = vmatpush.msra.mxu0 %v2334
        %2451 = vmatmul.f32.gmra.mxu0 %v2226
        %v2452 = vpop.f32.mrf.mxu0
        %v2453 = vadd.f32 0.0, %v2452
        %2454 = vmatmul.f32.gmra.mxu0 %v2225
        %v2455 = vpop.f32.mrf.mxu0
        %v2456 = vadd.f32 0.0, %v2455
        %2457 = vdwg.mxu0
        %2458 = vmatpush.msra.mxu0 0.0
        %2459 = vmatpush.msra.mxu0 0.0
        %2460 = vmatpush.msra.mxu0 0.0
        %2461 = vmatpush.msra.mxu0 0.0
        %2462 = vmatpush.msra.mxu0 %v2388
        %2463 = vmatpush.msra.mxu0 %v2386
        %2464 = vmatpush.msra.mxu0 %v2384
        %2465 = vmatpush.msra.mxu0 %v2382
        %2466 = vmatpush.msra.mxu0 %v2380
        %2467 = vmatpush.msra.mxu0 %v2378
        %2468 = vmatpush.msra.mxu0 %v2376
        %2469 = vmatpush.msra.mxu0 %v2374
        %2470 = vmatpush.msra.mxu0 %v2372
        %2471 = vmatpush.msra.mxu0 %v2370
        %2472 = vmatpush.msra.mxu0 %v2368
        %2473 = vmatpush.msra.mxu0 %v2366
        %2474 = vmatmul.f32.gmra.mxu0 %v2232
        %v2475 = vpop.f32.mrf.mxu0
        %v2476 = vadd.f32 %v2453, %v2475
        %2477 = vmatmul.f32.gmra.mxu0 %v2234
        %v2478 = vpop.f32.mrf.mxu0
        %v2479 = vadd.f32 %v2456, %v2478
        %2480 = vdwg.mxu0
        %v2481 = vadd.f32 %v2116, %v2430
        %v2482 = vadd.f32 %v2162, %v2476
        %v2483 = vadd.f32 %v2119, %v2433
        %v2484 = vadd.f32 %v2165, %v2479
        %s2485 = scalar_lea.vmem [#allocation10], 1344
        %v2486 = vld [vmem:[%s2485] sm:$0xff]
        %v2487 = vld [vmem:[%s2485 + $0x8] sm:$0xff]
        %v2488 = vld [vmem:[%s2485 + $0x10] sm:$0xff]
        %v2489 = vld [vmem:[%s2485 + $0x18] sm:$0xff]
        %v2490 = vld [vmem:[%s2485 + $0x20] sm:$0xff]
        %v2491 = vld [vmem:[%s2485 + $0x28] sm:$0xff]
        %v2492 = vld [vmem:[%s2485 + $0x30] sm:$0xff]
        %v2493 = vld [vmem:[%s2485 + $0x38] sm:$0xff]
        %v2494 = vld [vmem:[%s2485 + $0x40] sm:$0xff]
        %v2495 = vld [vmem:[%s2485 + $0x48] sm:$0xff]
        %v2496 = vld [vmem:[%s2485 + $0x50] sm:$0xff]
        %v2497 = vld [vmem:[%s2485 + $0x58] sm:$0xff]
        %v2498 = vld [vmem:[%s2485 + $0x60] sm:$0xff]
        %v2499 = vld [vmem:[%s2485 + $0x68] sm:$0xff]
        %v2500 = vld [vmem:[%s2485 + $0x70] sm:$0xff]
        %v2501 = vld [vmem:[%s2485 + $0x78] sm:$0xff]
        %v2502 = vld [vmem:[%s2485 + $0x80] sm:$0xff]
        %v2503 = vld [vmem:[%s2485 + $0x88] sm:$0xff]
        %v2504 = vld [vmem:[%s2485 + $0x90] sm:$0xff]
        %v2505 = vld [vmem:[%s2485 + $0x98] sm:$0xff]
        %v2506 = vld [vmem:[%s2485 + $0xa0] sm:$0xff]
        %v2507 = vld [vmem:[%s2485 + $0xa8] sm:$0xff]
        %v2508 = vld [vmem:[%s2485 + $0xb0] sm:$0xff]
        %v2509 = vld [vmem:[%s2485 + $0xb8] sm:$0xff]
        %v2510 = vld [vmem:[%s2485 + $0xc0] sm:$0xff]
        %v2511 = vld [vmem:[%s2485 + $0xc8] sm:$0xff]
        %v2512 = vld [vmem:[%s2485 + $0xd0] sm:$0xff]
        %v2513 = vld [vmem:[%s2485 + $0xd8] sm:$0xff]
        %v2514 = vld [vmem:[%s2485 + $0xe0] sm:$0xff]
        %v2515 = vld [vmem:[%s2485 + $0xe8] sm:$0xff]
        %v2516 = vld [vmem:[%s2485 + $0xf0] sm:$0xff]
        %v2517 = vld [vmem:[%s2485 + $0xf8] sm:$0xff]
        %v2518 = vld [vmem:[%s2485 + $0x100] sm:$0xff]
        %v2519 = vld [vmem:[%s2485 + $0x108] sm:$0xff]
        %v2520 = vld [vmem:[%s2485 + $0x110] sm:$0xff]
        %v2521 = vld [vmem:[%s2485 + $0x118] sm:$0xff]
        %v2522 = vld [vmem:[%s2485 + $0x120] sm:$0xff]
        %v2523 = vld [vmem:[%s2485 + $0x128] sm:$0xff]
        %v2524 = vld [vmem:[%s2485 + $0x130] sm:$0xff]
        %v2525 = vld [vmem:[%s2485 + $0x138] sm:$0xff]
        %v2526 = vld [vmem:[%s2485 + $0x140] sm:$0xff]
        %v2527 = vld [vmem:[%s2485 + $0x148] sm:$0xff]
        %v2528 = vld [vmem:[%s2485 + $0x150] sm:$0xff]
        %v2529 = vld [vmem:[%s2485 + $0x158] sm:$0xff]
        %v2530 = vld [vmem:[%s2485 + $0x160] sm:$0xff]
        %v2531 = vld [vmem:[%s2485 + $0x168] sm:$0xff]
        %v2532 = vld [vmem:[%s2485 + $0x170] sm:$0xff]
        %v2533 = vld [vmem:[%s2485 + $0x178] sm:$0xff]
        %v2534 = vld [vmem:[%s2485 + $0x180] sm:$0xff]
        %v2535 = vld [vmem:[%s2485 + $0x188] sm:$0xff]
        %v2536 = vld [vmem:[%s2485 + $0x190] sm:$0xff]
        %v2537 = vld [vmem:[%s2485 + $0x198] sm:$0xff]
        %v2538 = vld [vmem:[%s2485 + $0x1a0] sm:$0xff]
        %v2539 = vld [vmem:[%s2485 + $0x1a8] sm:$0xff]
        %v2540 = vld [vmem:[%s2485 + $0x1b0] sm:$0xff]
        %v2541 = vld [vmem:[%s2485 + $0x1b8] sm:$0xff]
        %v2544 = vrot.slane %v1518, 3
        %v2545 = vrot.slane %v1521, 3
        %v2546 = vsel %vm1056, %v2544, %v2545
        %v2547 = vrot.slane %v1544, 3
        %v2548 = vrot.slane %v1547, 3
        %v2549 = vsel %vm1056, %v2547, %v2548
        %v2550 = vrot.slane %v1524, 3
        %v2551 = vsel %vm1056, %v2545, %v2550
        %v2552 = vrot.slane %v1550, 3
        %v2553 = vsel %vm1056, %v2548, %v2552
        %v2556 = vsel %vm1733, %v2549, 0
        %v2558 = vsel %vm1733, %v2553, 0
        %2560 = vmatpush.msra.mxu0 %v2516
        %2561 = vmatpush.msra.mxu0 %v2514
        %2562 = vmatpush.msra.mxu0 %v2512
        %2563 = vmatpush.msra.mxu0 %v2510
        %2564 = vmatpush.msra.mxu0 %v2508
        %2565 = vmatpush.msra.mxu0 %v2506
        %2566 = vmatpush.msra.mxu0 %v2504
        %2567 = vmatpush.msra.mxu0 %v2502
        %2568 = vmatpush.msra.mxu0 %v2500
        %2569 = vmatpush.msra.mxu0 %v2498
        %2570 = vmatpush.msra.mxu0 %v2496
        %2571 = vmatpush.msra.mxu0 %v2494
        %2572 = vmatpush.msra.mxu0 %v2492
        %2573 = vmatpush.msra.mxu0 %v2490
        %2574 = vmatpush.msra.mxu0 %v2488
        %2575 = vmatpush.msra.mxu0 %v2486
        %2576 = vmatmul.f32.gmra.mxu0 %v2546
        %v2577 = vpop.f32.mrf.mxu0
        %v2578 = vadd.f32 0.0, %v2577
        %2579 = vmatmul.f32.gmra.mxu0 %v2551
        %v2580 = vpop.f32.mrf.mxu0
        %v2581 = vadd.f32 0.0, %v2580
        %2582 = vdwg.mxu0
        %2583 = vmatpush.msra.mxu0 0.0
        %2584 = vmatpush.msra.mxu0 0.0
        %2585 = vmatpush.msra.mxu0 0.0
        %2586 = vmatpush.msra.mxu0 0.0
        %2587 = vmatpush.msra.mxu0 %v2540
        %2588 = vmatpush.msra.mxu0 %v2538
        %2589 = vmatpush.msra.mxu0 %v2536
        %2590 = vmatpush.msra.mxu0 %v2534
        %2591 = vmatpush.msra.mxu0 %v2532
        %2592 = vmatpush.msra.mxu0 %v2530
        %2593 = vmatpush.msra.mxu0 %v2528
        %2594 = vmatpush.msra.mxu0 %v2526
        %2595 = vmatpush.msra.mxu0 %v2524
        %2596 = vmatpush.msra.mxu0 %v2522
        %2597 = vmatpush.msra.mxu0 %v2520
        %2598 = vmatpush.msra.mxu0 %v2518
        %2599 = vmatmul.f32.gmra.mxu0 %v2556
        %v2600 = vpop.f32.mrf.mxu0
        %v2601 = vadd.f32 %v2578, %v2600
        %2602 = vmatmul.f32.gmra.mxu0 %v2558
        %v2603 = vpop.f32.mrf.mxu0
        %v2604 = vadd.f32 %v2581, %v2603
        %2605 = vdwg.mxu0
        %2606 = vmatpush.msra.mxu0 %v2517
        %2607 = vmatpush.msra.mxu0 %v2515
        %2608 = vmatpush.msra.mxu0 %v2513
        %2609 = vmatpush.msra.mxu0 %v2511
        %2610 = vmatpush.msra.mxu0 %v2509
        %2611 = vmatpush.msra.mxu0 %v2507
        %2612 = vmatpush.msra.mxu0 %v2505
        %2613 = vmatpush.msra.mxu0 %v2503
        %2614 = vmatpush.msra.mxu0 %v2501
        %2615 = vmatpush.msra.mxu0 %v2499
        %2616 = vmatpush.msra.mxu0 %v2497
        %2617 = vmatpush.msra.mxu0 %v2495
        %2618 = vmatpush.msra.mxu0 %v2493
        %2619 = vmatpush.msra.mxu0 %v2491
        %2620 = vmatpush.msra.mxu0 %v2489
        %2621 = vmatpush.msra.mxu0 %v2487
        %2622 = vmatmul.f32.gmra.mxu0 %v2546
        %v2623 = vpop.f32.mrf.mxu0
        %v2624 = vadd.f32 0.0, %v2623
        %2625 = vmatmul.f32.gmra.mxu0 %v2551
        %v2626 = vpop.f32.mrf.mxu0
        %v2627 = vadd.f32 0.0, %v2626
        %2628 = vdwg.mxu0
        %2629 = vmatpush.msra.mxu0 0.0
        %2630 = vmatpush.msra.mxu0 0.0
        %2631 = vmatpush.msra.mxu0 0.0
        %2632 = vmatpush.msra.mxu0 0.0
        %2633 = vmatpush.msra.mxu0 %v2541
        %2634 = vmatpush.msra.mxu0 %v2539
        %2635 = vmatpush.msra.mxu0 %v2537
        %2636 = vmatpush.msra.mxu0 %v2535
        %2637 = vmatpush.msra.mxu0 %v2533
        %2638 = vmatpush.msra.mxu0 %v2531
        %2639 = vmatpush.msra.mxu0 %v2529
        %2640 = vmatpush.msra.mxu0 %v2527
        %2641 = vmatpush.msra.mxu0 %v2525
        %2642 = vmatpush.msra.mxu0 %v2523
        %2643 = vmatpush.msra.mxu0 %v2521
        %2644 = vmatpush.msra.mxu0 %v2519
        %2645 = vmatmul.f32.gmra.mxu0 %v2556
        %v2646 = vpop.f32.mrf.mxu0
        %v2647 = vadd.f32 %v2624, %v2646
        %2648 = vmatmul.f32.gmra.mxu0 %v2558
        %v2649 = vpop.f32.mrf.mxu0
        %v2650 = vadd.f32 %v2627, %v2649
        %2651 = vdwg.mxu0
        %v2652 = vadd.f32 %v2328, %v2601
        %v2653 = vadd.f32 %v2329, %v2647
        %v2654 = vadd.f32 %v2330, %v2604
        %v2655 = vadd.f32 %v2331, %v2650
        %s2656 = scalar_lea.vmem [#allocation11], 1344
        %v2657 = vld [vmem:[%s2656] sm:$0xff]
        %v2658 = vld [vmem:[%s2656 + $0x8] sm:$0xff]
        %v2659 = vld [vmem:[%s2656 + $0x10] sm:$0xff]
        %v2660 = vld [vmem:[%s2656 + $0x18] sm:$0xff]
        %v2661 = vld [vmem:[%s2656 + $0x20] sm:$0xff]
        %v2662 = vld [vmem:[%s2656 + $0x28] sm:$0xff]
        %v2663 = vld [vmem:[%s2656 + $0x30] sm:$0xff]
        %v2664 = vld [vmem:[%s2656 + $0x38] sm:$0xff]
        %v2665 = vld [vmem:[%s2656 + $0x40] sm:$0xff]
        %v2666 = vld [vmem:[%s2656 + $0x48] sm:$0xff]
        %v2667 = vld [vmem:[%s2656 + $0x50] sm:$0xff]
        %v2668 = vld [vmem:[%s2656 + $0x58] sm:$0xff]
        %v2669 = vld [vmem:[%s2656 + $0x60] sm:$0xff]
        %v2670 = vld [vmem:[%s2656 + $0x68] sm:$0xff]
        %v2671 = vld [vmem:[%s2656 + $0x70] sm:$0xff]
        %v2672 = vld [vmem:[%s2656 + $0x78] sm:$0xff]
        %v2673 = vld [vmem:[%s2656 + $0x80] sm:$0xff]
        %v2674 = vld [vmem:[%s2656 + $0x88] sm:$0xff]
        %v2675 = vld [vmem:[%s2656 + $0x90] sm:$0xff]
        %v2676 = vld [vmem:[%s2656 + $0x98] sm:$0xff]
        %v2677 = vld [vmem:[%s2656 + $0xa0] sm:$0xff]
        %v2678 = vld [vmem:[%s2656 + $0xa8] sm:$0xff]
        %v2679 = vld [vmem:[%s2656 + $0xb0] sm:$0xff]
        %v2680 = vld [vmem:[%s2656 + $0xb8] sm:$0xff]
        %v2681 = vld [vmem:[%s2656 + $0xc0] sm:$0xff]
        %v2682 = vld [vmem:[%s2656 + $0xc8] sm:$0xff]
        %v2683 = vld [vmem:[%s2656 + $0xd0] sm:$0xff]
        %v2684 = vld [vmem:[%s2656 + $0xd8] sm:$0xff]
        %v2685 = vld [vmem:[%s2656 + $0xe0] sm:$0xff]
        %v2686 = vld [vmem:[%s2656 + $0xe8] sm:$0xff]
        %v2687 = vld [vmem:[%s2656 + $0xf0] sm:$0xff]
        %v2688 = vld [vmem:[%s2656 + $0xf8] sm:$0xff]
        %v2689 = vld [vmem:[%s2656 + $0x100] sm:$0xff]
        %v2690 = vld [vmem:[%s2656 + $0x108] sm:$0xff]
        %v2691 = vld [vmem:[%s2656 + $0x110] sm:$0xff]
        %v2692 = vld [vmem:[%s2656 + $0x118] sm:$0xff]
        %v2693 = vld [vmem:[%s2656 + $0x120] sm:$0xff]
        %v2694 = vld [vmem:[%s2656 + $0x128] sm:$0xff]
        %v2695 = vld [vmem:[%s2656 + $0x130] sm:$0xff]
        %v2696 = vld [vmem:[%s2656 + $0x138] sm:$0xff]
        %v2697 = vld [vmem:[%s2656 + $0x140] sm:$0xff]
        %v2698 = vld [vmem:[%s2656 + $0x148] sm:$0xff]
        %v2699 = vld [vmem:[%s2656 + $0x150] sm:$0xff]
        %v2700 = vld [vmem:[%s2656 + $0x158] sm:$0xff]
        %v2701 = vld [vmem:[%s2656 + $0x160] sm:$0xff]
        %v2702 = vld [vmem:[%s2656 + $0x168] sm:$0xff]
        %v2703 = vld [vmem:[%s2656 + $0x170] sm:$0xff]
        %v2704 = vld [vmem:[%s2656 + $0x178] sm:$0xff]
        %v2705 = vld [vmem:[%s2656 + $0x180] sm:$0xff]
        %v2706 = vld [vmem:[%s2656 + $0x188] sm:$0xff]
        %v2707 = vld [vmem:[%s2656 + $0x190] sm:$0xff]
        %v2708 = vld [vmem:[%s2656 + $0x198] sm:$0xff]
        %v2709 = vld [vmem:[%s2656 + $0x1a0] sm:$0xff]
        %v2710 = vld [vmem:[%s2656 + $0x1a8] sm:$0xff]
        %v2711 = vld [vmem:[%s2656 + $0x1b0] sm:$0xff]
        %v2712 = vld [vmem:[%s2656 + $0x1b8] sm:$0xff]
        %2713 = vmatpush.msra.mxu0 %v2687
        %2714 = vmatpush.msra.mxu0 %v2685
        %2715 = vmatpush.msra.mxu0 %v2683
        %2716 = vmatpush.msra.mxu0 %v2681
        %2717 = vmatpush.msra.mxu0 %v2679
        %2718 = vmatpush.msra.mxu0 %v2677
        %2719 = vmatpush.msra.mxu0 %v2675
        %2720 = vmatpush.msra.mxu0 %v2673
        %2721 = vmatpush.msra.mxu0 %v2671
        %2722 = vmatpush.msra.mxu0 %v2669
        %2723 = vmatpush.msra.mxu0 %v2667
        %2724 = vmatpush.msra.mxu0 %v2665
        %2725 = vmatpush.msra.mxu0 %v2663
        %2726 = vmatpush.msra.mxu0 %v2661
        %2727 = vmatpush.msra.mxu0 %v2659
        %2728 = vmatpush.msra.mxu0 %v2657
        %2729 = vmatmul.f32.gmra.mxu0 %v2546
        %v2730 = vpop.f32.mrf.mxu0
        %v2731 = vadd.f32 0.0, %v2730
        %2732 = vmatmul.f32.gmra.mxu0 %v2551
        %v2733 = vpop.f32.mrf.mxu0
        %v2734 = vadd.f32 0.0, %v2733
        %2735 = vdwg.mxu0
        %2736 = vmatpush.msra.mxu0 0.0
        %2737 = vmatpush.msra.mxu0 0.0
        %2738 = vmatpush.msra.mxu0 0.0
        %2739 = vmatpush.msra.mxu0 0.0
        %2740 = vmatpush.msra.mxu0 %v2711
        %2741 = vmatpush.msra.mxu0 %v2709
        %2742 = vmatpush.msra.mxu0 %v2707
        %2743 = vmatpush.msra.mxu0 %v2705
        %2744 = vmatpush.msra.mxu0 %v2703
        %2745 = vmatpush.msra.mxu0 %v2701
        %2746 = vmatpush.msra.mxu0 %v2699
        %2747 = vmatpush.msra.mxu0 %v2697
        %2748 = vmatpush.msra.mxu0 %v2695
        %2749 = vmatpush.msra.mxu0 %v2693
        %2750 = vmatpush.msra.mxu0 %v2691
        %2751 = vmatpush.msra.mxu0 %v2689
        %2752 = vmatmul.f32.gmra.mxu0 %v2556
        %v2753 = vpop.f32.mrf.mxu0
        %v2754 = vadd.f32 %v2731, %v2753
        %2755 = vmatmul.f32.gmra.mxu0 %v2558
        %v2756 = vpop.f32.mrf.mxu0
        %v2757 = vadd.f32 %v2734, %v2756
        %2758 = vdwg.mxu0
        %2759 = vmatpush.msra.mxu0 %v2688
        %2760 = vmatpush.msra.mxu0 %v2686
        %2761 = vmatpush.msra.mxu0 %v2684
        %2762 = vmatpush.msra.mxu0 %v2682
        %2763 = vmatpush.msra.mxu0 %v2680
        %2764 = vmatpush.msra.mxu0 %v2678
        %2765 = vmatpush.msra.mxu0 %v2676
        %2766 = vmatpush.msra.mxu0 %v2674
        %2767 = vmatpush.msra.mxu0 %v2672
        %2768 = vmatpush.msra.mxu0 %v2670
        %2769 = vmatpush.msra.mxu0 %v2668
        %2770 = vmatpush.msra.mxu0 %v2666
        %2771 = vmatpush.msra.mxu0 %v2664
        %2772 = vmatpush.msra.mxu0 %v2662
        %2773 = vmatpush.msra.mxu0 %v2660
        %2774 = vmatpush.msra.mxu0 %v2658
        %2775 = vmatmul.f32.gmra.mxu0 %v2546
        %v2776 = vpop.f32.mrf.mxu0
        %v2777 = vadd.f32 0.0, %v2776
        %2778 = vmatmul.f32.gmra.mxu0 %v2551
        %v2779 = vpop.f32.mrf.mxu0
        %v2780 = vadd.f32 0.0, %v2779
        %2781 = vdwg.mxu0
        %2782 = vmatpush.msra.mxu0 0.0
        %2783 = vmatpush.msra.mxu0 0.0
        %2784 = vmatpush.msra.mxu0 0.0
        %2785 = vmatpush.msra.mxu0 0.0
        %2786 = vmatpush.msra.mxu0 %v2712
        %2787 = vmatpush.msra.mxu0 %v2710
        %2788 = vmatpush.msra.mxu0 %v2708
        %2789 = vmatpush.msra.mxu0 %v2706
        %2790 = vmatpush.msra.mxu0 %v2704
        %2791 = vmatpush.msra.mxu0 %v2702
        %2792 = vmatpush.msra.mxu0 %v2700
        %2793 = vmatpush.msra.mxu0 %v2698
        %2794 = vmatpush.msra.mxu0 %v2696
        %2795 = vmatpush.msra.mxu0 %v2694
        %2796 = vmatpush.msra.mxu0 %v2692
        %2797 = vmatpush.msra.mxu0 %v2690
        %2798 = vmatmul.f32.gmra.mxu0 %v2556
        %v2799 = vpop.f32.mrf.mxu0
        %v2800 = vadd.f32 %v2777, %v2799
        %2801 = vmatmul.f32.gmra.mxu0 %v2558
        %v2802 = vpop.f32.mrf.mxu0
        %v2803 = vadd.f32 %v2780, %v2802
        %2804 = vdwg.mxu0
        %v2805 = vadd.f32 %v2481, %v2754
        %v2806 = vadd.f32 %v2482, %v2800
        %v2807 = vadd.f32 %v2483, %v2757
        %v2808 = vadd.f32 %v2484, %v2803
        %s2809 = scalar_lea.vmem [#allocation10], 1792
        %v2810 = vld [vmem:[%s2809] sm:$0xff]
        %v2811 = vld [vmem:[%s2809 + $0x8] sm:$0xff]
        %v2812 = vld [vmem:[%s2809 + $0x10] sm:$0xff]
        %v2813 = vld [vmem:[%s2809 + $0x18] sm:$0xff]
        %v2814 = vld [vmem:[%s2809 + $0x20] sm:$0xff]
        %v2815 = vld [vmem:[%s2809 + $0x28] sm:$0xff]
        %v2816 = vld [vmem:[%s2809 + $0x30] sm:$0xff]
        %v2817 = vld [vmem:[%s2809 + $0x38] sm:$0xff]
        %v2818 = vld [vmem:[%s2809 + $0x40] sm:$0xff]
        %v2819 = vld [vmem:[%s2809 + $0x48] sm:$0xff]
        %v2820 = vld [vmem:[%s2809 + $0x50] sm:$0xff]
        %v2821 = vld [vmem:[%s2809 + $0x58] sm:$0xff]
        %v2822 = vld [vmem:[%s2809 + $0x60] sm:$0xff]
        %v2823 = vld [vmem:[%s2809 + $0x68] sm:$0xff]
        %v2824 = vld [vmem:[%s2809 + $0x70] sm:$0xff]
        %v2825 = vld [vmem:[%s2809 + $0x78] sm:$0xff]
        %v2826 = vld [vmem:[%s2809 + $0x80] sm:$0xff]
        %v2827 = vld [vmem:[%s2809 + $0x88] sm:$0xff]
        %v2828 = vld [vmem:[%s2809 + $0x90] sm:$0xff]
        %v2829 = vld [vmem:[%s2809 + $0x98] sm:$0xff]
        %v2830 = vld [vmem:[%s2809 + $0xa0] sm:$0xff]
        %v2831 = vld [vmem:[%s2809 + $0xa8] sm:$0xff]
        %v2832 = vld [vmem:[%s2809 + $0xb0] sm:$0xff]
        %v2833 = vld [vmem:[%s2809 + $0xb8] sm:$0xff]
        %v2834 = vld [vmem:[%s2809 + $0xc0] sm:$0xff]
        %v2835 = vld [vmem:[%s2809 + $0xc8] sm:$0xff]
        %v2836 = vld [vmem:[%s2809 + $0xd0] sm:$0xff]
        %v2837 = vld [vmem:[%s2809 + $0xd8] sm:$0xff]
        %v2838 = vld [vmem:[%s2809 + $0xe0] sm:$0xff]
        %v2839 = vld [vmem:[%s2809 + $0xe8] sm:$0xff]
        %v2840 = vld [vmem:[%s2809 + $0xf0] sm:$0xff]
        %v2841 = vld [vmem:[%s2809 + $0xf8] sm:$0xff]
        %v2842 = vld [vmem:[%s2809 + $0x100] sm:$0xff]
        %v2843 = vld [vmem:[%s2809 + $0x108] sm:$0xff]
        %v2844 = vld [vmem:[%s2809 + $0x110] sm:$0xff]
        %v2845 = vld [vmem:[%s2809 + $0x118] sm:$0xff]
        %v2846 = vld [vmem:[%s2809 + $0x120] sm:$0xff]
        %v2847 = vld [vmem:[%s2809 + $0x128] sm:$0xff]
        %v2848 = vld [vmem:[%s2809 + $0x130] sm:$0xff]
        %v2849 = vld [vmem:[%s2809 + $0x138] sm:$0xff]
        %v2850 = vld [vmem:[%s2809 + $0x140] sm:$0xff]
        %v2851 = vld [vmem:[%s2809 + $0x148] sm:$0xff]
        %v2852 = vld [vmem:[%s2809 + $0x150] sm:$0xff]
        %v2853 = vld [vmem:[%s2809 + $0x158] sm:$0xff]
        %v2854 = vld [vmem:[%s2809 + $0x160] sm:$0xff]
        %v2855 = vld [vmem:[%s2809 + $0x168] sm:$0xff]
        %v2856 = vld [vmem:[%s2809 + $0x170] sm:$0xff]
        %v2857 = vld [vmem:[%s2809 + $0x178] sm:$0xff]
        %v2858 = vld [vmem:[%s2809 + $0x180] sm:$0xff]
        %v2859 = vld [vmem:[%s2809 + $0x188] sm:$0xff]
        %v2860 = vld [vmem:[%s2809 + $0x190] sm:$0xff]
        %v2861 = vld [vmem:[%s2809 + $0x198] sm:$0xff]
        %v2862 = vld [vmem:[%s2809 + $0x1a0] sm:$0xff]
        %v2863 = vld [vmem:[%s2809 + $0x1a8] sm:$0xff]
        %v2864 = vld [vmem:[%s2809 + $0x1b0] sm:$0xff]
        %v2865 = vld [vmem:[%s2809 + $0x1b8] sm:$0xff]
        %v2866 = vrot.slane %v1518, 4
        %v2867 = vrot.slane %v1521, 4
        %v2868 = vsel %vm1222, %v2866, %v2867
        %v2869 = vrot.slane %v1544, 4
        %v2870 = vrot.slane %v1547, 4
        %v2871 = vsel %vm1222, %v2869, %v2870
        %v2872 = vrot.slane %v1524, 4
        %v2873 = vsel %vm1222, %v2867, %v2872
        %v2874 = vrot.slane %v1550, 4
        %v2875 = vsel %vm1222, %v2870, %v2874
        %v2878 = vsel %vm1733, %v2871, 0
        %v2880 = vsel %vm1733, %v2875, 0
        %2882 = vmatpush.msra.mxu0 %v2840
        %2883 = vmatpush.msra.mxu0 %v2838
        %2884 = vmatpush.msra.mxu0 %v2836
        %2885 = vmatpush.msra.mxu0 %v2834
        %2886 = vmatpush.msra.mxu0 %v2832
        %2887 = vmatpush.msra.mxu0 %v2830
        %2888 = vmatpush.msra.mxu0 %v2828
        %2889 = vmatpush.msra.mxu0 %v2826
        %2890 = vmatpush.msra.mxu0 %v2824
        %2891 = vmatpush.msra.mxu0 %v2822
        %2892 = vmatpush.msra.mxu0 %v2820
        %2893 = vmatpush.msra.mxu0 %v2818
        %2894 = vmatpush.msra.mxu0 %v2816
        %2895 = vmatpush.msra.mxu0 %v2814
        %2896 = vmatpush.msra.mxu0 %v2812
        %2897 = vmatpush.msra.mxu0 %v2810
        %2898 = vmatmul.f32.gmra.mxu0 %v2868
        %v2899 = vpop.f32.mrf.mxu0
        %v2900 = vadd.f32 0.0, %v2899
        %2901 = vmatmul.f32.gmra.mxu0 %v2873
        %v2902 = vpop.f32.mrf.mxu0
        %v2903 = vadd.f32 0.0, %v2902
        %2904 = vdwg.mxu0
        %2905 = vmatpush.msra.mxu0 0.0
        %2906 = vmatpush.msra.mxu0 0.0
        %2907 = vmatpush.msra.mxu0 0.0
        %2908 = vmatpush.msra.mxu0 0.0
        %2909 = vmatpush.msra.mxu0 %v2864
        %2910 = vmatpush.msra.mxu0 %v2862
        %2911 = vmatpush.msra.mxu0 %v2860
        %2912 = vmatpush.msra.mxu0 %v2858
        %2913 = vmatpush.msra.mxu0 %v2856
        %2914 = vmatpush.msra.mxu0 %v2854
        %2915 = vmatpush.msra.mxu0 %v2852
        %2916 = vmatpush.msra.mxu0 %v2850
        %2917 = vmatpush.msra.mxu0 %v2848
        %2918 = vmatpush.msra.mxu0 %v2846
        %2919 = vmatpush.msra.mxu0 %v2844
        %2920 = vmatpush.msra.mxu0 %v2842
        %2921 = vmatmul.f32.gmra.mxu0 %v2878
        %v2922 = vpop.f32.mrf.mxu0
        %v2923 = vadd.f32 %v2900, %v2922
        %2924 = vmatmul.f32.gmra.mxu0 %v2880
        %v2925 = vpop.f32.mrf.mxu0
        %v2926 = vadd.f32 %v2903, %v2925
        %2927 = vdwg.mxu0
        %2928 = vmatpush.msra.mxu0 %v2841
        %2929 = vmatpush.msra.mxu0 %v2839
        %2930 = vmatpush.msra.mxu0 %v2837
        %2931 = vmatpush.msra.mxu0 %v2835
        %2932 = vmatpush.msra.mxu0 %v2833
        %2933 = vmatpush.msra.mxu0 %v2831
        %2934 = vmatpush.msra.mxu0 %v2829
        %2935 = vmatpush.msra.mxu0 %v2827
        %2936 = vmatpush.msra.mxu0 %v2825
        %2937 = vmatpush.msra.mxu0 %v2823
        %2938 = vmatpush.msra.mxu0 %v2821
        %2939 = vmatpush.msra.mxu0 %v2819
        %2940 = vmatpush.msra.mxu0 %v2817
        %2941 = vmatpush.msra.mxu0 %v2815
        %2942 = vmatpush.msra.mxu0 %v2813
        %2943 = vmatpush.msra.mxu0 %v2811
        %2944 = vmatmul.f32.gmra.mxu0 %v2868
        %v2945 = vpop.f32.mrf.mxu0
        %v2946 = vadd.f32 0.0, %v2945
        %2947 = vmatmul.f32.gmra.mxu0 %v2873
        %v2948 = vpop.f32.mrf.mxu0
        %v2949 = vadd.f32 0.0, %v2948
        %2950 = vdwg.mxu0
        %2951 = vmatpush.msra.mxu0 0.0
        %2952 = vmatpush.msra.mxu0 0.0
        %2953 = vmatpush.msra.mxu0 0.0
        %2954 = vmatpush.msra.mxu0 0.0
        %2955 = vmatpush.msra.mxu0 %v2865
        %2956 = vmatpush.msra.mxu0 %v2863
        %2957 = vmatpush.msra.mxu0 %v2861
        %2958 = vmatpush.msra.mxu0 %v2859
        %2959 = vmatpush.msra.mxu0 %v2857
        %2960 = vmatpush.msra.mxu0 %v2855
        %2961 = vmatpush.msra.mxu0 %v2853
        %2962 = vmatpush.msra.mxu0 %v2851
        %2963 = vmatpush.msra.mxu0 %v2849
        %2964 = vmatpush.msra.mxu0 %v2847
        %2965 = vmatpush.msra.mxu0 %v2845
        %2966 = vmatpush.msra.mxu0 %v2843
        %2967 = vmatmul.f32.gmra.mxu0 %v2878
        %v2968 = vpop.f32.mrf.mxu0
        %v2969 = vadd.f32 %v2946, %v2968
        %2970 = vmatmul.f32.gmra.mxu0 %v2880
        %v2971 = vpop.f32.mrf.mxu0
        %v2972 = vadd.f32 %v2949, %v2971
        %2973 = vdwg.mxu0
        %v2974 = vadd.f32 %v2652, %v2923
        %v2975 = vadd.f32 %v2653, %v2969
        %v2976 = vadd.f32 %v2654, %v2926
        %v2977 = vadd.f32 %v2655, %v2972
        %s2978 = scalar_lea.vmem [#allocation11], 1792
        %v2979 = vld [vmem:[%s2978] sm:$0xff]
        %v2980 = vld [vmem:[%s2978 + $0x8] sm:$0xff]
        %v2981 = vld [vmem:[%s2978 + $0x10] sm:$0xff]
        %v2982 = vld [vmem:[%s2978 + $0x18] sm:$0xff]
        %v2983 = vld [vmem:[%s2978 + $0x20] sm:$0xff]
        %v2984 = vld [vmem:[%s2978 + $0x28] sm:$0xff]
        %v2985 = vld [vmem:[%s2978 + $0x30] sm:$0xff]
        %v2986 = vld [vmem:[%s2978 + $0x38] sm:$0xff]
        %v2987 = vld [vmem:[%s2978 + $0x40] sm:$0xff]
        %v2988 = vld [vmem:[%s2978 + $0x48] sm:$0xff]
        %v2989 = vld [vmem:[%s2978 + $0x50] sm:$0xff]
        %v2990 = vld [vmem:[%s2978 + $0x58] sm:$0xff]
        %v2991 = vld [vmem:[%s2978 + $0x60] sm:$0xff]
        %v2992 = vld [vmem:[%s2978 + $0x68] sm:$0xff]
        %v2993 = vld [vmem:[%s2978 + $0x70] sm:$0xff]
        %v2994 = vld [vmem:[%s2978 + $0x78] sm:$0xff]
        %v2995 = vld [vmem:[%s2978 + $0x80] sm:$0xff]
        %v2996 = vld [vmem:[%s2978 + $0x88] sm:$0xff]
        %v2997 = vld [vmem:[%s2978 + $0x90] sm:$0xff]
        %v2998 = vld [vmem:[%s2978 + $0x98] sm:$0xff]
        %v2999 = vld [vmem:[%s2978 + $0xa0] sm:$0xff]
        %v3000 = vld [vmem:[%s2978 + $0xa8] sm:$0xff]
        %v3001 = vld [vmem:[%s2978 + $0xb0] sm:$0xff]
        %v3002 = vld [vmem:[%s2978 + $0xb8] sm:$0xff]
        %v3003 = vld [vmem:[%s2978 + $0xc0] sm:$0xff]
        %v3004 = vld [vmem:[%s2978 + $0xc8] sm:$0xff]
        %v3005 = vld [vmem:[%s2978 + $0xd0] sm:$0xff]
        %v3006 = vld [vmem:[%s2978 + $0xd8] sm:$0xff]
        %v3007 = vld [vmem:[%s2978 + $0xe0] sm:$0xff]
        %v3008 = vld [vmem:[%s2978 + $0xe8] sm:$0xff]
        %v3009 = vld [vmem:[%s2978 + $0xf0] sm:$0xff]
        %v3010 = vld [vmem:[%s2978 + $0xf8] sm:$0xff]
        %v3011 = vld [vmem:[%s2978 + $0x100] sm:$0xff]
        %v3012 = vld [vmem:[%s2978 + $0x108] sm:$0xff]
        %v3013 = vld [vmem:[%s2978 + $0x110] sm:$0xff]
        %v3014 = vld [vmem:[%s2978 + $0x118] sm:$0xff]
        %v3015 = vld [vmem:[%s2978 + $0x120] sm:$0xff]
        %v3016 = vld [vmem:[%s2978 + $0x128] sm:$0xff]
        %v3017 = vld [vmem:[%s2978 + $0x130] sm:$0xff]
        %v3018 = vld [vmem:[%s2978 + $0x138] sm:$0xff]
        %v3019 = vld [vmem:[%s2978 + $0x140] sm:$0xff]
        %v3020 = vld [vmem:[%s2978 + $0x148] sm:$0xff]
        %v3021 = vld [vmem:[%s2978 + $0x150] sm:$0xff]
        %v3022 = vld [vmem:[%s2978 + $0x158] sm:$0xff]
        %v3023 = vld [vmem:[%s2978 + $0x160] sm:$0xff]
        %v3024 = vld [vmem:[%s2978 + $0x168] sm:$0xff]
        %v3025 = vld [vmem:[%s2978 + $0x170] sm:$0xff]
        %v3026 = vld [vmem:[%s2978 + $0x178] sm:$0xff]
        %v3027 = vld [vmem:[%s2978 + $0x180] sm:$0xff]
        %v3028 = vld [vmem:[%s2978 + $0x188] sm:$0xff]
        %v3029 = vld [vmem:[%s2978 + $0x190] sm:$0xff]
        %v3030 = vld [vmem:[%s2978 + $0x198] sm:$0xff]
        %v3031 = vld [vmem:[%s2978 + $0x1a0] sm:$0xff]
        %v3032 = vld [vmem:[%s2978 + $0x1a8] sm:$0xff]
        %v3033 = vld [vmem:[%s2978 + $0x1b0] sm:$0xff]
        %v3034 = vld [vmem:[%s2978 + $0x1b8] sm:$0xff]
        %3035 = vmatpush.msra.mxu0 %v3009
        %3036 = vmatpush.msra.mxu0 %v3007
        %3037 = vmatpush.msra.mxu0 %v3005
        %3038 = vmatpush.msra.mxu0 %v3003
        %3039 = vmatpush.msra.mxu0 %v3001
        %3040 = vmatpush.msra.mxu0 %v2999
        %3041 = vmatpush.msra.mxu0 %v2997
        %3042 = vmatpush.msra.mxu0 %v2995
        %3043 = vmatpush.msra.mxu0 %v2993
        %3044 = vmatpush.msra.mxu0 %v2991
        %3045 = vmatpush.msra.mxu0 %v2989
        %3046 = vmatpush.msra.mxu0 %v2987
        %3047 = vmatpush.msra.mxu0 %v2985
        %3048 = vmatpush.msra.mxu0 %v2983
        %3049 = vmatpush.msra.mxu0 %v2981
        %3050 = vmatpush.msra.mxu0 %v2979
        %3051 = vmatmul.f32.gmra.mxu0 %v2868
        %v3052 = vpop.f32.mrf.mxu0
        %v3053 = vadd.f32 0.0, %v3052
        %3054 = vmatmul.f32.gmra.mxu0 %v2873
        %v3055 = vpop.f32.mrf.mxu0
        %v3056 = vadd.f32 0.0, %v3055
        %3057 = vdwg.mxu0
        %3058 = vmatpush.msra.mxu0 0.0
        %3059 = vmatpush.msra.mxu0 0.0
        %3060 = vmatpush.msra.mxu0 0.0
        %3061 = vmatpush.msra.mxu0 0.0
        %3062 = vmatpush.msra.mxu0 %v3033
        %3063 = vmatpush.msra.mxu0 %v3031
        %3064 = vmatpush.msra.mxu0 %v3029
        %3065 = vmatpush.msra.mxu0 %v3027
        %3066 = vmatpush.msra.mxu0 %v3025
        %3067 = vmatpush.msra.mxu0 %v3023
        %3068 = vmatpush.msra.mxu0 %v3021
        %3069 = vmatpush.msra.mxu0 %v3019
        %3070 = vmatpush.msra.mxu0 %v3017
        %3071 = vmatpush.msra.mxu0 %v3015
        %3072 = vmatpush.msra.mxu0 %v3013
        %3073 = vmatpush.msra.mxu0 %v3011
        %3074 = vmatmul.f32.gmra.mxu0 %v2878
        %v3075 = vpop.f32.mrf.mxu0
        %v3076 = vadd.f32 %v3053, %v3075
        %3077 = vmatmul.f32.gmra.mxu0 %v2880
        %v3078 = vpop.f32.mrf.mxu0
        %v3079 = vadd.f32 %v3056, %v3078
        %3080 = vdwg.mxu0
        %3081 = vmatpush.msra.mxu0 %v3010
        %3082 = vmatpush.msra.mxu0 %v3008
        %3083 = vmatpush.msra.mxu0 %v3006
        %3084 = vmatpush.msra.mxu0 %v3004
        %3085 = vmatpush.msra.mxu0 %v3002
        %3086 = vmatpush.msra.mxu0 %v3000
        %3087 = vmatpush.msra.mxu0 %v2998
        %3088 = vmatpush.msra.mxu0 %v2996
        %3089 = vmatpush.msra.mxu0 %v2994
        %3090 = vmatpush.msra.mxu0 %v2992
        %3091 = vmatpush.msra.mxu0 %v2990
        %3092 = vmatpush.msra.mxu0 %v2988
        %3093 = vmatpush.msra.mxu0 %v2986
        %3094 = vmatpush.msra.mxu0 %v2984
        %3095 = vmatpush.msra.mxu0 %v2982
        %3096 = vmatpush.msra.mxu0 %v2980
        %3097 = vmatmul.f32.gmra.mxu0 %v2868
        %v3098 = vpop.f32.mrf.mxu0
        %v3099 = vadd.f32 0.0, %v3098
        %3100 = vmatmul.f32.gmra.mxu0 %v2873
        %v3101 = vpop.f32.mrf.mxu0
        %v3102 = vadd.f32 0.0, %v3101
        %3103 = vdwg.mxu0
        %3104 = vmatpush.msra.mxu0 0.0
        %3105 = vmatpush.msra.mxu0 0.0
        %3106 = vmatpush.msra.mxu0 0.0
        %3107 = vmatpush.msra.mxu0 0.0
        %3108 = vmatpush.msra.mxu0 %v3034
        %3109 = vmatpush.msra.mxu0 %v3032
        %3110 = vmatpush.msra.mxu0 %v3030
        %3111 = vmatpush.msra.mxu0 %v3028
        %3112 = vmatpush.msra.mxu0 %v3026
        %3113 = vmatpush.msra.mxu0 %v3024
        %3114 = vmatpush.msra.mxu0 %v3022
        %3115 = vmatpush.msra.mxu0 %v3020
        %3116 = vmatpush.msra.mxu0 %v3018
        %3117 = vmatpush.msra.mxu0 %v3016
        %3118 = vmatpush.msra.mxu0 %v3014
        %3119 = vmatpush.msra.mxu0 %v3012
        %3120 = vmatmul.f32.gmra.mxu0 %v2878
        %v3121 = vpop.f32.mrf.mxu0
        %v3122 = vadd.f32 %v3099, %v3121
        %3123 = vmatmul.f32.gmra.mxu0 %v2880
        %v3124 = vpop.f32.mrf.mxu0
        %v3125 = vadd.f32 %v3102, %v3124
        %3126 = vdwg.mxu0
        %v3127 = vadd.f32 %v2805, %v3076
        %v3128 = vadd.f32 %v2806, %v3122
        %v3129 = vadd.f32 %v2807, %v3079
        %v3130 = vadd.f32 %v2808, %v3125
        %v3132 = vperm.slane %v579, 0
        %v3133 = vperm.slane %v579, 1
        %v3136 = vmul.f32 %v2974, %v3132
        %v3137 = vmul.f32 %v2975, %v3133
        %v3138 = vmul.f32 %v2976, %v3132
        %v3139 = vmul.f32 %v2977, %v3133
        %v3141 = vperm.slane %v580, 0
        %v3142 = vperm.slane %v580, 1
        %v3145 = vadd.f32 %v3136, %v3141
        %v3146 = vadd.f32 %v3137, %v3142
        %v3147 = vadd.f32 %v3138, %v3141
        %v3148 = vadd.f32 %v3139, %v3142
        %v3149 = vmax.f32 %v3145, 0.0
        %v3150 = vmax.f32 %v3146, 0.0
        %v3151 = vmax.f32 %v3147, 0.0
        %v3152 = vmax.f32 %v3148, 0.0
        %v3153 = vmul.f32 %v3127, %v3132
        %v3154 = vmul.f32 %v3128, %v3133
        %v3155 = vmul.f32 %v3129, %v3132
        %v3156 = vmul.f32 %v3130, %v3133
        %v3157 = vadd.f32 %v3153, %v3141
        %v3158 = vadd.f32 %v3154, %v3142
        %v3159 = vadd.f32 %v3155, %v3141
        %v3160 = vadd.f32 %v3156, %v3142
        %v3161 = vmax.f32 %v3157, 0.0
        %v3162 = vmax.f32 %v3158, 0.0
        %v3163 = vmax.f32 %v3159, 0.0
        %v3164 = vmax.f32 %v3160, 0.0
        %v3165 = vmax.f32 %v3149, %v3161
        %v3166 = vmax.f32 %v3150, %v3162
        %v3167 = vmax.f32 %v3151, %v3163
        %v3168 = vmax.f32 %v3152, %v3164
        %v3173 = vrot.slane %v3165, 1
        %v3174 = vrot.slane %v3167, 1
        %v3175 = vsel %vm615, %v3173, %v3174
        %v3176 = vrot.slane %v3166, 1
        %v3177 = vrot.slane %v3168, 1
        %v3178 = vsel %vm615, %v3176, %v3177
        %v3183 = vmax.f32 %v3165, %v3175
        %v3184 = vmax.f32 %v3166, %v3178
        %v3185 = vmax.f32 %v3167, %v3174
        %v3186 = vmax.f32 %v3168, %v3177
        %vm3187 = vcmask 105472
        %v3189 = vsel %vm3187, %v576, 0
        %v3192 = vsel %vm1056, %v3185, 0
        %v3195 = vsel %vm1056, %v3186, 0
        %3197 = vmatpush.msra.mxu0 0.0
        %3198 = vmatpush.msra.mxu0 0.0
        %3199 = vmatpush.msra.mxu0 0.0
        %3200 = vmatpush.msra.mxu0 0.0
        %3201 = vmatpush.msra.mxu0 0.0
        %3202 = vmatpush.msra.mxu0 0.0
        %3203 = vmatpush.msra.mxu0 0.0
        %3204 = vmatpush.msra.mxu0 0.0
        %3205 = vmatpush.msra.mxu0 0.0
        %3206 = vmatpush.msra.mxu0 0.0
        %3207 = vmatpush.msra.mxu0 0.0
        %3208 = vmatpush.msra.mxu0 0.0
        %3209 = vmatpush.msra.mxu0 0.0
        %3210 = vmatpush.msra.mxu0 0.0
        %3211 = vmatpush.msra.mxu0 %v3192
        %3212 = vmatpush.msra.mxu0 %v3183
        %3213 = vmatmul.f32.gmra.mxu0 %v3189
        %v3214 = vpop.f32.mrf.mxu0
        %v3215 = vadd.f32 0.0, %v3214
        %3216 = vdwg.mxu0
        %3217 = vmatpush.msra.mxu0 0.0
        %3218 = vmatpush.msra.mxu0 0.0
        %3219 = vmatpush.msra.mxu0 0.0
        %3220 = vmatpush.msra.mxu0 0.0
        %3221 = vmatpush.msra.mxu0 0.0
        %3222 = vmatpush.msra.mxu0 0.0
        %3223 = vmatpush.msra.mxu0 0.0
        %3224 = vmatpush.msra.mxu0 0.0
        %3225 = vmatpush.msra.mxu0 0.0
        %3226 = vmatpush.msra.mxu0 0.0
        %3227 = vmatpush.msra.mxu0 0.0
        %3228 = vmatpush.msra.mxu0 0.0
        %3229 = vmatpush.msra.mxu0 0.0
        %3230 = vmatpush.msra.mxu0 0.0
        %3231 = vmatpush.msra.mxu0 %v3195
        %3232 = vmatpush.msra.mxu0 %v3184
        %3233 = vmatmul.f32.gmra.mxu0 %v3189
        %v3234 = vpop.f32.mrf.mxu0
        %v3235 = vadd.f32 0.0, %v3234
        %3236 = vdwg.mxu0
        %v3237 = vld [vmem:[#allocation16] sm:$0xff]
        %v3238 = vld [vmem:[#allocation16 + $0x8] sm:$0xff]
        %v3239 = vld [vmem:[#allocation16 + $0x10] sm:$0xff]
        %v3240 = vld [vmem:[#allocation16 + $0x18] sm:$0xff]
        %v3241 = vld [vmem:[#allocation16 + $0x20] sm:$0xff]
        %v3242 = vld [vmem:[#allocation16 + $0x28] sm:$0xff]
        %v3243 = vld [vmem:[#allocation16 + $0x30] sm:$0xff]
        %v3244 = vld [vmem:[#allocation16 + $0x38] sm:$0xff]
        %v3245 = vld [vmem:[#allocation16 + $0x40] sm:$0xff]
        %v3246 = vld [vmem:[#allocation16 + $0x48] sm:$0xff]
        %v3247 = vld [vmem:[#allocation16 + $0x50] sm:$0xff]
        %v3248 = vld [vmem:[#allocation16 + $0x58] sm:$0xff]
        %v3249 = vld [vmem:[#allocation16 + $0x60] sm:$0xff]
        %v3250 = vld [vmem:[#allocation16 + $0x68] sm:$0xff]
        %v3251 = vld [vmem:[#allocation16 + $0x70] sm:$0xff]
        %v3252 = vld [vmem:[#allocation16 + $0x78] sm:$0xff]
        %v3253 = vld [vmem:[#allocation16 + $0x80] sm:$0xff]
        %v3254 = vld [vmem:[#allocation16 + $0x88] sm:$0xff]
        %v3255 = vld [vmem:[#allocation16 + $0x90] sm:$0xff]
        %v3256 = vld [vmem:[#allocation16 + $0x98] sm:$0xff]
        %v3257 = vld [vmem:[#allocation16 + $0xa0] sm:$0xff]
        %v3258 = vld [vmem:[#allocation16 + $0xa8] sm:$0xff]
        %v3259 = vld [vmem:[#allocation16 + $0xb0] sm:$0xff]
        %v3260 = vld [vmem:[#allocation16 + $0xb8] sm:$0xff]
        %v3261 = vld [vmem:[#allocation16 + $0xc0] sm:$0xff]
        %v3262 = vld [vmem:[#allocation16 + $0xc8] sm:$0xff]
        %v3263 = vld [vmem:[#allocation16 + $0xd0] sm:$0xff]
        %v3264 = vld [vmem:[#allocation16 + $0xd8] sm:$0xff]
        %v3266 = vsel %vm1733, %v3235, 0
        %3268 = vmatpush.msra.mxu0 %v3252
        %3269 = vmatpush.msra.mxu0 %v3251
        %3270 = vmatpush.msra.mxu0 %v3250
        %3271 = vmatpush.msra.mxu0 %v3249
        %3272 = vmatpush.msra.mxu0 %v3248
        %3273 = vmatpush.msra.mxu0 %v3247
        %3274 = vmatpush.msra.mxu0 %v3246
        %3275 = vmatpush.msra.mxu0 %v3245
        %3276 = vmatpush.msra.mxu0 %v3244
        %3277 = vmatpush.msra.mxu0 %v3243
        %3278 = vmatpush.msra.mxu0 %v3242
        %3279 = vmatpush.msra.mxu0 %v3241
        %3280 = vmatpush.msra.mxu0 %v3240
        %3281 = vmatpush.msra.mxu0 %v3239
        %3282 = vmatpush.msra.mxu0 %v3238
        %3283 = vmatpush.msra.mxu0 %v3237
        %3284 = vmatmul.f32.gmra.mxu0 %v3215
        %v3285 = vpop.f32.mrf.mxu0
        %v3286 = vadd.f32 0.0, %v3285
        %3287 = vdwg.mxu0
        %3288 = vmatpush.msra.mxu0 0.0
        %3289 = vmatpush.msra.mxu0 0.0
        %3290 = vmatpush.msra.mxu0 0.0
        %3291 = vmatpush.msra.mxu0 0.0
        %3292 = vmatpush.msra.mxu0 %v3264
        %3293 = vmatpush.msra.mxu0 %v3263
        %3294 = vmatpush.msra.mxu0 %v3262
        %3295 = vmatpush.msra.mxu0 %v3261
        %3296 = vmatpush.msra.mxu0 %v3260
        %3297 = vmatpush.msra.mxu0 %v3259
        %3298 = vmatpush.msra.mxu0 %v3258
        %3299 = vmatpush.msra.mxu0 %v3257
        %3300 = vmatpush.msra.mxu0 %v3256
        %3301 = vmatpush.msra.mxu0 %v3255
        %3302 = vmatpush.msra.mxu0 %v3254
        %3303 = vmatpush.msra.mxu0 %v3253
        %3304 = vmatmul.f32.gmra.mxu0 %v3266
        %v3305 = vpop.f32.mrf.mxu0
        %v3306 = vadd.f32 %v3286, %v3305
        %3307 = vdwg.mxu0
        %v3308 = vadd.f32 %v581, %v3306
        %s3309 = scalar_lea.vmem [#allocation16], 224
        %v3310 = vld [vmem:[%s3309] sm:$0xff]
        %v3311 = vld [vmem:[%s3309 + $0x8] sm:$0xff]
        %v3312 = vld [vmem:[%s3309 + $0x10] sm:$0xff]
        %v3313 = vld [vmem:[%s3309 + $0x18] sm:$0xff]
        %v3314 = vld [vmem:[%s3309 + $0x20] sm:$0xff]
        %v3315 = vld [vmem:[%s3309 + $0x28] sm:$0xff]
        %v3316 = vld [vmem:[%s3309 + $0x30] sm:$0xff]
        %v3317 = vld [vmem:[%s3309 + $0x38] sm:$0xff]
        %v3318 = vld [vmem:[%s3309 + $0x40] sm:$0xff]
        %v3319 = vld [vmem:[%s3309 + $0x48] sm:$0xff]
        %v3320 = vld [vmem:[%s3309 + $0x50] sm:$0xff]
        %v3321 = vld [vmem:[%s3309 + $0x58] sm:$0xff]
        %v3322 = vld [vmem:[%s3309 + $0x60] sm:$0xff]
        %v3323 = vld [vmem:[%s3309 + $0x68] sm:$0xff]
        %v3324 = vld [vmem:[%s3309 + $0x70] sm:$0xff]
        %v3325 = vld [vmem:[%s3309 + $0x78] sm:$0xff]
        %v3326 = vld [vmem:[%s3309 + $0x80] sm:$0xff]
        %v3327 = vld [vmem:[%s3309 + $0x88] sm:$0xff]
        %v3328 = vld [vmem:[%s3309 + $0x90] sm:$0xff]
        %v3329 = vld [vmem:[%s3309 + $0x98] sm:$0xff]
        %v3330 = vld [vmem:[%s3309 + $0xa0] sm:$0xff]
        %v3331 = vld [vmem:[%s3309 + $0xa8] sm:$0xff]
        %v3332 = vld [vmem:[%s3309 + $0xb0] sm:$0xff]
        %v3333 = vld [vmem:[%s3309 + $0xb8] sm:$0xff]
        %v3334 = vld [vmem:[%s3309 + $0xc0] sm:$0xff]
        %v3335 = vld [vmem:[%s3309 + $0xc8] sm:$0xff]
        %v3336 = vld [vmem:[%s3309 + $0xd0] sm:$0xff]
        %v3337 = vld [vmem:[%s3309 + $0xd8] sm:$0xff]
        %v3339 = vrot.slane %v3215, 1
        %v3340 = vrot.slane %v3235, 1
        %v3342 = vsel %vm1733, %v3340, 0
        %3344 = vmatpush.msra.mxu0 %v3325
        %3345 = vmatpush.msra.mxu0 %v3324
        %3346 = vmatpush.msra.mxu0 %v3323
        %3347 = vmatpush.msra.mxu0 %v3322
        %3348 = vmatpush.msra.mxu0 %v3321
        %3349 = vmatpush.msra.mxu0 %v3320
        %3350 = vmatpush.msra.mxu0 %v3319
        %3351 = vmatpush.msra.mxu0 %v3318
        %3352 = vmatpush.msra.mxu0 %v3317
        %3353 = vmatpush.msra.mxu0 %v3316
        %3354 = vmatpush.msra.mxu0 %v3315
        %3355 = vmatpush.msra.mxu0 %v3314
        %3356 = vmatpush.msra.mxu0 %v3313
        %3357 = vmatpush.msra.mxu0 %v3312
        %3358 = vmatpush.msra.mxu0 %v3311
        %3359 = vmatpush.msra.mxu0 %v3310
        %3360 = vmatmul.f32.gmra.mxu0 %v3339
        %v3361 = vpop.f32.mrf.mxu0
        %v3362 = vadd.f32 0.0, %v3361
        %3363 = vdwg.mxu0
        %3364 = vmatpush.msra.mxu0 0.0
        %3365 = vmatpush.msra.mxu0 0.0
        %3366 = vmatpush.msra.mxu0 0.0
        %3367 = vmatpush.msra.mxu0 0.0
        %3368 = vmatpush.msra.mxu0 %v3337
        %3369 = vmatpush.msra.mxu0 %v3336
        %3370 = vmatpush.msra.mxu0 %v3335
        %3371 = vmatpush.msra.mxu0 %v3334
        %3372 = vmatpush.msra.mxu0 %v3333
        %3373 = vmatpush.msra.mxu0 %v3332
        %3374 = vmatpush.msra.mxu0 %v3331
        %3375 = vmatpush.msra.mxu0 %v3330
        %3376 = vmatpush.msra.mxu0 %v3329
        %3377 = vmatpush.msra.mxu0 %v3328
        %3378 = vmatpush.msra.mxu0 %v3327
        %3379 = vmatpush.msra.mxu0 %v3326
        %3380 = vmatmul.f32.gmra.mxu0 %v3342
        %v3381 = vpop.f32.mrf.mxu0
        %v3382 = vadd.f32 %v3362, %v3381
        %3383 = vdwg.mxu0
        %v3384 = vadd.f32 %v3308, %v3382
        %s3385 = scalar_lea.vmem [#allocation16], 448
        %v3386 = vld [vmem:[%s3385] sm:$0xff]
        %v3387 = vld [vmem:[%s3385 + $0x8] sm:$0xff]
        %v3388 = vld [vmem:[%s3385 + $0x10] sm:$0xff]
        %v3389 = vld [vmem:[%s3385 + $0x18] sm:$0xff]
        %v3390 = vld [vmem:[%s3385 + $0x20] sm:$0xff]
        %v3391 = vld [vmem:[%s3385 + $0x28] sm:$0xff]
        %v3392 = vld [vmem:[%s3385 + $0x30] sm:$0xff]
        %v3393 = vld [vmem:[%s3385 + $0x38] sm:$0xff]
        %v3394 = vld [vmem:[%s3385 + $0x40] sm:$0xff]
        %v3395 = vld [vmem:[%s3385 + $0x48] sm:$0xff]
        %v3396 = vld [vmem:[%s3385 + $0x50] sm:$0xff]
        %v3397 = vld [vmem:[%s3385 + $0x58] sm:$0xff]
        %v3398 = vld [vmem:[%s3385 + $0x60] sm:$0xff]
        %v3399 = vld [vmem:[%s3385 + $0x68] sm:$0xff]
        %v3400 = vld [vmem:[%s3385 + $0x70] sm:$0xff]
        %v3401 = vld [vmem:[%s3385 + $0x78] sm:$0xff]
        %v3402 = vld [vmem:[%s3385 + $0x80] sm:$0xff]
        %v3403 = vld [vmem:[%s3385 + $0x88] sm:$0xff]
        %v3404 = vld [vmem:[%s3385 + $0x90] sm:$0xff]
        %v3405 = vld [vmem:[%s3385 + $0x98] sm:$0xff]
        %v3406 = vld [vmem:[%s3385 + $0xa0] sm:$0xff]
        %v3407 = vld [vmem:[%s3385 + $0xa8] sm:$0xff]
        %v3408 = vld [vmem:[%s3385 + $0xb0] sm:$0xff]
        %v3409 = vld [vmem:[%s3385 + $0xb8] sm:$0xff]
        %v3410 = vld [vmem:[%s3385 + $0xc0] sm:$0xff]
        %v3411 = vld [vmem:[%s3385 + $0xc8] sm:$0xff]
        %v3412 = vld [vmem:[%s3385 + $0xd0] sm:$0xff]
        %v3413 = vld [vmem:[%s3385 + $0xd8] sm:$0xff]
        %v3414 = vrot.slane %v3215, 2
        %v3415 = vrot.slane %v3235, 2
        %v3417 = vsel %vm1733, %v3415, 0
        %3419 = vmatpush.msra.mxu0 %v3401
        %3420 = vmatpush.msra.mxu0 %v3400
        %3421 = vmatpush.msra.mxu0 %v3399
        %3422 = vmatpush.msra.mxu0 %v3398
        %3423 = vmatpush.msra.mxu0 %v3397
        %3424 = vmatpush.msra.mxu0 %v3396
        %3425 = vmatpush.msra.mxu0 %v3395
        %3426 = vmatpush.msra.mxu0 %v3394
        %3427 = vmatpush.msra.mxu0 %v3393
        %3428 = vmatpush.msra.mxu0 %v3392
        %3429 = vmatpush.msra.mxu0 %v3391
        %3430 = vmatpush.msra.mxu0 %v3390
        %3431 = vmatpush.msra.mxu0 %v3389
        %3432 = vmatpush.msra.mxu0 %v3388
        %3433 = vmatpush.msra.mxu0 %v3387
        %3434 = vmatpush.msra.mxu0 %v3386
        %3435 = vmatmul.f32.gmra.mxu0 %v3414
        %v3436 = vpop.f32.mrf.mxu0
        %v3437 = vadd.f32 0.0, %v3436
        %3438 = vdwg.mxu0
        %3439 = vmatpush.msra.mxu0 0.0
        %3440 = vmatpush.msra.mxu0 0.0
        %3441 = vmatpush.msra.mxu0 0.0
        %3442 = vmatpush.msra.mxu0 0.0
        %3443 = vmatpush.msra.mxu0 %v3413
        %3444 = vmatpush.msra.mxu0 %v3412
        %3445 = vmatpush.msra.mxu0 %v3411
        %3446 = vmatpush.msra.mxu0 %v3410
        %3447 = vmatpush.msra.mxu0 %v3409
        %3448 = vmatpush.msra.mxu0 %v3408
        %3449 = vmatpush.msra.mxu0 %v3407
        %3450 = vmatpush.msra.mxu0 %v3406
        %3451 = vmatpush.msra.mxu0 %v3405
        %3452 = vmatpush.msra.mxu0 %v3404
        %3453 = vmatpush.msra.mxu0 %v3403
        %3454 = vmatpush.msra.mxu0 %v3402
        %3455 = vmatmul.f32.gmra.mxu0 %v3417
        %v3456 = vpop.f32.mrf.mxu0
        %v3457 = vadd.f32 %v3437, %v3456
        %3458 = vdwg.mxu0
        %v3459 = vadd.f32 %v3384, %v3457
        %s3460 = scalar_lea.vmem [#allocation16], 672
        %v3461 = vld [vmem:[%s3460] sm:$0xff]
        %v3462 = vld [vmem:[%s3460 + $0x8] sm:$0xff]
        %v3463 = vld [vmem:[%s3460 + $0x10] sm:$0xff]
        %v3464 = vld [vmem:[%s3460 + $0x18] sm:$0xff]
        %v3465 = vld [vmem:[%s3460 + $0x20] sm:$0xff]
        %v3466 = vld [vmem:[%s3460 + $0x28] sm:$0xff]
        %v3467 = vld [vmem:[%s3460 + $0x30] sm:$0xff]
        %v3468 = vld [vmem:[%s3460 + $0x38] sm:$0xff]
        %v3469 = vld [vmem:[%s3460 + $0x40] sm:$0xff]
        %v3470 = vld [vmem:[%s3460 + $0x48] sm:$0xff]
        %v3471 = vld [vmem:[%s3460 + $0x50] sm:$0xff]
        %v3472 = vld [vmem:[%s3460 + $0x58] sm:$0xff]
        %v3473 = vld [vmem:[%s3460 + $0x60] sm:$0xff]
        %v3474 = vld [vmem:[%s3460 + $0x68] sm:$0xff]
        %v3475 = vld [vmem:[%s3460 + $0x70] sm:$0xff]
        %v3476 = vld [vmem:[%s3460 + $0x78] sm:$0xff]
        %v3477 = vld [vmem:[%s3460 + $0x80] sm:$0xff]
        %v3478 = vld [vmem:[%s3460 + $0x88] sm:$0xff]
        %v3479 = vld [vmem:[%s3460 + $0x90] sm:$0xff]
        %v3480 = vld [vmem:[%s3460 + $0x98] sm:$0xff]
        %v3481 = vld [vmem:[%s3460 + $0xa0] sm:$0xff]
        %v3482 = vld [vmem:[%s3460 + $0xa8] sm:$0xff]
        %v3483 = vld [vmem:[%s3460 + $0xb0] sm:$0xff]
        %v3484 = vld [vmem:[%s3460 + $0xb8] sm:$0xff]
        %v3485 = vld [vmem:[%s3460 + $0xc0] sm:$0xff]
        %v3486 = vld [vmem:[%s3460 + $0xc8] sm:$0xff]
        %v3487 = vld [vmem:[%s3460 + $0xd0] sm:$0xff]
        %v3488 = vld [vmem:[%s3460 + $0xd8] sm:$0xff]
        %v3489 = vrot.slane %v3215, 3
        %v3490 = vrot.slane %v3235, 3
        %v3492 = vsel %vm1733, %v3490, 0
        %3494 = vmatpush.msra.mxu0 %v3476
        %3495 = vmatpush.msra.mxu0 %v3475
        %3496 = vmatpush.msra.mxu0 %v3474
        %3497 = vmatpush.msra.mxu0 %v3473
        %3498 = vmatpush.msra.mxu0 %v3472
        %3499 = vmatpush.msra.mxu0 %v3471
        %3500 = vmatpush.msra.mxu0 %v3470
        %3501 = vmatpush.msra.mxu0 %v3469
        %3502 = vmatpush.msra.mxu0 %v3468
        %3503 = vmatpush.msra.mxu0 %v3467
        %3504 = vmatpush.msra.mxu0 %v3466
        %3505 = vmatpush.msra.mxu0 %v3465
        %3506 = vmatpush.msra.mxu0 %v3464
        %3507 = vmatpush.msra.mxu0 %v3463
        %3508 = vmatpush.msra.mxu0 %v3462
        %3509 = vmatpush.msra.mxu0 %v3461
        %3510 = vmatmul.f32.gmra.mxu0 %v3489
        %v3511 = vpop.f32.mrf.mxu0
        %v3512 = vadd.f32 0.0, %v3511
        %3513 = vdwg.mxu0
        %3514 = vmatpush.msra.mxu0 0.0
        %3515 = vmatpush.msra.mxu0 0.0
        %3516 = vmatpush.msra.mxu0 0.0
        %3517 = vmatpush.msra.mxu0 0.0
        %3518 = vmatpush.msra.mxu0 %v3488
        %3519 = vmatpush.msra.mxu0 %v3487
        %3520 = vmatpush.msra.mxu0 %v3486
        %3521 = vmatpush.msra.mxu0 %v3485
        %3522 = vmatpush.msra.mxu0 %v3484
        %3523 = vmatpush.msra.mxu0 %v3483
        %3524 = vmatpush.msra.mxu0 %v3482
        %3525 = vmatpush.msra.mxu0 %v3481
        %3526 = vmatpush.msra.mxu0 %v3480
        %3527 = vmatpush.msra.mxu0 %v3479
        %3528 = vmatpush.msra.mxu0 %v3478
        %3529 = vmatpush.msra.mxu0 %v3477
        %3530 = vmatmul.f32.gmra.mxu0 %v3492
        %v3531 = vpop.f32.mrf.mxu0
        %v3532 = vadd.f32 %v3512, %v3531
        %3533 = vdwg.mxu0
        %v3534 = vadd.f32 %v3459, %v3532
        %s3535 = scalar_lea.vmem [#allocation16], 896
        %v3536 = vld [vmem:[%s3535] sm:$0xff]
        %v3537 = vld [vmem:[%s3535 + $0x8] sm:$0xff]
        %v3538 = vld [vmem:[%s3535 + $0x10] sm:$0xff]
        %v3539 = vld [vmem:[%s3535 + $0x18] sm:$0xff]
        %v3540 = vld [vmem:[%s3535 + $0x20] sm:$0xff]
        %v3541 = vld [vmem:[%s3535 + $0x28] sm:$0xff]
        %v3542 = vld [vmem:[%s3535 + $0x30] sm:$0xff]
        %v3543 = vld [vmem:[%s3535 + $0x38] sm:$0xff]
        %v3544 = vld [vmem:[%s3535 + $0x40] sm:$0xff]
        %v3545 = vld [vmem:[%s3535 + $0x48] sm:$0xff]
        %v3546 = vld [vmem:[%s3535 + $0x50] sm:$0xff]
        %v3547 = vld [vmem:[%s3535 + $0x58] sm:$0xff]
        %v3548 = vld [vmem:[%s3535 + $0x60] sm:$0xff]
        %v3549 = vld [vmem:[%s3535 + $0x68] sm:$0xff]
        %v3550 = vld [vmem:[%s3535 + $0x70] sm:$0xff]
        %v3551 = vld [vmem:[%s3535 + $0x78] sm:$0xff]
        %v3552 = vld [vmem:[%s3535 + $0x80] sm:$0xff]
        %v3553 = vld [vmem:[%s3535 + $0x88] sm:$0xff]
        %v3554 = vld [vmem:[%s3535 + $0x90] sm:$0xff]
        %v3555 = vld [vmem:[%s3535 + $0x98] sm:$0xff]
        %v3556 = vld [vmem:[%s3535 + $0xa0] sm:$0xff]
        %v3557 = vld [vmem:[%s3535 + $0xa8] sm:$0xff]
        %v3558 = vld [vmem:[%s3535 + $0xb0] sm:$0xff]
        %v3559 = vld [vmem:[%s3535 + $0xb8] sm:$0xff]
        %v3560 = vld [vmem:[%s3535 + $0xc0] sm:$0xff]
        %v3561 = vld [vmem:[%s3535 + $0xc8] sm:$0xff]
        %v3562 = vld [vmem:[%s3535 + $0xd0] sm:$0xff]
        %v3563 = vld [vmem:[%s3535 + $0xd8] sm:$0xff]
        %v3564 = vrot.slane %v3215, 4
        %v3565 = vrot.slane %v3235, 4
        %v3567 = vsel %vm1733, %v3565, 0
        %3569 = vmatpush.msra.mxu0 %v3551
        %3570 = vmatpush.msra.mxu0 %v3550
        %3571 = vmatpush.msra.mxu0 %v3549
        %3572 = vmatpush.msra.mxu0 %v3548
        %3573 = vmatpush.msra.mxu0 %v3547
        %3574 = vmatpush.msra.mxu0 %v3546
        %3575 = vmatpush.msra.mxu0 %v3545
        %3576 = vmatpush.msra.mxu0 %v3544
        %3577 = vmatpush.msra.mxu0 %v3543
        %3578 = vmatpush.msra.mxu0 %v3542
        %3579 = vmatpush.msra.mxu0 %v3541
        %3580 = vmatpush.msra.mxu0 %v3540
        %3581 = vmatpush.msra.mxu0 %v3539
        %3582 = vmatpush.msra.mxu0 %v3538
        %3583 = vmatpush.msra.mxu0 %v3537
        %3584 = vmatpush.msra.mxu0 %v3536
        %3585 = vmatmul.f32.gmra.mxu0 %v3564
        %v3586 = vpop.f32.mrf.mxu0
        %v3587 = vadd.f32 0.0, %v3586
        %3588 = vdwg.mxu0
        %3589 = vmatpush.msra.mxu0 0.0
        %3590 = vmatpush.msra.mxu0 0.0
        %3591 = vmatpush.msra.mxu0 0.0
        %3592 = vmatpush.msra.mxu0 0.0
        %3593 = vmatpush.msra.mxu0 %v3563
        %3594 = vmatpush.msra.mxu0 %v3562
        %3595 = vmatpush.msra.mxu0 %v3561
        %3596 = vmatpush.msra.mxu0 %v3560
        %3597 = vmatpush.msra.mxu0 %v3559
        %3598 = vmatpush.msra.mxu0 %v3558
        %3599 = vmatpush.msra.mxu0 %v3557
        %3600 = vmatpush.msra.mxu0 %v3556
        %3601 = vmatpush.msra.mxu0 %v3555
        %3602 = vmatpush.msra.mxu0 %v3554
        %3603 = vmatpush.msra.mxu0 %v3553
        %3604 = vmatpush.msra.mxu0 %v3552
        %3605 = vmatmul.f32.gmra.mxu0 %v3567
        %v3606 = vpop.f32.mrf.mxu0
        %v3607 = vadd.f32 %v3587, %v3606
        %3608 = vdwg.mxu0
        %v3609 = vadd.f32 %v3534, %v3607
        %s3610 = scalar_lea.vmem [#allocation16], 1120
        %v3611 = vld [vmem:[%s3610] sm:$0xff]
        %v3612 = vld [vmem:[%s3610 + $0x8] sm:$0xff]
        %v3613 = vld [vmem:[%s3610 + $0x10] sm:$0xff]
        %v3614 = vld [vmem:[%s3610 + $0x18] sm:$0xff]
        %v3615 = vld [vmem:[%s3610 + $0x20] sm:$0xff]
        %v3616 = vld [vmem:[%s3610 + $0x28] sm:$0xff]
        %v3617 = vld [vmem:[%s3610 + $0x30] sm:$0xff]
        %v3618 = vld [vmem:[%s3610 + $0x38] sm:$0xff]
        %v3619 = vld [vmem:[%s3610 + $0x40] sm:$0xff]
        %v3620 = vld [vmem:[%s3610 + $0x48] sm:$0xff]
        %v3621 = vld [vmem:[%s3610 + $0x50] sm:$0xff]
        %v3622 = vld [vmem:[%s3610 + $0x58] sm:$0xff]
        %v3623 = vld [vmem:[%s3610 + $0x60] sm:$0xff]
        %v3624 = vld [vmem:[%s3610 + $0x68] sm:$0xff]
        %v3625 = vld [vmem:[%s3610 + $0x70] sm:$0xff]
        %v3626 = vld [vmem:[%s3610 + $0x78] sm:$0xff]
        %v3627 = vld [vmem:[%s3610 + $0x80] sm:$0xff]
        %v3628 = vld [vmem:[%s3610 + $0x88] sm:$0xff]
        %v3629 = vld [vmem:[%s3610 + $0x90] sm:$0xff]
        %v3630 = vld [vmem:[%s3610 + $0x98] sm:$0xff]
        %v3631 = vld [vmem:[%s3610 + $0xa0] sm:$0xff]
        %v3632 = vld [vmem:[%s3610 + $0xa8] sm:$0xff]
        %v3633 = vld [vmem:[%s3610 + $0xb0] sm:$0xff]
        %v3634 = vld [vmem:[%s3610 + $0xb8] sm:$0xff]
        %v3635 = vld [vmem:[%s3610 + $0xc0] sm:$0xff]
        %v3636 = vld [vmem:[%s3610 + $0xc8] sm:$0xff]
        %v3637 = vld [vmem:[%s3610 + $0xd0] sm:$0xff]
        %v3638 = vld [vmem:[%s3610 + $0xd8] sm:$0xff]
        %v3639 = vrot.slane %v3215, 5
        %v3640 = vrot.slane %v3235, 5
        %v3642 = vsel %vm1733, %v3640, 0
        %3644 = vmatpush.msra.mxu0 %v3626
        %3645 = vmatpush.msra.mxu0 %v3625
        %3646 = vmatpush.msra.mxu0 %v3624
        %3647 = vmatpush.msra.mxu0 %v3623
        %3648 = vmatpush.msra.mxu0 %v3622
        %3649 = vmatpush.msra.mxu0 %v3621
        %3650 = vmatpush.msra.mxu0 %v3620
        %3651 = vmatpush.msra.mxu0 %v3619
        %3652 = vmatpush.msra.mxu0 %v3618
        %3653 = vmatpush.msra.mxu0 %v3617
        %3654 = vmatpush.msra.mxu0 %v3616
        %3655 = vmatpush.msra.mxu0 %v3615
        %3656 = vmatpush.msra.mxu0 %v3614
        %3657 = vmatpush.msra.mxu0 %v3613
        %3658 = vmatpush.msra.mxu0 %v3612
        %3659 = vmatpush.msra.mxu0 %v3611
        %3660 = vmatmul.f32.gmra.mxu0 %v3639
        %v3661 = vpop.f32.mrf.mxu0
        %v3662 = vadd.f32 0.0, %v3661
        %3663 = vdwg.mxu0
        %3664 = vmatpush.msra.mxu0 0.0
        %3665 = vmatpush.msra.mxu0 0.0
        %3666 = vmatpush.msra.mxu0 0.0
        %3667 = vmatpush.msra.mxu0 0.0
        %3668 = vmatpush.msra.mxu0 %v3638
        %3669 = vmatpush.msra.mxu0 %v3637
        %3670 = vmatpush.msra.mxu0 %v3636
        %3671 = vmatpush.msra.mxu0 %v3635
        %3672 = vmatpush.msra.mxu0 %v3634
        %3673 = vmatpush.msra.mxu0 %v3633
        %3674 = vmatpush.msra.mxu0 %v3632
        %3675 = vmatpush.msra.mxu0 %v3631
        %3676 = vmatpush.msra.mxu0 %v3630
        %3677 = vmatpush.msra.mxu0 %v3629
        %3678 = vmatpush.msra.mxu0 %v3628
        %3679 = vmatpush.msra.mxu0 %v3627
        %3680 = vmatmul.f32.gmra.mxu0 %v3642
        %v3681 = vpop.f32.mrf.mxu0
        %v3682 = vadd.f32 %v3662, %v3681
        %3683 = vdwg.mxu0
        %v3684 = vadd.f32 %v3609, %v3682
        %s3685 = scalar_lea.vmem [#allocation16], 1344
        %v3686 = vld [vmem:[%s3685] sm:$0xff]
        %v3687 = vld [vmem:[%s3685 + $0x8] sm:$0xff]
        %v3688 = vld [vmem:[%s3685 + $0x10] sm:$0xff]
        %v3689 = vld [vmem:[%s3685 + $0x18] sm:$0xff]
        %v3690 = vld [vmem:[%s3685 + $0x20] sm:$0xff]
        %v3691 = vld [vmem:[%s3685 + $0x28] sm:$0xff]
        %v3692 = vld [vmem:[%s3685 + $0x30] sm:$0xff]
        %v3693 = vld [vmem:[%s3685 + $0x38] sm:$0xff]
        %v3694 = vld [vmem:[%s3685 + $0x40] sm:$0xff]
        %v3695 = vld [vmem:[%s3685 + $0x48] sm:$0xff]
        %v3696 = vld [vmem:[%s3685 + $0x50] sm:$0xff]
        %v3697 = vld [vmem:[%s3685 + $0x58] sm:$0xff]
        %v3698 = vld [vmem:[%s3685 + $0x60] sm:$0xff]
        %v3699 = vld [vmem:[%s3685 + $0x68] sm:$0xff]
        %v3700 = vld [vmem:[%s3685 + $0x70] sm:$0xff]
        %v3701 = vld [vmem:[%s3685 + $0x78] sm:$0xff]
        %v3702 = vld [vmem:[%s3685 + $0x80] sm:$0xff]
        %v3703 = vld [vmem:[%s3685 + $0x88] sm:$0xff]
        %v3704 = vld [vmem:[%s3685 + $0x90] sm:$0xff]
        %v3705 = vld [vmem:[%s3685 + $0x98] sm:$0xff]
        %v3706 = vld [vmem:[%s3685 + $0xa0] sm:$0xff]
        %v3707 = vld [vmem:[%s3685 + $0xa8] sm:$0xff]
        %v3708 = vld [vmem:[%s3685 + $0xb0] sm:$0xff]
        %v3709 = vld [vmem:[%s3685 + $0xb8] sm:$0xff]
        %v3710 = vld [vmem:[%s3685 + $0xc0] sm:$0xff]
        %v3711 = vld [vmem:[%s3685 + $0xc8] sm:$0xff]
        %v3712 = vld [vmem:[%s3685 + $0xd0] sm:$0xff]
        %v3713 = vld [vmem:[%s3685 + $0xd8] sm:$0xff]
        %v3714 = vrot.slane %v3215, 6
        %v3715 = vrot.slane %v3235, 6
        %v3717 = vsel %vm1733, %v3715, 0
        %3719 = vmatpush.msra.mxu0 %v3701
        %3720 = vmatpush.msra.mxu0 %v3700
        %3721 = vmatpush.msra.mxu0 %v3699
        %3722 = vmatpush.msra.mxu0 %v3698
        %3723 = vmatpush.msra.mxu0 %v3697
        %3724 = vmatpush.msra.mxu0 %v3696
        %3725 = vmatpush.msra.mxu0 %v3695
        %3726 = vmatpush.msra.mxu0 %v3694
        %3727 = vmatpush.msra.mxu0 %v3693
        %3728 = vmatpush.msra.mxu0 %v3692
        %3729 = vmatpush.msra.mxu0 %v3691
        %3730 = vmatpush.msra.mxu0 %v3690
        %3731 = vmatpush.msra.mxu0 %v3689
        %3732 = vmatpush.msra.mxu0 %v3688
        %3733 = vmatpush.msra.mxu0 %v3687
        %3734 = vmatpush.msra.mxu0 %v3686
        %3735 = vmatmul.f32.gmra.mxu0 %v3714
        %v3736 = vpop.f32.mrf.mxu0
        %v3737 = vadd.f32 0.0, %v3736
        %3738 = vdwg.mxu0
        %3739 = vmatpush.msra.mxu0 0.0
        %3740 = vmatpush.msra.mxu0 0.0
        %3741 = vmatpush.msra.mxu0 0.0
        %3742 = vmatpush.msra.mxu0 0.0
        %3743 = vmatpush.msra.mxu0 %v3713
        %3744 = vmatpush.msra.mxu0 %v3712
        %3745 = vmatpush.msra.mxu0 %v3711
        %3746 = vmatpush.msra.mxu0 %v3710
        %3747 = vmatpush.msra.mxu0 %v3709
        %3748 = vmatpush.msra.mxu0 %v3708
        %3749 = vmatpush.msra.mxu0 %v3707
        %3750 = vmatpush.msra.mxu0 %v3706
        %3751 = vmatpush.msra.mxu0 %v3705
        %3752 = vmatpush.msra.mxu0 %v3704
        %3753 = vmatpush.msra.mxu0 %v3703
        %3754 = vmatpush.msra.mxu0 %v3702
        %3755 = vmatmul.f32.gmra.mxu0 %v3717
        %v3756 = vpop.f32.mrf.mxu0
        %v3757 = vadd.f32 %v3737, %v3756
        %3758 = vdwg.mxu0
        %v3759 = vadd.f32 %v3684, %v3757
        %3760 = vst [vmem:[%s534] sm:$0x1] %v3759
        %s3761 = sand.u32 %s275, 1
        %s3762 = scalar_lea.sflag [#allocation4], %s3761
        %s3763 = sand.u32 %s275, 1
        %s3764 = scalar_lea.vmem [#allocation19], %s3763
        // Predicated region
        $region105: #{cnn_forward.1} parent=63 // pred_check
          %p3765 = pneg %p285
        $region106: #{cnn_forward.1} parent=63 // pred_check_branch
          %3767 = sbr.rel (%p3765) target = $region108
        $region107: #{cnn_forward.1} parent=63 // pred_region
          %3769 = vsyncadd %s3762, 0
          %s3770 = scalar_lea.hbm %s11, %s31
          %s3772 = sshll.u32 %s3764, 4
          %s3773 = int_to_ptr.vmem [resolvable:$true] %s3772
          %s3774 = sshll.u32 %s3770, 4
          %s3775 = int_to_ptr.hbm [resolvable:$true] %s3774
          %3777 = dma.vmem_to_hbm [thread:$0]  %s3773, 16, %s3775, %s3762
        $region108: #{cnn_forward.1} parent=63 // pred_fallthru
          _
      $region64: #{cnn_forward.1} parent=5 // pred_fallthru
        _
      %p3778 = scmp.le.s32.totalorder 2, %s26
      // Predicated region
      $region109: #{cnn_forward.1} parent=5 // pred_check
        %p3779 = pneg %p3778
      $region110: #{cnn_forward.1} parent=5 // pred_check_branch
        %3781 = sbr.rel (%p3779) target = $region112
      $region111: #{cnn_forward.1} parent=5 // pred_region
        %s3782 = ssub.s32 %s26, 2
        // Predicated region
        $region113: #{cnn_forward.1} parent=111 // pred_check
          %p3783 = pneg %p291
        $region114: #{cnn_forward.1} parent=111 // pred_check_branch
          %3785 = sbr.rel (%p3783) target = $region116
        $region115: #{cnn_forward.1} parent=111 // pred_region
          %s3786 = sand.u32 %s276, 1
          %s3787 = scalar_lea.sflag [#allocation4], %s3786
          %s3788 = sand.u32 %s276, 1
          %s3789 = scalar_lea.vmem [#allocation19], %s3788
          %3791 = dma.done %s3787, 16
        $region116: #{cnn_forward.1} parent=111 // pred_fallthru
          _
      $region112: #{cnn_forward.1} parent=5 // pred_fallthru
        _
    $region6: #{cnn_forward.1} parent=1 // loop_footer
      %s30 = sadd.s32 1, %s26
    $region7: #{cnn_forward.1} parent=1 // loop_footer_branch
      %25 = sbr.rel target = $region3
    $region8: #{cnn_forward.1} parent=1 // loop_exit
      _
    %3792 = vsyncpa [#allocation3], 1
    %s3793 = scalar_lea.sflag [#allocation3], 1
    %3794 = vsyncpa %s3793, 1
    %3795 = vsyncpa [#allocation6], 1
    %3796 = vsyncpa [#allocation9], 1
    %3797 = vsyncpa [#allocation12], 1
    %3798 = vsyncpa [#allocation15], 1
    %3799 = vsyncpa [#allocation18], 1
    %3800 = vsyncpa [#allocation4], 1
    %s3801 = scalar_lea.sflag [#allocation4], 1
    %3802 = vsyncpa %s3801, 1

</llo_original>
